<compile_context>
chip_gen: v5e
topology: v5e:2x2
jax: 0.10.0
libtpu: 0.0.40
codegen_flags: <defaults>
</compile_context>

<pallas_src>
import functools

import jax
import jax.numpy as jnp
from jax.experimental import pallas as pl
from jax.experimental.pallas import tpu as pltpu

EMB = 32      # args.embed_size
HID = 32      # args.hidden_size
DEPTH = 2     # args.gnn_depth
HEADS = 4     # self.n_heads
SLOPE = 0.2   # args.relu (LeakyReLU slope; also DGL negative_slope)
LANE = 128    # TPU lane width
IN0 = EMB * 4 + 32   # GAT layer-0 input dim (= 160)


def leaky_relu(x, slope=SLOPE):
    return jnp.where(x >= 0, x, slope * x)


def _ceil8(n):
    return -(-n // 8) * 8


def _slab_layout(entries):
    """entries: [(name, (rows, cols))] -> ({name: (row_off, rows, cols)}, total_rows)."""
    offs, r = {}, 0
    for name, (nr, nc) in entries:
        offs[name] = (r, nr, nc)
        r += _ceil8(nr)
    return offs, r


def _view(ref, entry):
    r, nr, nc = entry
    return ref[r:r + nr, 0:nc]


def _param_entries(N):
    """Static layouts of the two packed parameter slabs."""
    p1 = [("wih", (2 * EMB, 8 * EMB)),      # fwd|rev input -> packed gate cols
          ("whh", (2 * EMB, 8 * EMB)),      # fwd|bwd hidden -> packed gate cols
          ("b",   (1, 8 * EMB))]            # b_ih + b_hh, packed gate order
    p2 = [("wfc", (2 * EMB, EMB)), ("bfc", (1, EMB)),
          ("w0", (IN0, HEADS * HID)), ("alr0", (HEADS * HID, 2 * HEADS)),
          ("resw0", (IN0, HEADS * HID)), ("bias0", (1, HEADS * HID)),
          ("w1", (HEADS * HID, HID)), ("alr1", (HID, 2)),
          ("resw1", (HEADS * HID, HID)), ("bias1", (1, HID)),
          ("wout", (HID, LANE)), ("bout", (1, LANE)),
          # precomputed 0/1 constant matrices for lane-dense GAT math
          ("exp0", (HEADS, HEADS * N)), ("gsum0", (HEADS * N, HEADS)),
          ("imask0", (N, HEADS * N)), ("vrep0", (HEADS * N, N)),
          ("bmask0", (HEADS * N, HEADS * HID)),
          ("eyen", (N, N))]
    return p1, p2


# ---------------------------------------------------------------------------
# The fused kernel: biLSTM + fc_lstm + concat + 2x GATConv + edge scoring.
# Runs once per graph (grid axis b, "parallel").
# ---------------------------------------------------------------------------
def gat_forward_kernel(p1_ref, p2_ref, data_ref, out_ref,
                       *, T, N, E, off1, off2, offd):
    F32 = jnp.float32
    H = EMB

    # ------------------ parameter views (static slices of packed slabs) -----
    wih = _view(p1_ref, off1["wih"])
    whh = _view(p1_ref, off1["whh"])
    b_l = _view(p1_ref, off1["b"])

    wfc = _view(p2_ref, off2["wfc"]);     bfc = _view(p2_ref, off2["bfc"])
    w0 = _view(p2_ref, off2["w0"]);       alr0 = _view(p2_ref, off2["alr0"])
    resw0 = _view(p2_ref, off2["resw0"]); bias0 = _view(p2_ref, off2["bias0"])
    w1 = _view(p2_ref, off2["w1"]);       alr1 = _view(p2_ref, off2["alr1"])
    resw1 = _view(p2_ref, off2["resw1"]); bias1 = _view(p2_ref, off2["bias1"])
    wout = _view(p2_ref, off2["wout"]);   bout = _view(p2_ref, off2["bout"])
    exp0 = _view(p2_ref, off2["exp0"]);   gsum0 = _view(p2_ref, off2["gsum0"])
    imask0 = _view(p2_ref, off2["imask0"]); vrep0 = _view(p2_ref, off2["vrep0"])
    bmask0 = _view(p2_ref, off2["bmask0"]); eyen = _view(p2_ref, off2["eyen"])

    # ------------------ per-graph data views ---------------------------------
    xm = _view(data_ref, offd["xm"])            # (T*N, 2*EMB+2)
    x_fb = xm[:, 0:2 * H]                       # fwd emb | time-reversed emb
    m2 = xm[:, 2 * H:2 * H + 2]                 # fwd mask | time-reversed mask
    h_static = _view(data_ref, offd["hstat"])   # (N, 128)
    adj0 = _view(data_ref, offd["adj0"])        # (N, N)
    adj1 = _view(data_ref, offd["adj1"])
    src_oh = _view(data_ref, offd["srcoh"])     # (E, N)
    dst_oh = _view(data_ref, offd["dstoh"])

    # ------------------ bidirectional masked LSTM ----------------------------
    # gate column layout: [i_f, i_b, f_f, f_b, o_f, o_b, g_f, g_b], each H wide.
    # Input projection + bias hoisted out of the recurrence (one wide MXU op).
    gi = jnp.dot(x_fb, wih, preferred_element_type=F32) + b_l        # (T*N, 8H)
    # hoisted (T*N, 2H) mask slab: lanes 0:H use fwd mask, H:2H use reversed mask
    m_slab = jnp.concatenate(
        [jnp.broadcast_to(m2[:, 0:1], (T * N, H)),
         jnp.broadcast_to(m2[:, 1:2], (T * N, H))], axis=1)

    h_fb = jnp.zeros((N, 2 * H), F32)   # [h_fwd | h_bwd]
    c_fb = jnp.zeros((N, 2 * H), F32)
    for t in range(T):                   # static unroll, serial recurrence
        g = gi[t * N:(t + 1) * N, :] + jnp.dot(h_fb, whh,
                                               preferred_element_type=F32)
        s = jax.nn.sigmoid(g[:, 0:6 * H])        # i|f|o gates, both dirs, one pass
        gg = jnp.tanh(g[:, 6 * H:8 * H])         # g gate, both dirs
        c_new = s[:, 2 * H:4 * H] * c_fb + s[:, 0:2 * H] * gg
        h_new = s[:, 4 * H:6 * H] * jnp.tanh(c_new)
        m = m_slab[t * N:(t + 1) * N, :]
        c_fb = jnp.where(m > 0, c_new, c_fb)
        h_fb = jnp.where(m > 0, h_new, h_fb)

    h_lstm = leaky_relu(jnp.dot(h_fb, wfc, preferred_element_type=F32) + bfc)
    # dropout -> eval-mode identity
    h0 = jnp.concatenate([h_lstm, h_static], axis=1)                 # (N, 160)

    ones_nn = jnp.ones((N, N), F32)

    # ------------------ dense GATConv (DGL semantics), lane-dense layout -----
    def gat_layer(h_in, adj, w, alr, res_w, bias, num_heads, apply_act):
        feat = jnp.dot(h_in, w, preferred_element_type=F32)          # (N, heads*F)
        elr = jnp.dot(feat, alr, preferred_element_type=F32)         # (N, 2*heads)
        el_c = elr[:, 0:num_heads]                                   # per-src scalars
        er_c = elr[:, num_heads:2 * num_heads]                       # per-dst scalars

        if num_heads == 1:
            # attention layout (N_dst, N_src)
            er_b = jnp.broadcast_to(er_c, (N, N))
            el_b = jnp.dot(ones_nn, jnp.broadcast_to(el_c, (N, N)) * eyen,
                           preferred_element_type=F32)               # row of el
            adj_t = adj
        else:
            # attention layout (N_dst, heads*N_src) -- all heads side by side
            er_b = jnp.dot(er_c, exp0, preferred_element_type=F32)
            el_exp = jnp.dot(el_c, exp0, preferred_element_type=F32)
            el_b = jnp.dot(ones_nn, el_exp * imask0,
                           preferred_element_type=F32)
            adj_t = jnp.dot(adj, imask0, preferred_element_type=F32)  # tiled adj

        e = leaky_relu(er_b + el_b)
        e_m = jnp.where(adj_t > 0, e, jnp.full_like(e, -1e30))
        # shared per-dst-row stabilizer (softmax is invariant per head group)
        e_max = jnp.max(e_m, axis=-1, keepdims=True)
        p = jnp.exp(e_m - e_max) * adj_t

        if num_heads == 1:
            denom = jnp.sum(p, axis=-1, keepdims=True)
            alpha = p / jnp.maximum(denom, 1e-20)
            agg_src = feat
        else:
            denom = jnp.dot(p, gsum0, preferred_element_type=F32)     # (N, heads)
            denom_b = jnp.dot(denom, exp0, preferred_element_type=F32)
            alpha = p / jnp.maximum(denom_b, 1e-20)
            # vertically replicated, block-masked feat -> one MXU aggregation
            agg_src = jnp.dot(vrep0, feat, preferred_element_type=F32) * bmask0

        rst = jnp.dot(alpha, agg_src, preferred_element_type=F32)     # (N, heads*F)
        out = rst + jnp.dot(h_in, res_w, preferred_element_type=F32) + bias
        if apply_act:
            out = leaky_relu(out)                                      # GATConv activation
        return out, alpha

    # layer 0: 4 heads, GATConv activation; its attention never materialized out.
    h1, _ = gat_layer(h0, adj0, w0, alr0, resw0, bias0, HEADS, apply_act=True)
    h1 = leaky_relu(h1)          # model-level LeakyReLU after flatten(1)
    # layer 1: 1 head, no GATConv activation; attention returned.
    h2, alpha1 = gat_layer(h1, adj1, w1, alr1, resw1, bias1, 1, apply_act=False)

    # ------------------ edge scoring (gathers as one-hot matmuls) ------------
    h_src = jnp.dot(src_oh, h2, preferred_element_type=F32)
    h_dst = jnp.dot(dst_oh, h2, preferred_element_type=F32)
    e_feat = h_src * h_dst
    scores = jnp.dot(e_feat, wout, preferred_element_type=F32) + bout  # (E, 128)

    # single merged lane-dense output slab: scores rows then attention rows
    attn_pad = jnp.concatenate([alpha1, jnp.zeros((N, LANE - N), F32)], axis=1)
    out_ref[...] = jnp.concatenate([scores, attn_pad], axis=0)


# ---------------------------------------------------------------------------
# Parameter packing (done once, outside the kernel)
# ---------------------------------------------------------------------------
def _reorder_gate_cols(w4_f, w4_b):
    """PyTorch gate order (i,f,g,o) per direction -> packed column order
    [i_f,i_b,f_f,f_b,o_f,o_b,g_f,g_b]; forward rows on top, backward below."""
    H = EMB

    def split(w):
        return w[:, 0:H], w[:, H:2 * H], w[:, 2 * H:3 * H], w[:, 3 * H:4 * H]

    i_f, f_f, g_f, o_f = split(w4_f)
    i_b, f_b, g_b, o_b = split(w4_b)
    zf, zb = jnp.zeros_like(i_f), jnp.zeros_like(i_b)
    top = jnp.concatenate([i_f, zf, f_f, zf, o_f, zf, g_f, zf], axis=1)
    bot = jnp.concatenate([zb, i_b, zb, f_b, zb, o_b, zb, g_b], axis=1)
    return jnp.concatenate([top, bot], axis=0)


def _reorder_gate_bias(b_f, b_b):
    H = EMB

    def split(b):
        return b[:, 0:H], b[:, H:2 * H], b[:, 2 * H:3 * H], b[:, 3 * H:4 * H]

    i_f, f_f, g_f, o_f = split(b_f)
    i_b, f_b, g_b, o_b = split(b_b)
    return jnp.concatenate([i_f, i_b, f_f, f_b, o_f, o_b, g_f, g_b], axis=1)


def _pack_alr(attn_l, attn_r):
    """(heads, f_out) x2 -> (heads*f_out, 2*heads) so feat @ alr = [el | er]."""
    heads, f_out = attn_l.shape
    alr = jnp.zeros((heads * f_out, 2 * heads), jnp.float32)
    for h in range(heads):
        alr = alr.at[h * f_out:(h + 1) * f_out, h].set(attn_l[h])
        alr = alr.at[h * f_out:(h + 1) * f_out, heads + h].set(attn_r[h])
    return alr


def _gat_consts(num_heads, N, f_out):
    f32 = jnp.float32
    eye_h = jnp.eye(num_heads, dtype=f32)
    eye_n = jnp.eye(N, dtype=f32)
    expand = jnp.repeat(eye_h, N, axis=1)                      # (h, h*N)
    gsum = expand.T                                            # (h*N, h)
    imask = jnp.tile(eye_n, (1, num_heads))                    # (N, h*N)
    vrep = jnp.tile(eye_n, (num_heads, 1))                     # (h*N, N)
    bmask = jnp.repeat(jnp.repeat(eye_h, N, axis=0), f_out, axis=1)  # (h*N, h*f)
    return dict(expand=expand, gsum=gsum, imask=imask, vrep=vrep, bmask=bmask)


def _pack_slab(named_arrays, layout, rows, width):
    slab = jnp.zeros((rows, width), jnp.float32)
    for name, arr in named_arrays.items():
        r, nr, nc = layout[name]
        assert arr.shape == (nr, nc), (name, arr.shape, (nr, nc))
        slab = slab.at[r:r + nr, 0:nc].set(arr.astype(jnp.float32))
    return slab


def pack_params(lstm_p, gat_p, w_out, b_out, N):
    # NOTE: b_f / b_b must be the pre-summed b_ih + b_hh per direction.
    wih = _reorder_gate_cols(lstm_p["wih_f"], lstm_p["wih_b"])
    whh = _reorder_gate_cols(lstm_p["whh_f"], lstm_p["whh_b"])
    b_l = _reorder_gate_bias(lstm_p["b_f"], lstm_p["b_b"])
    w_out_pad = jnp.zeros((HID, LANE), jnp.float32).at[:, :w_out.shape[1]].set(w_out)
    b_out_pad = jnp.zeros((1, LANE), jnp.float32).at[:, :b_out.shape[1]].set(b_out)
    c0 = _gat_consts(HEADS, N, HID)

    p1_named = dict(wih=wih, whh=whh, b=b_l)
    p2_named = dict(
        wfc=lstm_p["wfc"], bfc=lstm_p["bfc"],
        w0=gat_p[0]["w"], alr0=_pack_alr(gat_p[0]["attn_l"], gat_p[0]["attn_r"]),
        resw0=gat_p[0]["res_w"], bias0=gat_p[0]["bias"],
        w1=gat_p[1]["w"], alr1=_pack_alr(gat_p[1]["attn_l"], gat_p[1]["attn_r"]),
        resw1=gat_p[1]["res_w"], bias1=gat_p[1]["bias"],
        wout=w_out_pad, bout=b_out_pad,
        exp0=c0["expand"], gsum0=c0["gsum"], imask0=c0["imask"],
        vrep0=c0["vrep"], bmask0=c0["bmask"],
        eyen=jnp.eye(N, dtype=jnp.float32),
    )
    e1, e2 = _param_entries(N)
    off1, rows1 = _slab_layout(e1)
    off2, rows2 = _slab_layout(e2)
    return dict(p1=_pack_slab(p1_named, off1, rows1, 8 * EMB),
                p2=_pack_slab(p2_named, off2, rows2, LANE))


# ---------------------------------------------------------------------------
# Forward wrapper: embedding gathers + slab assembly, then ONE fused kernel
# launched over a "parallel" batch-of-graphs grid axis.
# ---------------------------------------------------------------------------
@jax.jit
def gat_forward(params, embeds, adj0, adj1, inputs_s, inputs_sm,
                inputs_c, inputs_co, inputs_sl, inputs_ip, src, dst):
    B, N, T = inputs_s.shape
    E = src.shape[1]

    # url token sequence, time-major & flattened; forward + time-reversed copy
    url_emb = embeds["url"][inputs_s]                         # (B, N, T, EMB)
    x_tm = jnp.transpose(url_emb, (0, 2, 1, 3))               # (B, T, N, EMB)
    x_fb = jnp.concatenate([x_tm, x_tm[:, ::-1]], axis=-1).reshape(B, T * N, 2 * EMB)
    m_tm = jnp.transpose(inputs_sm, (0, 2, 1))[..., None]     # (B, T, N, 1)
    m2 = jnp.concatenate([m_tm, m_tm[:, ::-1]], axis=-1).reshape(B, T * N, 2)

    h_static = jnp.concatenate(
        [embeds["category"][inputs_c[..., 0]],
         embeds["country"][inputs_co[..., 0]],
         embeds["sl"][inputs_sl[..., 0]],
         inputs_ip.astype(jnp.float32)], axis=-1)             # (B, N, 128)

    src_oh = jax.nn.one_hot(src, N, dtype=jnp.float32)        # (B, E, N)
    dst_oh = jax.nn.one_hot(dst, N, dtype=jnp.float32)

    # static slab layouts
    e1, e2 = _param_entries(N)
    off1, rows1 = _slab_layout(e1)
    off2, rows2 = _slab_layout(e2)
    d_entries = [("xm", (T * N, 2 * EMB + 2)), ("hstat", (N, EMB * 3 + 32)),
                 ("adj0", (N, N)), ("adj1", (N, N)),
                 ("srcoh", (E, N)), ("dstoh", (E, N))]
    offd, rows_d = _slab_layout(d_entries)

    data = jnp.zeros((B, rows_d, LANE), jnp.float32)

    def put(s, name, v):
        r, nr, nc = offd[name]
        return s.at[:, r:r + nr, 0:nc].set(v)

    data = put(data, "xm", jnp.concatenate([x_fb, m2], axis=-1))
    data = put(data, "hstat", h_static)
    data = put(data, "adj0", adj0)
    data = put(data, "adj1", adj1)
    data = put(data, "srcoh", src_oh)
    data = put(data, "dstoh", dst_oh)

    kernel = functools.partial(gat_forward_kernel, T=T, N=N, E=E,
                               off1=off1, off2=off2, offd=offd)
    out = pl.pallas_call(
        kernel,
        grid=(B,),
        in_specs=[pl.BlockSpec((rows1, 8 * EMB), lambda b: (0, 0)),   # params stay resident
                  pl.BlockSpec((rows2, LANE), lambda b: (0, 0)),
                  pl.BlockSpec((None, rows_d, LANE), lambda b: (b, 0, 0))],
        out_specs=pl.BlockSpec((None, E + N, LANE), lambda b: (b, 0, 0)),
        out_shape=jax.ShapeDtypeStruct((B, E + N, LANE), jnp.float32),
        compiler_params=pltpu.CompilerParams(
            dimension_semantics=("parallel",)),
    )(params["p1"], params["p2"], data)

    scores = out[:, 0:E, 0:2]                   # fc_out has 2 real columns
    attn = out[:, E:E + N, 0:N][:, None]        # (B, 1, N_dst, N_src) dense attention
    return scores, attn


# ---------------------------------------------------------------------------
if __name__ == "__main__":
    key = jax.random.PRNGKey(0)
    B, N, T, E = 2, 16, 8, 24   # graphs, nodes per graph, url seq len, edges

    ks = iter(jax.random.split(key, 64))
    nrm = lambda shape: 0.1 * jax.random.normal(next(ks), shape, dtype=jnp.float32)

    # Parameters (deterministic, shapes from GAT.__init__)
    embeds = dict(category=nrm((101, EMB)), country=nrm((92, EMB)),
                  sl=nrm((6, EMB)), url=nrm((128, EMB)))

    H4 = 4 * EMB
    lstm_p = dict(
        wih_f=nrm((EMB, H4)), whh_f=nrm((EMB, H4)), b_f=nrm((1, H4)),   # b = b_ih + b_hh
        wih_b=nrm((EMB, H4)), whh_b=nrm((EMB, H4)), b_b=nrm((1, H4)),
        wfc=nrm((2 * EMB, EMB)), bfc=nrm((1, EMB)),
    )
    gat_p = [
        dict(w=nrm((IN0, HEADS * HID)), attn_l=nrm((HEADS, HID)),
             attn_r=nrm((HEADS, HID)), res_w=nrm((IN0, HEADS * HID)),
             bias=nrm((1, HEADS * HID))),
        dict(w=nrm((HEADS * HID, HID)), attn_l=nrm((1, HID)),
             attn_r=nrm((1, HID)), res_w=nrm((HEADS * HID, HID)),
             bias=nrm((1, HID))),
    ]
    w_out = nrm((HID, 2))
    b_out = nrm((1, 2))

    # Inputs (batched over B graphs)
    inputs_s = jax.random.randint(next(ks), (B, N, T), 0, 128)
    lengths = jax.random.randint(next(ks), (B, N), 1, T + 1)
    inputs_sm = (jnp.arange(T)[None, None, :] < lengths[..., None]).astype(jnp.float32)
    inputs_c = jax.random.randint(next(ks), (B, N, 1), 0, 101)
    inputs_co = jax.random.randint(next(ks), (B, N, 1), 0, 92)
    inputs_sl = jax.random.randint(next(ks), (B, N, 1), 0, 6)
    inputs_ip = jax.random.normal(next(ks), (B, N, 32), dtype=jnp.float32)

    # TODO(synk): DGL sparse message-flow blocks replaced by dense (dst, src)
    # adjacency with self-loops; last-layer attention returned dense (1,N,N)
    # instead of per-edge (E, 1, 1).
    adj = (jax.random.uniform(next(ks), (B, DEPTH, N, N)) < 0.3).astype(jnp.float32)
    adj = jnp.maximum(adj, jnp.eye(N, dtype=jnp.float32))
    adj0, adj1 = adj[:, 0], adj[:, 1]
    src = jax.random.randint(next(ks), (B, E), 0, N)
    dst = jax.random.randint(next(ks), (B, E), 0, N)

    params = pack_params(lstm_p, gat_p, w_out, b_out, N)
    scores, attn = gat_forward(params, embeds, adj0, adj1, inputs_s, inputs_sm,
                               inputs_c, inputs_co, inputs_sl, inputs_ip, src, dst)
    jax.block_until_ready((scores, attn))

    assert scores.shape == (B, E, 2) and attn.shape == (B, 1, N, N)
    assert bool(jnp.all(jnp.isfinite(scores)))
    # every dst row has a self-loop -> attention rows must sum to 1 (exact softmax)
    assert bool(jnp.allclose(attn[:, 0].sum(axis=-1), 1.0, atol=1e-3))
    print("KERNEL_OK")
</pallas_src>

<mosaic_0001>
module attributes {stable_mosaic.version = 11 : i64} {
  func.func @gat_forward_kernel(%arg0: i32, %arg1: memref<136x256xf32, #tpu.memory_space<vmem>>, %arg2: memref<1096x128xf32, #tpu.memory_space<vmem>>, %arg3: memref<1x224x128xf32, #tpu.memory_space<vmem>>, %arg4: memref<1x40x128xf32, #tpu.memory_space<vmem>>) attributes {dimension_semantics = [#tpu.dimension_semantics<parallel>], iteration_bounds = array<i64: 2>, scalar_prefetch = 0 : i64, scratch_operands = 0 : i64, tpu.core_type = #tpu.core_type<tc>, window_params = [{pipeline_mode = #tpu.pipeline_mode<synchronous>, transform_indices = @transform_0, window_bounds = array<i64: 136, 256>}, {pipeline_mode = #tpu.pipeline_mode<synchronous>, transform_indices = @transform_1, window_bounds = array<i64: 1096, 128>}, {transform_indices = @transform_2, window_bounds = array<i64: 1, 224, 128>}, {transform_indices = @transform_3, window_bounds = array<i64: 1, 40, 128>}]} {
    %c0 = arith.constant 0 : index
    %c0_0 = arith.constant 0 : index
    %0 = vector.load %arg1[%c0, %c0_0] : memref<136x256xf32, #tpu.memory_space<vmem>>, vector<64x256xf32>
    %c64 = arith.constant 64 : index
    %c0_1 = arith.constant 0 : index
    %1 = vector.load %arg1[%c64, %c0_1] : memref<136x256xf32, #tpu.memory_space<vmem>>, vector<64x256xf32>
    %c128 = arith.constant 128 : index
    %c0_2 = arith.constant 0 : index
    %2 = vector.load %arg1[%c128, %c0_2] : memref<136x256xf32, #tpu.memory_space<vmem>>, vector<1x256xf32>
    %c0_3 = arith.constant 0 : index
    %c0_4 = arith.constant 0 : index
    %3 = vector.load %arg2[%c0_3, %c0_4] : memref<1096x128xf32, #tpu.memory_space<vmem>>, vector<64x32xf32>
    %c64_5 = arith.constant 64 : index
    %c0_6 = arith.constant 0 : index
    %4 = vector.load %arg2[%c64_5, %c0_6] : memref<1096x128xf32, #tpu.memory_space<vmem>>, vector<1x32xf32>
    %c72 = arith.constant 72 : index
    %c0_7 = arith.constant 0 : index
    %5 = vector.load %arg2[%c72, %c0_7] : memref<1096x128xf32, #tpu.memory_space<vmem>>, vector<160x128xf32>
    %c232 = arith.constant 232 : index
    %c0_8 = arith.constant 0 : index
    %6 = vector.load %arg2[%c232, %c0_8] : memref<1096x128xf32, #tpu.memory_space<vmem>>, vector<128x8xf32>
    %c360 = arith.constant 360 : index
    %c0_9 = arith.constant 0 : index
    %7 = vector.load %arg2[%c360, %c0_9] : memref<1096x128xf32, #tpu.memory_space<vmem>>, vector<160x128xf32>
    %c520 = arith.constant 520 : index
    %c0_10 = arith.constant 0 : index
    %8 = vector.load %arg2[%c520, %c0_10] : memref<1096x128xf32, #tpu.memory_space<vmem>>, vector<1x128xf32>
    %c528 = arith.constant 528 : index
    %c0_11 = arith.constant 0 : index
    %9 = vector.load %arg2[%c528, %c0_11] : memref<1096x128xf32, #tpu.memory_space<vmem>>, vector<128x32xf32>
    %c656 = arith.constant 656 : index
    %c0_12 = arith.constant 0 : index
    %10 = vector.load %arg2[%c656, %c0_12] : memref<1096x128xf32, #tpu.memory_space<vmem>>, vector<32x2xf32>
    %c688 = arith.constant 688 : index
    %c0_13 = arith.constant 0 : index
    %11 = vector.load %arg2[%c688, %c0_13] : memref<1096x128xf32, #tpu.memory_space<vmem>>, vector<128x32xf32>
    %c816 = arith.constant 816 : index
    %c0_14 = arith.constant 0 : index
    %12 = vector.load %arg2[%c816, %c0_14] : memref<1096x128xf32, #tpu.memory_space<vmem>>, vector<1x32xf32>
    %c824 = arith.constant 824 : index
    %c0_15 = arith.constant 0 : index
    %13 = vector.load %arg2[%c824, %c0_15] : memref<1096x128xf32, #tpu.memory_space<vmem>>, vector<32x128xf32>
    %c856 = arith.constant 856 : index
    %c0_16 = arith.constant 0 : index
    %14 = vector.load %arg2[%c856, %c0_16] : memref<1096x128xf32, #tpu.memory_space<vmem>>, vector<1x128xf32>
    %c864 = arith.constant 864 : index
    %c0_17 = arith.constant 0 : index
    %15 = vector.load %arg2[%c864, %c0_17] : memref<1096x128xf32, #tpu.memory_space<vmem>>, vector<4x64xf32>
    %c872 = arith.constant 872 : index
    %c0_18 = arith.constant 0 : index
    %16 = vector.load %arg2[%c872, %c0_18] : memref<1096x128xf32, #tpu.memory_space<vmem>>, vector<64x4xf32>
    %c936 = arith.constant 936 : index
    %c0_19 = arith.constant 0 : index
    %17 = vector.load %arg2[%c936, %c0_19] : memref<1096x128xf32, #tpu.memory_space<vmem>>, vector<16x64xf32>
    %c952 = arith.constant 952 : index
    %c0_20 = arith.constant 0 : index
    %18 = vector.load %arg2[%c952, %c0_20] : memref<1096x128xf32, #tpu.memory_space<vmem>>, vector<64x16xf32>
    %c1016 = arith.constant 1016 : index
    %c0_21 = arith.constant 0 : index
    %19 = vector.load %arg2[%c1016, %c0_21] : memref<1096x128xf32, #tpu.memory_space<vmem>>, vector<64x128xf32>
    %c1080 = arith.constant 1080 : index
    %c0_22 = arith.constant 0 : index
    %20 = vector.load %arg2[%c1080, %c0_22] : memref<1096x128xf32, #tpu.memory_space<vmem>>, vector<16x16xf32>
    %c0_23 = arith.constant 0 : index
    %c0_24 = arith.constant 0 : index
    %c0_25 = arith.constant 0 : index
    %21 = vector.load %arg3[%c0_23, %c0_24, %c0_25] : memref<1x224x128xf32, #tpu.memory_space<vmem>>, vector<1x128x66xf32>
    %22 = vector.shape_cast %21 : vector<1x128x66xf32> to vector<128x66xf32>
    %23 = vector.extract_strided_slice %22 {offsets = [0, 0], sizes = [128, 64], strides = [1, 1]} : vector<128x66xf32> to vector<128x64xf32>
    %24 = vector.extract_strided_slice %22 {offsets = [0, 64], sizes = [128, 2], strides = [1, 1]} : vector<128x66xf32> to vector<128x2xf32>
    %c0_26 = arith.constant 0 : index
    %c128_27 = arith.constant 128 : index
    %c0_28 = arith.constant 0 : index
    %25 = vector.load %arg3[%c0_26, %c128_27, %c0_28] : memref<1x224x128xf32, #tpu.memory_space<vmem>>, vector<1x16x128xf32>
    %26 = vector.shape_cast %25 : vector<1x16x128xf32> to vector<16x128xf32>
    %c0_29 = arith.constant 0 : index
    %c144 = arith.constant 144 : index
    %c0_30 = arith.constant 0 : index
    %27 = vector.load %arg3[%c0_29, %c144, %c0_30] : memref<1x224x128xf32, #tpu.memory_space<vmem>>, vector<1x16x16xf32>
    %28 = vector.shape_cast %27 : vector<1x16x16xf32> to vector<16x16xf32>
    %c0_31 = arith.constant 0 : index
    %c160 = arith.constant 160 : index
    %c0_32 = arith.constant 0 : index
    %29 = vector.load %arg3[%c0_31, %c160, %c0_32] : memref<1x224x128xf32, #tpu.memory_space<vmem>>, vector<1x16x16xf32>
    %30 = vector.shape_cast %29 : vector<1x16x16xf32> to vector<16x16xf32>
    %c0_33 = arith.constant 0 : index
    %c176 = arith.constant 176 : index
    %c0_34 = arith.constant 0 : index
    %31 = vector.load %arg3[%c0_33, %c176, %c0_34] : memref<1x224x128xf32, #tpu.memory_space<vmem>>, vector<1x24x16xf32>
    %32 = vector.shape_cast %31 : vector<1x24x16xf32> to vector<24x16xf32>
    %c0_35 = arith.constant 0 : index
    %c200 = arith.constant 200 : index
    %c0_36 = arith.constant 0 : index
    %33 = vector.load %arg3[%c0_35, %c200, %c0_36] : memref<1x224x128xf32, #tpu.memory_space<vmem>>, vector<1x24x16xf32>
    %34 = vector.shape_cast %33 : vector<1x24x16xf32> to vector<24x16xf32>
    %cst = arith.constant dense<0.000000e+00> : vector<128x256xf32>
    %35 = tpu.matmul %23, %0, %cst {dimension_numbers = #tpu.dot_dimension_numbers<[1], [0], [0], [1], [0, 0, 1, 1], [], []>} : vector<128x64xf32>, vector<64x256xf32>, vector<128x256xf32> -> vector<128x256xf32>
    %36 = vector.broadcast %2 : vector<1x256xf32> to vector<128x256xf32>
    %37 = arith.addf %35, %36 : vector<128x256xf32>
    %38 = vector.extract_strided_slice %24 {offsets = [0, 0], sizes = [128, 1], strides = [1, 1]} : vector<128x2xf32> to vector<128x1xf32>
    %39 = vector.shape_cast %38 : vector<128x1xf32> to vector<128x1xf32>
    %40 = vector.broadcast %39 : vector<128x1xf32> to vector<128x32xf32>
    %41 = vector.extract_strided_slice %24 {offsets = [0, 1], sizes = [128, 1], strides = [1, 1]} : vector<128x2xf32> to vector<128x1xf32>
    %42 = vector.shape_cast %41 : vector<128x1xf32> to vector<128x1xf32>
    %43 = vector.broadcast %42 : vector<128x1xf32> to vector<128x32xf32>
    %44 = tpu.concatenate %40, %43 in 1 : vector<128x32xf32>, vector<128x32xf32> -> vector<128x64xf32>
    %cst_37 = arith.constant 0.000000e+00 : f32
    %45 = vector.broadcast %cst_37 : f32 to vector<16x64xf32>
    %cst_38 = arith.constant 0.000000e+00 : f32
    %46 = vector.broadcast %cst_38 : f32 to vector<16x64xf32>
    %47 = vector.extract_strided_slice %37 {offsets = [0, 0], sizes = [16, 256], strides = [1, 1]} : vector<128x256xf32> to vector<16x256xf32>
    %cst_39 = arith.constant dense<0.000000e+00> : vector<16x256xf32>
    %48 = tpu.matmul %45, %1, %cst_39 {dimension_numbers = #tpu.dot_dimension_numbers<[1], [0], [0], [1], [0, 0, 1, 1], [], []>} : vector<16x64xf32>, vector<64x256xf32>, vector<16x256xf32> -> vector<16x256xf32>
    %49 = arith.addf %47, %48 : vector<16x256xf32>
    %50 = vector.extract_strided_slice %49 {offsets = [0, 0], sizes = [16, 192], strides = [1, 1]} : vector<16x256xf32> to vector<16x192xf32>
    %51 = arith.negf %50 : vector<16x192xf32>
    %52 = math.exp %51 : vector<16x192xf32>
    %cst_40 = arith.constant 1.000000e+00 : f32
    %53 = vector.broadcast %cst_40 : f32 to vector<16x192xf32>
    %54 = arith.addf %53, %52 : vector<16x192xf32>
    %55 = arith.divf %53, %54 : vector<16x192xf32>
    %56 = vector.extract_strided_slice %49 {offsets = [0, 192], sizes = [16, 64], strides = [1, 1]} : vector<16x256xf32> to vector<16x64xf32>
    %57 = math.tanh %56 : vector<16x64xf32>
    %58 = vector.extract_strided_slice %55 {offsets = [0, 64], sizes = [16, 64], strides = [1, 1]} : vector<16x192xf32> to vector<16x64xf32>
    %59 = arith.mulf %58, %46 : vector<16x64xf32>
    %60 = vector.extract_strided_slice %55 {offsets = [0, 0], sizes = [16, 64], strides = [1, 1]} : vector<16x192xf32> to vector<16x64xf32>
    %61 = arith.mulf %60, %57 : vector<16x64xf32>
    %62 = arith.addf %59, %61 : vector<16x64xf32>
    %63 = vector.extract_strided_slice %55 {offsets = [0, 128], sizes = [16, 64], strides = [1, 1]} : vector<16x192xf32> to vector<16x64xf32>
    %64 = math.tanh %62 : vector<16x64xf32>
    %65 = arith.mulf %63, %64 : vector<16x64xf32>
    %66 = vector.extract_strided_slice %44 {offsets = [0, 0], sizes = [16, 64], strides = [1, 1]} : vector<128x64xf32> to vector<16x64xf32>
    %cst_41 = arith.constant 0.000000e+00 : f32
    %67 = vector.broadcast %cst_41 : f32 to vector<16x64xf32>
    %68 = arith.cmpf ogt, %66, %67 : vector<16x64xf32>
    %69 = arith.select %68, %62, %46 : vector<16x64xi1>, vector<16x64xf32>
    %cst_42 = arith.constant 0.000000e+00 : f32
    %70 = vector.broadcast %cst_42 : f32 to vector<16x64xf32>
    %71 = arith.cmpf ogt, %66, %70 : vector<16x64xf32>
    %72 = arith.select %71, %65, %45 : vector<16x64xi1>, vector<16x64xf32>
    %73 = vector.extract_strided_slice %37 {offsets = [16, 0], sizes = [16, 256], strides = [1, 1]} : vector<128x256xf32> to vector<16x256xf32>
    %cst_43 = arith.constant dense<0.000000e+00> : vector<16x256xf32>
    %74 = tpu.matmul %72, %1, %cst_43 {dimension_numbers = #tpu.dot_dimension_numbers<[1], [0], [0], [1], [0, 0, 1, 1], [], []>} : vector<16x64xf32>, vector<64x256xf32>, vector<16x256xf32> -> vector<16x256xf32>
    %75 = arith.addf %73, %74 : vector<16x256xf32>
    %76 = vector.extract_strided_slice %75 {offsets = [0, 0], sizes = [16, 192], strides = [1, 1]} : vector<16x256xf32> to vector<16x192xf32>
    %77 = arith.negf %76 : vector<16x192xf32>
    %78 = math.exp %77 : vector<16x192xf32>
    %cst_44 = arith.constant 1.000000e+00 : f32
    %79 = vector.broadcast %cst_44 : f32 to vector<16x192xf32>
    %80 = arith.addf %79, %78 : vector<16x192xf32>
    %81 = arith.divf %79, %80 : vector<16x192xf32>
    %82 = vector.extract_strided_slice %75 {offsets = [0, 192], sizes = [16, 64], strides = [1, 1]} : vector<16x256xf32> to vector<16x64xf32>
    %83 = math.tanh %82 : vector<16x64xf32>
    %84 = vector.extract_strided_slice %81 {offsets = [0, 64], sizes = [16, 64], strides = [1, 1]} : vector<16x192xf32> to vector<16x64xf32>
    %85 = arith.mulf %84, %69 : vector<16x64xf32>
    %86 = vector.extract_strided_slice %81 {offsets = [0, 0], sizes = [16, 64], strides = [1, 1]} : vector<16x192xf32> to vector<16x64xf32>
    %87 = arith.mulf %86, %83 : vector<16x64xf32>
    %88 = arith.addf %85, %87 : vector<16x64xf32>
    %89 = vector.extract_strided_slice %81 {offsets = [0, 128], sizes = [16, 64], strides = [1, 1]} : vector<16x192xf32> to vector<16x64xf32>
    %90 = math.tanh %88 : vector<16x64xf32>
    %91 = arith.mulf %89, %90 : vector<16x64xf32>
    %92 = vector.extract_strided_slice %44 {offsets = [16, 0], sizes = [16, 64], strides = [1, 1]} : vector<128x64xf32> to vector<16x64xf32>
    %cst_45 = arith.constant 0.000000e+00 : f32
    %93 = vector.broadcast %cst_45 : f32 to vector<16x64xf32>
    %94 = arith.cmpf ogt, %92, %93 : vector<16x64xf32>
    %95 = arith.select %94, %88, %69 : vector<16x64xi1>, vector<16x64xf32>
    %cst_46 = arith.constant 0.000000e+00 : f32
    %96 = vector.broadcast %cst_46 : f32 to vector<16x64xf32>
    %97 = arith.cmpf ogt, %92, %96 : vector<16x64xf32>
    %98 = arith.select %97, %91, %72 : vector<16x64xi1>, vector<16x64xf32>
    %99 = vector.extract_strided_slice %37 {offsets = [32, 0], sizes = [16, 256], strides = [1, 1]} : vector<128x256xf32> to vector<16x256xf32>
    %cst_47 = arith.constant dense<0.000000e+00> : vector<16x256xf32>
    %100 = tpu.matmul %98, %1, %cst_47 {dimension_numbers = #tpu.dot_dimension_numbers<[1], [0], [0], [1], [0, 0, 1, 1], [], []>} : vector<16x64xf32>, vector<64x256xf32>, vector<16x256xf32> -> vector<16x256xf32>
    %101 = arith.addf %99, %100 : vector<16x256xf32>
    %102 = vector.extract_strided_slice %101 {offsets = [0, 0], sizes = [16, 192], strides = [1, 1]} : vector<16x256xf32> to vector<16x192xf32>
    %103 = arith.negf %102 : vector<16x192xf32>
    %104 = math.exp %103 : vector<16x192xf32>
    %cst_48 = arith.constant 1.000000e+00 : f32
    %105 = vector.broadcast %cst_48 : f32 to vector<16x192xf32>
    %106 = arith.addf %105, %104 : vector<16x192xf32>
    %107 = arith.divf %105, %106 : vector<16x192xf32>
    %108 = vector.extract_strided_slice %101 {offsets = [0, 192], sizes = [16, 64], strides = [1, 1]} : vector<16x256xf32> to vector<16x64xf32>
    %109 = math.tanh %108 : vector<16x64xf32>
    %110 = vector.extract_strided_slice %107 {offsets = [0, 64], sizes = [16, 64], strides = [1, 1]} : vector<16x192xf32> to vector<16x64xf32>
    %111 = arith.mulf %110, %95 : vector<16x64xf32>
    %112 = vector.extract_strided_slice %107 {offsets = [0, 0], sizes = [16, 64], strides = [1, 1]} : vector<16x192xf32> to vector<16x64xf32>
    %113 = arith.mulf %112, %109 : vector<16x64xf32>
    %114 = arith.addf %111, %113 : vector<16x64xf32>
    %115 = vector.extract_strided_slice %107 {offsets = [0, 128], sizes = [16, 64], strides = [1, 1]} : vector<16x192xf32> to vector<16x64xf32>
    %116 = math.tanh %114 : vector<16x64xf32>
    %117 = arith.mulf %115, %116 : vector<16x64xf32>
    %118 = vector.extract_strided_slice %44 {offsets = [32, 0], sizes = [16, 64], strides = [1, 1]} : vector<128x64xf32> to vector<16x64xf32>
    %cst_49 = arith.constant 0.000000e+00 : f32
    %119 = vector.broadcast %cst_49 : f32 to vector<16x64xf32>
    %120 = arith.cmpf ogt, %118, %119 : vector<16x64xf32>
    %121 = arith.select %120, %114, %95 : vector<16x64xi1>, vector<16x64xf32>
    %cst_50 = arith.constant 0.000000e+00 : f32
    %122 = vector.broadcast %cst_50 : f32 to vector<16x64xf32>
    %123 = arith.cmpf ogt, %118, %122 : vector<16x64xf32>
    %124 = arith.select %123, %117, %98 : vector<16x64xi1>, vector<16x64xf32>
    %125 = vector.extract_strided_slice %37 {offsets = [48, 0], sizes = [16, 256], strides = [1, 1]} : vector<128x256xf32> to vector<16x256xf32>
    %cst_51 = arith.constant dense<0.000000e+00> : vector<16x256xf32>
    %126 = tpu.matmul %124, %1, %cst_51 {dimension_numbers = #tpu.dot_dimension_numbers<[1], [0], [0], [1], [0, 0, 1, 1], [], []>} : vector<16x64xf32>, vector<64x256xf32>, vector<16x256xf32> -> vector<16x256xf32>
    %127 = arith.addf %125, %126 : vector<16x256xf32>
    %128 = vector.extract_strided_slice %127 {offsets = [0, 0], sizes = [16, 192], strides = [1, 1]} : vector<16x256xf32> to vector<16x192xf32>
    %129 = arith.negf %128 : vector<16x192xf32>
    %130 = math.exp %129 : vector<16x192xf32>
    %cst_52 = arith.constant 1.000000e+00 : f32
    %131 = vector.broadcast %cst_52 : f32 to vector<16x192xf32>
    %132 = arith.addf %131, %130 : vector<16x192xf32>
    %133 = arith.divf %131, %132 : vector<16x192xf32>
    %134 = vector.extract_strided_slice %127 {offsets = [0, 192], sizes = [16, 64], strides = [1, 1]} : vector<16x256xf32> to vector<16x64xf32>
    %135 = math.tanh %134 : vector<16x64xf32>
    %136 = vector.extract_strided_slice %133 {offsets = [0, 64], sizes = [16, 64], strides = [1, 1]} : vector<16x192xf32> to vector<16x64xf32>
    %137 = arith.mulf %136, %121 : vector<16x64xf32>
    %138 = vector.extract_strided_slice %133 {offsets = [0, 0], sizes = [16, 64], strides = [1, 1]} : vector<16x192xf32> to vector<16x64xf32>
    %139 = arith.mulf %138, %135 : vector<16x64xf32>
    %140 = arith.addf %137, %139 : vector<16x64xf32>
    %141 = vector.extract_strided_slice %133 {offsets = [0, 128], sizes = [16, 64], strides = [1, 1]} : vector<16x192xf32> to vector<16x64xf32>
    %142 = math.tanh %140 : vector<16x64xf32>
    %143 = arith.mulf %141, %142 : vector<16x64xf32>
    %144 = vector.extract_strided_slice %44 {offsets = [48, 0], sizes = [16, 64], strides = [1, 1]} : vector<128x64xf32> to vector<16x64xf32>
    %cst_53 = arith.constant 0.000000e+00 : f32
    %145 = vector.broadcast %cst_53 : f32 to vector<16x64xf32>
    %146 = arith.cmpf ogt, %144, %145 : vector<16x64xf32>
    %147 = arith.select %146, %140, %121 : vector<16x64xi1>, vector<16x64xf32>
    %cst_54 = arith.constant 0.000000e+00 : f32
    %148 = vector.broadcast %cst_54 : f32 to vector<16x64xf32>
    %149 = arith.cmpf ogt, %144, %148 : vector<16x64xf32>
    %150 = arith.select %149, %143, %124 : vector<16x64xi1>, vector<16x64xf32>
    %151 = vector.extract_strided_slice %37 {offsets = [64, 0], sizes = [16, 256], strides = [1, 1]} : vector<128x256xf32> to vector<16x256xf32>
    %cst_55 = arith.constant dense<0.000000e+00> : vector<16x256xf32>
    %152 = tpu.matmul %150, %1, %cst_55 {dimension_numbers = #tpu.dot_dimension_numbers<[1], [0], [0], [1], [0, 0, 1, 1], [], []>} : vector<16x64xf32>, vector<64x256xf32>, vector<16x256xf32> -> vector<16x256xf32>
    %153 = arith.addf %151, %152 : vector<16x256xf32>
    %154 = vector.extract_strided_slice %153 {offsets = [0, 0], sizes = [16, 192], strides = [1, 1]} : vector<16x256xf32> to vector<16x192xf32>
    %155 = arith.negf %154 : vector<16x192xf32>
    %156 = math.exp %155 : vector<16x192xf32>
    %cst_56 = arith.constant 1.000000e+00 : f32
    %157 = vector.broadcast %cst_56 : f32 to vector<16x192xf32>
    %158 = arith.addf %157, %156 : vector<16x192xf32>
    %159 = arith.divf %157, %158 : vector<16x192xf32>
    %160 = vector.extract_strided_slice %153 {offsets = [0, 192], sizes = [16, 64], strides = [1, 1]} : vector<16x256xf32> to vector<16x64xf32>
    %161 = math.tanh %160 : vector<16x64xf32>
    %162 = vector.extract_strided_slice %159 {offsets = [0, 64], sizes = [16, 64], strides = [1, 1]} : vector<16x192xf32> to vector<16x64xf32>
    %163 = arith.mulf %162, %147 : vector<16x64xf32>
    %164 = vector.extract_strided_slice %159 {offsets = [0, 0], sizes = [16, 64], strides = [1, 1]} : vector<16x192xf32> to vector<16x64xf32>
    %165 = arith.mulf %164, %161 : vector<16x64xf32>
    %166 = arith.addf %163, %165 : vector<16x64xf32>
    %167 = vector.extract_strided_slice %159 {offsets = [0, 128], sizes = [16, 64], strides = [1, 1]} : vector<16x192xf32> to vector<16x64xf32>
    %168 = math.tanh %166 : vector<16x64xf32>
    %169 = arith.mulf %167, %168 : vector<16x64xf32>
    %170 = vector.extract_strided_slice %44 {offsets = [64, 0], sizes = [16, 64], strides = [1, 1]} : vector<128x64xf32> to vector<16x64xf32>
    %cst_57 = arith.constant 0.000000e+00 : f32
    %171 = vector.broadcast %cst_57 : f32 to vector<16x64xf32>
    %172 = arith.cmpf ogt, %170, %171 : vector<16x64xf32>
    %173 = arith.select %172, %166, %147 : vector<16x64xi1>, vector<16x64xf32>
    %cst_58 = arith.constant 0.000000e+00 : f32
    %174 = vector.broadcast %cst_58 : f32 to vector<16x64xf32>
    %175 = arith.cmpf ogt, %170, %174 : vector<16x64xf32>
    %176 = arith.select %175, %169, %150 : vector<16x64xi1>, vector<16x64xf32>
    %177 = vector.extract_strided_slice %37 {offsets = [80, 0], sizes = [16, 256], strides = [1, 1]} : vector<128x256xf32> to vector<16x256xf32>
    %cst_59 = arith.constant dense<0.000000e+00> : vector<16x256xf32>
    %178 = tpu.matmul %176, %1, %cst_59 {dimension_numbers = #tpu.dot_dimension_numbers<[1], [0], [0], [1], [0, 0, 1, 1], [], []>} : vector<16x64xf32>, vector<64x256xf32>, vector<16x256xf32> -> vector<16x256xf32>
    %179 = arith.addf %177, %178 : vector<16x256xf32>
    %180 = vector.extract_strided_slice %179 {offsets = [0, 0], sizes = [16, 192], strides = [1, 1]} : vector<16x256xf32> to vector<16x192xf32>
    %181 = arith.negf %180 : vector<16x192xf32>
    %182 = math.exp %181 : vector<16x192xf32>
    %cst_60 = arith.constant 1.000000e+00 : f32
    %183 = vector.broadcast %cst_60 : f32 to vector<16x192xf32>
    %184 = arith.addf %183, %182 : vector<16x192xf32>
    %185 = arith.divf %183, %184 : vector<16x192xf32>
    %186 = vector.extract_strided_slice %179 {offsets = [0, 192], sizes = [16, 64], strides = [1, 1]} : vector<16x256xf32> to vector<16x64xf32>
    %187 = math.tanh %186 : vector<16x64xf32>
    %188 = vector.extract_strided_slice %185 {offsets = [0, 64], sizes = [16, 64], strides = [1, 1]} : vector<16x192xf32> to vector<16x64xf32>
    %189 = arith.mulf %188, %173 : vector<16x64xf32>
    %190 = vector.extract_strided_slice %185 {offsets = [0, 0], sizes = [16, 64], strides = [1, 1]} : vector<16x192xf32> to vector<16x64xf32>
    %191 = arith.mulf %190, %187 : vector<16x64xf32>
    %192 = arith.addf %189, %191 : vector<16x64xf32>
    %193 = vector.extract_strided_slice %185 {offsets = [0, 128], sizes = [16, 64], strides = [1, 1]} : vector<16x192xf32> to vector<16x64xf32>
    %194 = math.tanh %192 : vector<16x64xf32>
    %195 = arith.mulf %193, %194 : vector<16x64xf32>
    %196 = vector.extract_strided_slice %44 {offsets = [80, 0], sizes = [16, 64], strides = [1, 1]} : vector<128x64xf32> to vector<16x64xf32>
    %cst_61 = arith.constant 0.000000e+00 : f32
    %197 = vector.broadcast %cst_61 : f32 to vector<16x64xf32>
    %198 = arith.cmpf ogt, %196, %197 : vector<16x64xf32>
    %199 = arith.select %198, %192, %173 : vector<16x64xi1>, vector<16x64xf32>
    %cst_62 = arith.constant 0.000000e+00 : f32
    %200 = vector.broadcast %cst_62 : f32 to vector<16x64xf32>
    %201 = arith.cmpf ogt, %196, %200 : vector<16x64xf32>
    %202 = arith.select %201, %195, %176 : vector<16x64xi1>, vector<16x64xf32>
    %203 = vector.extract_strided_slice %37 {offsets = [96, 0], sizes = [16, 256], strides = [1, 1]} : vector<128x256xf32> to vector<16x256xf32>
    %cst_63 = arith.constant dense<0.000000e+00> : vector<16x256xf32>
    %204 = tpu.matmul %202, %1, %cst_63 {dimension_numbers = #tpu.dot_dimension_numbers<[1], [0], [0], [1], [0, 0, 1, 1], [], []>} : vector<16x64xf32>, vector<64x256xf32>, vector<16x256xf32> -> vector<16x256xf32>
    %205 = arith.addf %203, %204 : vector<16x256xf32>
    %206 = vector.extract_strided_slice %205 {offsets = [0, 0], sizes = [16, 192], strides = [1, 1]} : vector<16x256xf32> to vector<16x192xf32>
    %207 = arith.negf %206 : vector<16x192xf32>
    %208 = math.exp %207 : vector<16x192xf32>
    %cst_64 = arith.constant 1.000000e+00 : f32
    %209 = vector.broadcast %cst_64 : f32 to vector<16x192xf32>
    %210 = arith.addf %209, %208 : vector<16x192xf32>
    %211 = arith.divf %209, %210 : vector<16x192xf32>
    %212 = vector.extract_strided_slice %205 {offsets = [0, 192], sizes = [16, 64], strides = [1, 1]} : vector<16x256xf32> to vector<16x64xf32>
    %213 = math.tanh %212 : vector<16x64xf32>
    %214 = vector.extract_strided_slice %211 {offsets = [0, 64], sizes = [16, 64], strides = [1, 1]} : vector<16x192xf32> to vector<16x64xf32>
    %215 = arith.mulf %214, %199 : vector<16x64xf32>
    %216 = vector.extract_strided_slice %211 {offsets = [0, 0], sizes = [16, 64], strides = [1, 1]} : vector<16x192xf32> to vector<16x64xf32>
    %217 = arith.mulf %216, %213 : vector<16x64xf32>
    %218 = arith.addf %215, %217 : vector<16x64xf32>
    %219 = vector.extract_strided_slice %211 {offsets = [0, 128], sizes = [16, 64], strides = [1, 1]} : vector<16x192xf32> to vector<16x64xf32>
    %220 = math.tanh %218 : vector<16x64xf32>
    %221 = arith.mulf %219, %220 : vector<16x64xf32>
    %222 = vector.extract_strided_slice %44 {offsets = [96, 0], sizes = [16, 64], strides = [1, 1]} : vector<128x64xf32> to vector<16x64xf32>
    %cst_65 = arith.constant 0.000000e+00 : f32
    %223 = vector.broadcast %cst_65 : f32 to vector<16x64xf32>
    %224 = arith.cmpf ogt, %222, %223 : vector<16x64xf32>
    %225 = arith.select %224, %218, %199 : vector<16x64xi1>, vector<16x64xf32>
    %cst_66 = arith.constant 0.000000e+00 : f32
    %226 = vector.broadcast %cst_66 : f32 to vector<16x64xf32>
    %227 = arith.cmpf ogt, %222, %226 : vector<16x64xf32>
    %228 = arith.select %227, %221, %202 : vector<16x64xi1>, vector<16x64xf32>
    %229 = vector.extract_strided_slice %37 {offsets = [112, 0], sizes = [16, 256], strides = [1, 1]} : vector<128x256xf32> to vector<16x256xf32>
    %cst_67 = arith.constant dense<0.000000e+00> : vector<16x256xf32>
    %230 = tpu.matmul %228, %1, %cst_67 {dimension_numbers = #tpu.dot_dimension_numbers<[1], [0], [0], [1], [0, 0, 1, 1], [], []>} : vector<16x64xf32>, vector<64x256xf32>, vector<16x256xf32> -> vector<16x256xf32>
    %231 = arith.addf %229, %230 : vector<16x256xf32>
    %232 = vector.extract_strided_slice %231 {offsets = [0, 0], sizes = [16, 192], strides = [1, 1]} : vector<16x256xf32> to vector<16x192xf32>
    %233 = arith.negf %232 : vector<16x192xf32>
    %234 = math.exp %233 : vector<16x192xf32>
    %cst_68 = arith.constant 1.000000e+00 : f32
    %235 = vector.broadcast %cst_68 : f32 to vector<16x192xf32>
    %236 = arith.addf %235, %234 : vector<16x192xf32>
    %237 = arith.divf %235, %236 : vector<16x192xf32>
    %238 = vector.extract_strided_slice %231 {offsets = [0, 192], sizes = [16, 64], strides = [1, 1]} : vector<16x256xf32> to vector<16x64xf32>
    %239 = math.tanh %238 : vector<16x64xf32>
    %240 = vector.extract_strided_slice %237 {offsets = [0, 64], sizes = [16, 64], strides = [1, 1]} : vector<16x192xf32> to vector<16x64xf32>
    %241 = arith.mulf %240, %225 : vector<16x64xf32>
    %242 = vector.extract_strided_slice %237 {offsets = [0, 0], sizes = [16, 64], strides = [1, 1]} : vector<16x192xf32> to vector<16x64xf32>
    %243 = arith.mulf %242, %239 : vector<16x64xf32>
    %244 = arith.addf %241, %243 : vector<16x64xf32>
    %245 = vector.extract_strided_slice %237 {offsets = [0, 128], sizes = [16, 64], strides = [1, 1]} : vector<16x192xf32> to vector<16x64xf32>
    %246 = math.tanh %244 : vector<16x64xf32>
    %247 = arith.mulf %245, %246 : vector<16x64xf32>
    %248 = vector.extract_strided_slice %44 {offsets = [112, 0], sizes = [16, 64], strides = [1, 1]} : vector<128x64xf32> to vector<16x64xf32>
    %cst_69 = arith.constant 0.000000e+00 : f32
    %249 = vector.broadcast %cst_69 : f32 to vector<16x64xf32>
    %250 = arith.cmpf ogt, %248, %249 : vector<16x64xf32>
    %251 = arith.select %250, %247, %228 : vector<16x64xi1>, vector<16x64xf32>
    %cst_70 = arith.constant dense<0.000000e+00> : vector<16x32xf32>
    %252 = tpu.matmul %251, %3, %cst_70 {dimension_numbers = #tpu.dot_dimension_numbers<[1], [0], [0], [1], [0, 0, 1, 1], [], []>} : vector<16x64xf32>, vector<64x32xf32>, vector<16x32xf32> -> vector<16x32xf32>
    %253 = vector.broadcast %4 : vector<1x32xf32> to vector<16x32xf32>
    %254 = arith.addf %252, %253 : vector<16x32xf32>
    %cst_71 = arith.constant 0.000000e+00 : f32
    %255 = vector.broadcast %cst_71 : f32 to vector<16x32xf32>
    %256 = arith.cmpf oge, %254, %255 : vector<16x32xf32>
    %cst_72 = arith.constant 2.000000e-01 : f32
    %257 = vector.broadcast %cst_72 : f32 to vector<16x32xf32>
    %258 = arith.mulf %257, %254 : vector<16x32xf32>
    %259 = arith.select %256, %254, %258 : vector<16x32xi1>, vector<16x32xf32>
    %260 = tpu.concatenate %259, %26 in 1 : vector<16x32xf32>, vector<16x128xf32> -> vector<16x160xf32>
    %cst_73 = arith.constant 1.000000e+00 : f32
    %261 = vector.broadcast %cst_73 : f32 to vector<16x16xf32>
    %cst_74 = arith.constant dense<0.000000e+00> : vector<16x128xf32>
    %262 = tpu.matmul %260, %5, %cst_74 {dimension_numbers = #tpu.dot_dimension_numbers<[1], [0], [0], [1], [0, 0, 1, 1], [], []>} : vector<16x160xf32>, vector<160x128xf32>, vector<16x128xf32> -> vector<16x128xf32>
    %cst_75 = arith.constant dense<0.000000e+00> : vector<16x8xf32>
    %263 = tpu.matmul %262, %6, %cst_75 {dimension_numbers = #tpu.dot_dimension_numbers<[1], [0], [0], [1], [0, 0, 1, 1], [], []>} : vector<16x128xf32>, vector<128x8xf32>, vector<16x8xf32> -> vector<16x8xf32>
    %264 = vector.extract_strided_slice %263 {offsets = [0, 0], sizes = [16, 4], strides = [1, 1]} : vector<16x8xf32> to vector<16x4xf32>
    %265 = vector.extract_strided_slice %263 {offsets = [0, 4], sizes = [16, 4], strides = [1, 1]} : vector<16x8xf32> to vector<16x4xf32>
    %cst_76 = arith.constant dense<0.000000e+00> : vector<16x64xf32>
    %266 = tpu.matmul %265, %15, %cst_76 {dimension_numbers = #tpu.dot_dimension_numbers<[1], [0], [0], [1], [0, 0, 1, 1], [], []>} : vector<16x4xf32>, vector<4x64xf32>, vector<16x64xf32> -> vector<16x64xf32>
    %cst_77 = arith.constant dense<0.000000e+00> : vector<16x64xf32>
    %267 = tpu.matmul %264, %15, %cst_77 {dimension_numbers = #tpu.dot_dimension_numbers<[1], [0], [0], [1], [0, 0, 1, 1], [], []>} : vector<16x4xf32>, vector<4x64xf32>, vector<16x64xf32> -> vector<16x64xf32>
    %268 = arith.mulf %267, %17 : vector<16x64xf32>
    %cst_78 = arith.constant dense<0.000000e+00> : vector<16x64xf32>
    %269 = tpu.matmul %261, %268, %cst_78 {dimension_numbers = #tpu.dot_dimension_numbers<[1], [0], [0], [1], [0, 0, 1, 1], [], []>} : vector<16x16xf32>, vector<16x64xf32>, vector<16x64xf32> -> vector<16x64xf32>
    %cst_79 = arith.constant dense<0.000000e+00> : vector<16x64xf32>
    %270 = tpu.matmul %28, %17, %cst_79 {dimension_numbers = #tpu.dot_dimension_numbers<[1], [0], [0], [1], [0, 0, 1, 1], [], []>} : vector<16x16xf32>, vector<16x64xf32>, vector<16x64xf32> -> vector<16x64xf32>
    %271 = arith.addf %266, %269 : vector<16x64xf32>
    %cst_80 = arith.constant 0.000000e+00 : f32
    %272 = vector.broadcast %cst_80 : f32 to vector<16x64xf32>
    %273 = arith.cmpf oge, %271, %272 : vector<16x64xf32>
    %cst_81 = arith.constant 2.000000e-01 : f32
    %274 = vector.broadcast %cst_81 : f32 to vector<16x64xf32>
    %275 = arith.mulf %274, %271 : vector<16x64xf32>
    %276 = arith.select %273, %271, %275 : vector<16x64xi1>, vector<16x64xf32>
    %cst_82 = arith.constant 0.000000e+00 : f32
    %277 = vector.broadcast %cst_82 : f32 to vector<16x64xf32>
    %278 = arith.cmpf ogt, %270, %277 : vector<16x64xf32>
    %cst_83 = arith.constant -1.000000e+30 : f32
    %279 = vector.broadcast %cst_83 : f32 to vector<16x64xf32>
    %280 = arith.select %278, %276, %279 : vector<16x64xi1>, vector<16x64xf32>
    %cst_84 = arith.constant dense<0xFF800000> : vector<16xf32>
    %281 = vector.multi_reduction <maximumf>, %280, %cst_84 [1] : vector<16x64xf32> to vector<16xf32>
    %282 = vector.shape_cast %281 : vector<16xf32> to vector<16x1xf32>
    %283 = vector.broadcast %282 : vector<16x1xf32> to vector<16x64xf32>
    %284 = arith.subf %280, %283 : vector<16x64xf32>
    %285 = math.exp %284 : vector<16x64xf32>
    %286 = arith.mulf %285, %270 : vector<16x64xf32>
    %cst_85 = arith.constant dense<0.000000e+00> : vector<16x4xf32>
    %287 = tpu.matmul %286, %16, %cst_85 {dimension_numbers = #tpu.dot_dimension_numbers<[1], [0], [0], [1], [0, 0, 1, 1], [], []>} : vector<16x64xf32>, vector<64x4xf32>, vector<16x4xf32> -> vector<16x4xf32>
    %cst_86 = arith.constant dense<0.000000e+00> : vector<16x64xf32>
    %288 = tpu.matmul %287, %15, %cst_86 {dimension_numbers = #tpu.dot_dimension_numbers<[1], [0], [0], [1], [0, 0, 1, 1], [], []>} : vector<16x4xf32>, vector<4x64xf32>, vector<16x64xf32> -> vector<16x64xf32>
    %cst_87 = arith.constant 9.99999968E-21 : f32
    %289 = vector.broadcast %cst_87 : f32 to vector<16x64xf32>
    %290 = arith.maximumf %288, %289 : vector<16x64xf32>
    %291 = arith.divf %286, %290 : vector<16x64xf32>
    %cst_88 = arith.constant dense<0.000000e+00> : vector<64x128xf32>
    %292 = tpu.matmul %18, %262, %cst_88 {dimension_numbers = #tpu.dot_dimension_numbers<[1], [0], [0], [1], [0, 0, 1, 1], [], []>} : vector<64x16xf32>, vector<16x128xf32>, vector<64x128xf32> -> vector<64x128xf32>
    %293 = arith.mulf %292, %19 : vector<64x128xf32>
    %cst_89 = arith.constant dense<0.000000e+00> : vector<16x128xf32>
    %294 = tpu.matmul %291, %293, %cst_89 {dimension_numbers = #tpu.dot_dimension_numbers<[1], [0], [0], [1], [0, 0, 1, 1], [], []>} : vector<16x64xf32>, vector<64x128xf32>, vector<16x128xf32> -> vector<16x128xf32>
    %cst_90 = arith.constant dense<0.000000e+00> : vector<16x128xf32>
    %295 = tpu.matmul %260, %7, %cst_90 {dimension_numbers = #tpu.dot_dimension_numbers<[1], [0], [0], [1], [0, 0, 1, 1], [], []>} : vector<16x160xf32>, vector<160x128xf32>, vector<16x128xf32> -> vector<16x128xf32>
    %296 = arith.addf %294, %295 : vector<16x128xf32>
    %297 = vector.broadcast %8 : vector<1x128xf32> to vector<16x128xf32>
    %298 = arith.addf %296, %297 : vector<16x128xf32>
    %cst_91 = arith.constant 0.000000e+00 : f32
    %299 = vector.broadcast %cst_91 : f32 to vector<16x128xf32>
    %300 = arith.cmpf oge, %298, %299 : vector<16x128xf32>
    %cst_92 = arith.constant 2.000000e-01 : f32
    %301 = vector.broadcast %cst_92 : f32 to vector<16x128xf32>
    %302 = arith.mulf %301, %298 : vector<16x128xf32>
    %303 = arith.select %300, %298, %302 : vector<16x128xi1>, vector<16x128xf32>
    %cst_93 = arith.constant 0.000000e+00 : f32
    %304 = vector.broadcast %cst_93 : f32 to vector<16x128xf32>
    %305 = arith.cmpf oge, %303, %304 : vector<16x128xf32>
    %cst_94 = arith.constant 2.000000e-01 : f32
    %306 = vector.broadcast %cst_94 : f32 to vector<16x128xf32>
    %307 = arith.mulf %306, %303 : vector<16x128xf32>
    %308 = arith.select %305, %303, %307 : vector<16x128xi1>, vector<16x128xf32>
    %cst_95 = arith.constant dense<0.000000e+00> : vector<16x32xf32>
    %309 = tpu.matmul %308, %9, %cst_95 {dimension_numbers = #tpu.dot_dimension_numbers<[1], [0], [0], [1], [0, 0, 1, 1], [], []>} : vector<16x128xf32>, vector<128x32xf32>, vector<16x32xf32> -> vector<16x32xf32>
    %cst_96 = arith.constant dense<0.000000e+00> : vector<16x2xf32>
    %310 = tpu.matmul %309, %10, %cst_96 {dimension_numbers = #tpu.dot_dimension_numbers<[1], [0], [0], [1], [0, 0, 1, 1], [], []>} : vector<16x32xf32>, vector<32x2xf32>, vector<16x2xf32> -> vector<16x2xf32>
    %311 = vector.extract_strided_slice %310 {offsets = [0, 0], sizes = [16, 1], strides = [1, 1]} : vector<16x2xf32> to vector<16x1xf32>
    %312 = vector.extract_strided_slice %310 {offsets = [0, 1], sizes = [16, 1], strides = [1, 1]} : vector<16x2xf32> to vector<16x1xf32>
    %313 = vector.shape_cast %312 : vector<16x1xf32> to vector<16x1xf32>
    %314 = vector.broadcast %313 : vector<16x1xf32> to vector<16x16xf32>
    %315 = vector.shape_cast %311 : vector<16x1xf32> to vector<16x1xf32>
    %316 = vector.broadcast %315 : vector<16x1xf32> to vector<16x16xf32>
    %317 = arith.mulf %316, %20 : vector<16x16xf32>
    %cst_97 = arith.constant dense<0.000000e+00> : vector<16x16xf32>
    %318 = tpu.matmul %261, %317, %cst_97 {dimension_numbers = #tpu.dot_dimension_numbers<[1], [0], [0], [1], [0, 0, 1, 1], [], []>} : vector<16x16xf32>, vector<16x16xf32>, vector<16x16xf32> -> vector<16x16xf32>
    %319 = arith.addf %314, %318 : vector<16x16xf32>
    %cst_98 = arith.constant 0.000000e+00 : f32
    %320 = vector.broadcast %cst_98 : f32 to vector<16x16xf32>
    %321 = arith.cmpf oge, %319, %320 : vector<16x16xf32>
    %cst_99 = arith.constant 2.000000e-01 : f32
    %322 = vector.broadcast %cst_99 : f32 to vector<16x16xf32>
    %323 = arith.mulf %322, %319 : vector<16x16xf32>
    %324 = arith.select %321, %319, %323 : vector<16x16xi1>, vector<16x16xf32>
    %cst_100 = arith.constant 0.000000e+00 : f32
    %325 = vector.broadcast %cst_100 : f32 to vector<16x16xf32>
    %326 = arith.cmpf ogt, %30, %325 : vector<16x16xf32>
    %cst_101 = arith.constant -1.000000e+30 : f32
    %327 = vector.broadcast %cst_101 : f32 to vector<16x16xf32>
    %328 = arith.select %326, %324, %327 : vector<16x16xi1>, vector<16x16xf32>
    %cst_102 = arith.constant dense<0xFF800000> : vector<16xf32>
    %329 = vector.multi_reduction <maximumf>, %328, %cst_102 [1] : vector<16x16xf32> to vector<16xf32>
    %330 = vector.shape_cast %329 : vector<16xf32> to vector<16x1xf32>
    %331 = vector.broadcast %330 : vector<16x1xf32> to vector<16x16xf32>
    %332 = arith.subf %328, %331 : vector<16x16xf32>
    %333 = math.exp %332 : vector<16x16xf32>
    %334 = arith.mulf %333, %30 : vector<16x16xf32>
    %cst_103 = arith.constant dense<0.000000e+00> : vector<16xf32>
    %335 = vector.multi_reduction <add>, %334, %cst_103 [1] : vector<16x16xf32> to vector<16xf32>
    %336 = vector.shape_cast %335 : vector<16xf32> to vector<16x1xf32>
    %cst_104 = arith.constant 9.99999968E-21 : f32
    %337 = vector.broadcast %cst_104 : f32 to vector<16x1xf32>
    %338 = arith.maximumf %336, %337 : vector<16x1xf32>
    %339 = vector.broadcast %338 : vector<16x1xf32> to vector<16x16xf32>
    %340 = arith.divf %334, %339 : vector<16x16xf32>
    %cst_105 = arith.constant dense<0.000000e+00> : vector<16x32xf32>
    %341 = tpu.matmul %340, %309, %cst_105 {dimension_numbers = #tpu.dot_dimension_numbers<[1], [0], [0], [1], [0, 0, 1, 1], [], []>} : vector<16x16xf32>, vector<16x32xf32>, vector<16x32xf32> -> vector<16x32xf32>
    %cst_106 = arith.constant dense<0.000000e+00> : vector<16x32xf32>
    %342 = tpu.matmul %308, %11, %cst_106 {dimension_numbers = #tpu.dot_dimension_numbers<[1], [0], [0], [1], [0, 0, 1, 1], [], []>} : vector<16x128xf32>, vector<128x32xf32>, vector<16x32xf32> -> vector<16x32xf32>
    %343 = arith.addf %341, %342 : vector<16x32xf32>
    %344 = vector.broadcast %12 : vector<1x32xf32> to vector<16x32xf32>
    %345 = arith.addf %343, %344 : vector<16x32xf32>
    %cst_107 = arith.constant dense<0.000000e+00> : vector<24x32xf32>
    %346 = tpu.matmul %32, %345, %cst_107 {dimension_numbers = #tpu.dot_dimension_numbers<[1], [0], [0], [1], [0, 0, 1, 1], [], []>} : vector<24x16xf32>, vector<16x32xf32>, vector<24x32xf32> -> vector<24x32xf32>
    %cst_108 = arith.constant dense<0.000000e+00> : vector<24x32xf32>
    %347 = tpu.matmul %34, %345, %cst_108 {dimension_numbers = #tpu.dot_dimension_numbers<[1], [0], [0], [1], [0, 0, 1, 1], [], []>} : vector<24x16xf32>, vector<16x32xf32>, vector<24x32xf32> -> vector<24x32xf32>
    %348 = arith.mulf %346, %347 : vector<24x32xf32>
    %cst_109 = arith.constant dense<0.000000e+00> : vector<24x128xf32>
    %349 = tpu.matmul %348, %13, %cst_109 {dimension_numbers = #tpu.dot_dimension_numbers<[1], [0], [0], [1], [0, 0, 1, 1], [], []>} : vector<24x32xf32>, vector<32x128xf32>, vector<24x128xf32> -> vector<24x128xf32>
    %350 = vector.broadcast %14 : vector<1x128xf32> to vector<24x128xf32>
    %351 = arith.addf %349, %350 : vector<24x128xf32>
    %cst_110 = arith.constant 0.000000e+00 : f32
    %352 = vector.broadcast %cst_110 : f32 to vector<16x112xf32>
    %353 = tpu.concatenate %340, %352 in 1 : vector<16x16xf32>, vector<16x112xf32> -> vector<16x128xf32>
    %354 = tpu.concatenate %351, %353 in 0 : vector<24x128xf32>, vector<16x128xf32> -> vector<40x128xf32>
    %c0_111 = arith.constant 0 : index
    %c0_112 = arith.constant 0 : index
    %c0_113 = arith.constant 0 : index
    %355 = vector.load %arg4[%c0_111, %c0_112, %c0_113] : memref<1x40x128xf32, #tpu.memory_space<vmem>>, vector<1x40x128xf32>
    %356 = vector.shape_cast %355 : vector<1x40x128xf32> to vector<40x128xf32>
    %357 = vector.shape_cast %354 : vector<40x128xf32> to vector<1x40x128xf32>
    tpu.vector_store %arg4[%c0_111, %c0_112, %c0_113], %357 {strides = array<i32>} : memref<1x40x128xf32, #tpu.memory_space<vmem>>, vector<1x40x128xf32>,
    return
  }
  func.func @transform_0(%arg0: i32) -> (i32, i32) {
    %c0_i32 = arith.constant 0 : i32
    %c0_i32_0 = arith.constant 0 : i32
    %c0_i32_1 = arith.constant 0 : i32
    return %c0_i32, %c0_i32_0 : i32, i32
  }
  func.func @transform_1(%arg0: i32) -> (i32, i32) {
    %c0_i32 = arith.constant 0 : i32
    %c0_i32_0 = arith.constant 0 : i32
    %c0_i32_1 = arith.constant 0 : i32
    return %c0_i32, %c0_i32_0 : i32, i32
  }
  func.func @transform_2(%arg0: i32) -> (i32, i32, i32) {
    %c0_i32 = arith.constant 0 : i32
    %c0_i32_0 = arith.constant 0 : i32
    %c0_i32_1 = arith.constant 0 : i32
    return %arg0, %c0_i32, %c0_i32_0 : i32, i32, i32
  }
  func.func @transform_3(%arg0: i32) -> (i32, i32, i32) {
    %c0_i32 = arith.constant 0 : i32
    %c0_i32_0 = arith.constant 0 : i32
    %c0_i32_1 = arith.constant 0 : i32
    return %arg0, %c0_i32, %c0_i32_0 : i32, i32, i32
  }
}

</mosaic_0001>

<llo_original>
// kernel: reverse
$region0: #{reverse}
  %s0 = inlined_call_operand.vmem [shape: f32[2,8,16], index: 0, kind: input, shape index: {}]
  %s1 = inlined_call_operand.vmem [shape: f32[2,8,16], index: 1, kind: output, shape index: {}]
  $region1: #{reverse} parent=0
    #allocation0 [shape = 'u8[8192]{0}', space=vmem, size = 0x2000, scoped, tag = 'operand span for operand 0']
    #allocation1 [shape = 'u8[8192]{0}', space=vmem, size = 0x2000, scoped, tag = 'operand span for operand 1']
    // Predicated region
    $region2: #{reverse} parent=1 // pred_check
      _
    $region3: #{reverse} parent=1 // pred_check_branch
      %3 = sbr.rel (0) target = $region5
    $region4: #{reverse} parent=1 // pred_region
      // Predicated region
      $region6: #{reverse} parent=4 // pred_check
        _
      $region7: #{reverse} parent=4 // pred_check_branch
        %5 = sbr.rel (0) target = $region9
      $region8: #{reverse} parent=4 // pred_region
        // Predicated region
        $region21: #{reverse} parent=8 // pred_check
          _
        $region22: #{reverse} parent=8 // pred_check_branch
          %23 = sbr.rel (0) target = $region24
        $region23: #{reverse} parent=8 // pred_region
          loop: start=0, step=1, limit=1
          $region25: #{reverse} parent=23 // loop_pre_header
            _
          $region26: #{reverse} parent=23 // loop_header
            %s25 = sphi 0, %s29
            %p26 = scmp.ge.s32.totalorder %s25, 1
            %s30 = sphi %s0, %s0
            %s31 = sphi [#allocation0], [#allocation0]
          $region27: #{reverse} parent=23 // loop_header_branch
            %28 = sbr.rel (%p26) target = $region31
          $region28: #{reverse} parent=23 // loop_body
            %v32 = vld [vmem:[%s30] sm:$0xff]
            %33 = vst [vmem:[%s31] sm:$0xff] %v32
            %v34 = vld [vmem:[%s30 + $0x8] sm:$0xff]
            %35 = vst [vmem:[%s31 + $0x8] sm:$0xff] %v34
          $region29: #{reverse} parent=23 // loop_footer
            %s29 = sadd.s32 1, %s25
          $region30: #{reverse} parent=23 // loop_footer_branch
            %24 = sbr.rel target = $region26
          $region31: #{reverse} parent=23 // loop_exit
            _
        $region24: #{reverse} parent=8 // pred_fallthru
          _
        // Predicated region
        $region32: #{reverse} parent=8 // pred_check
          _
        $region33: #{reverse} parent=8 // pred_check_branch
          %37 = sbr.rel target = $region35
        $region34: #{reverse} parent=8 // pred_region
          _
        $region35: #{reverse} parent=8 // pred_fallthru
          _
      $region9: #{reverse} parent=4 // pred_fallthru
        _
      // Predicated region
      $region10: #{reverse} parent=4 // pred_check
        _
      $region11: #{reverse} parent=4 // pred_check_branch
        %7 = sbr.rel target = $region13
      $region12: #{reverse} parent=4 // pred_region
        %s9 = ssub.s32 256, 1
        loop: start=0, step=1, limit=1
        $region14: #{reverse} parent=12 // loop_pre_header
          _
        $region15: #{reverse} parent=12 // loop_header
          %s11 = sphi 0, %s15
          %p12 = scmp.ge.s32.totalorder %s11, 1
          %s16 = sphi %s0, %s0
          %s17 = sphi [#allocation0], [#allocation0]
        $region16: #{reverse} parent=12 // loop_header_branch
          %14 = sbr.rel (%p12) target = $region20
        $region17: #{reverse} parent=12 // loop_body
          %v18 = vld [vmem:[%s16] sm:%s9]
          %19 = vst [vmem:[%s17] sm:%s9] %v18
          %v20 = vld [vmem:[%s16 + $0x8] sm:%s9]
          %21 = vst [vmem:[%s17 + $0x8] sm:%s9] %v20
        $region18: #{reverse} parent=12 // loop_footer
          %s15 = sadd.s32 1, %s11
        $region19: #{reverse} parent=12 // loop_footer_branch
          %10 = sbr.rel target = $region15
        $region20: #{reverse} parent=12 // loop_exit
          _
      $region13: #{reverse} parent=4 // pred_fallthru
        _
    $region5: #{reverse} parent=1 // pred_fallthru
      _
    %38 = vnop
    %s39 = scalar_lea.vmem [#allocation0], 7
    %v40 = vld [vmem:[%s39] ss:$-1 sm:$0xff]
    %41 = vst [vmem:[#allocation1] sm:$0xff] %v40
    %s42 = scalar_lea.vmem [#allocation1], 8
    %s43 = scalar_lea.vmem [#allocation0], 8
    %s44 = scalar_lea.vmem %s43, 7 [#allocation0]
    %v45 = vld [vmem:[%s44] ss:$-1 sm:$0xff]
    %46 = vst [vmem:[%s42] sm:$0xff] %v45
    // Predicated region
    $region36: #{reverse} parent=1 // pred_check
      _
    $region37: #{reverse} parent=1 // pred_check_branch
      %48 = sbr.rel (0) target = $region39
    $region38: #{reverse} parent=1 // pred_region
      // Predicated region
      $region40: #{reverse} parent=38 // pred_check
        _
      $region41: #{reverse} parent=38 // pred_check_branch
        %50 = sbr.rel (0) target = $region43
      $region42: #{reverse} parent=38 // pred_region
        // Predicated region
        $region55: #{reverse} parent=42 // pred_check
          _
        $region56: #{reverse} parent=42 // pred_check_branch
          %68 = sbr.rel (0) target = $region58
        $region57: #{reverse} parent=42 // pred_region
          loop: start=0, step=1, limit=1
          $region59: #{reverse} parent=57 // loop_pre_header
            _
          $region60: #{reverse} parent=57 // loop_header
            %s70 = sphi 0, %s74
            %p71 = scmp.ge.s32.totalorder %s70, 1
            %s75 = sphi [#allocation1], [#allocation1]
            %s76 = sphi %s1, %s1
          $region61: #{reverse} parent=57 // loop_header_branch
            %73 = sbr.rel (%p71) target = $region65
          $region62: #{reverse} parent=57 // loop_body
            %v77 = vld [vmem:[%s75] sm:$0xff]
            %78 = vst [vmem:[%s76] sm:$0xff] %v77
            %v79 = vld [vmem:[%s75 + $0x8] sm:$0xff]
            %80 = vst [vmem:[%s76 + $0x8] sm:$0xff] %v79
          $region63: #{reverse} parent=57 // loop_footer
            %s74 = sadd.s32 1, %s70
          $region64: #{reverse} parent=57 // loop_footer_branch
            %69 = sbr.rel target = $region60
          $region65: #{reverse} parent=57 // loop_exit
            _
        $region58: #{reverse} parent=42 // pred_fallthru
          _
        // Predicated region
        $region66: #{reverse} parent=42 // pred_check
          _
        $region67: #{reverse} parent=42 // pred_check_branch
          %82 = sbr.rel target = $region69
        $region68: #{reverse} parent=42 // pred_region
          _
        $region69: #{reverse} parent=42 // pred_fallthru
          _
      $region43: #{reverse} parent=38 // pred_fallthru
        _
      // Predicated region
      $region44: #{reverse} parent=38 // pred_check
        _
      $region45: #{reverse} parent=38 // pred_check_branch
        %52 = sbr.rel target = $region47
      $region46: #{reverse} parent=38 // pred_region
        %s54 = ssub.s32 256, 1
        loop: start=0, step=1, limit=1
        $region48: #{reverse} parent=46 // loop_pre_header
          _
        $region49: #{reverse} parent=46 // loop_header
          %s56 = sphi 0, %s60
          %p57 = scmp.ge.s32.totalorder %s56, 1
          %s61 = sphi [#allocation1], [#allocation1]
          %s62 = sphi %s1, %s1
        $region50: #{reverse} parent=46 // loop_header_branch
          %59 = sbr.rel (%p57) target = $region54
        $region51: #{reverse} parent=46 // loop_body
          %v63 = vld [vmem:[%s61] sm:%s54]
          %64 = vst [vmem:[%s62] sm:%s54] %v63
          %v65 = vld [vmem:[%s61 + $0x8] sm:%s54]
          %66 = vst [vmem:[%s62 + $0x8] sm:%s54] %v65
        $region52: #{reverse} parent=46 // loop_footer
          %s60 = sadd.s32 1, %s56
        $region53: #{reverse} parent=46 // loop_footer_branch
          %55 = sbr.rel target = $region49
        $region54: #{reverse} parent=46 // loop_exit
          _
      $region47: #{reverse} parent=38 // pred_fallthru
        _
    $region39: #{reverse} parent=1 // pred_fallthru
      _
    %83 = vnop

// kernel: gat_forward.1
$region0: #{gat_forward.1}
  #allocation0 [shape = 'u32[]', space=smem, size = 0x4, offset = 0x4, fixed_abs, tag = 'smem constant byte address 0x4 - core index']
  #allocation1 [shape = 'u32[72,128]{1,0:T(1,128)}', space=vmem, size = 0x9000, scoped, tag = 'internal scratch']
  %s0 = inlined_call_operand.vmem [shape: f32[136,256], index: 0, kind: input, shape index: {}]
  %s1 = inlined_call_operand.vmem [shape: f32[1096,128], index: 1, kind: input, shape index: {}]
  %s2 = inlined_call_operand.vmem [shape: f32[2,224,128], index: 2, kind: input, shape index: {}]
  %s3 = inlined_call_operand.vmem [shape: f32[2,40,128], index: 3, kind: output, shape index: {}]
  %s4 = sld [smem:[#allocation0]]
  $region45: #{gat_forward.1} parent=0
    _
  %s6 = ssub.s32 1, %s4
  %s7 = scalar_select 0, %s6, %s4
  loop: start=0, step=1, limit=4
  $region2: #{gat_forward.1} parent=0 // loop_pre_header
    _
  $region3: #{gat_forward.1} parent=0 // loop_header
    %s9 = sphi 0, %s13
    %p10 = scmp.ge.s32.totalorder %s9, 4
    %s17 = sphi 0, %s17
    %s19 = sphi 0, %s17
    %s20 = sphi 0, %s19
    %s34 = sphi 0, %s20
    %s38 = sphi 0, %s38
    %s40 = sphi 0, %s38
    %s41 = sphi 0, %s40
    %s55 = sphi 0, %s41
    %s61 = sphi 0, %s63
    %s64 = sphi 0, %s61
    %s65 = sphi 0, %s64
    %s81 = sphi 0, %s65
    %s87 = sphi 0, %s89
    %s90 = sphi 0, %s87
    %s91 = sphi 0, %s90
    %s107 = sphi 0, %s91
  $region4: #{gat_forward.1} parent=0 // loop_header_branch
    %12 = sbr.rel (%p10) target = $region8
  $region5: #{gat_forward.1} parent=0 // loop_body
    %s14 = ssub.s32 %s9, 1
    %s15 = ssub.s32 %s9, 2
    %s16 = sadd.s32 %s9, 1
    %s18 = sadd.s32 %s17, 1
    %p21 = scmp.eq.s32.totalorder %s9, 1
    %p22 = scmp.ne.s32.totalorder %s17, %s19
    %p23 = scmp.eq.s32.totalorder %s9, 0
    %p24 = por %p22, %p23
    %p25 = scmp.ne.s32.totalorder %s17, %s19
    %p26 = scmp.eq.s32.totalorder %s14, 1
    %p27 = por %p25, %p26
    %p28 = scmp.ne.s32.totalorder %s19, %s20
    %p29 = scmp.eq.s32.totalorder %s14, 0
    %p30 = por %p28, %p29
    %p31 = scmp.ne.s32.totalorder %s19, %s20
    %p32 = scmp.eq.s32.totalorder %s15, 1
    %p33 = por %p31, %p32
    %p35 = scmp.ne.s32.totalorder %s20, %s34
    %p36 = scmp.eq.s32.totalorder %s15, 0
    %p37 = por %p35, %p36
    %s39 = sadd.s32 %s38, 1
    %p42 = scmp.eq.s32.totalorder %s9, 1
    %p43 = scmp.ne.s32.totalorder %s38, %s40
    %p44 = scmp.eq.s32.totalorder %s9, 0
    %p45 = por %p43, %p44
    %p46 = scmp.ne.s32.totalorder %s38, %s40
    %p47 = scmp.eq.s32.totalorder %s14, 1
    %p48 = por %p46, %p47
    %p49 = scmp.ne.s32.totalorder %s40, %s41
    %p50 = scmp.eq.s32.totalorder %s14, 0
    %p51 = por %p49, %p50
    %p52 = scmp.ne.s32.totalorder %s40, %s41
    %p53 = scmp.eq.s32.totalorder %s15, 1
    %p54 = por %p52, %p53
    %p56 = scmp.ne.s32.totalorder %s41, %s55
    %p57 = scmp.eq.s32.totalorder %s15, 0
    %p58 = por %p56, %p57
    %s59 = ssub.s32 %s9, %s16
    %p60 = scmp.eq.s32.totalorder %s59, 0
    %s62 = sadd.s32 %s61, 1
    %s63 = scalar_select %p60, %s61, %s62
    %p66 = pneg %p60
    %p67 = scmp.eq.s32.totalorder %s9, 1
    %p68 = por %p66, %p67
    %p69 = scmp.ne.s32.totalorder %s61, %s64
    %p70 = scmp.eq.s32.totalorder %s9, 0
    %p71 = por %p69, %p70
    %p72 = scmp.ne.s32.totalorder %s61, %s64
    %p73 = scmp.eq.s32.totalorder %s14, 1
    %p74 = por %p72, %p73
    %p75 = scmp.ne.s32.totalorder %s64, %s65
    %p76 = scmp.eq.s32.totalorder %s14, 0
    %p77 = por %p75, %p76
    %p78 = scmp.ne.s32.totalorder %s64, %s65
    %p79 = scmp.eq.s32.totalorder %s15, 1
    %p80 = por %p78, %p79
    %p82 = scmp.ne.s32.totalorder %s65, %s81
    %p83 = scmp.eq.s32.totalorder %s15, 0
    %p84 = por %p82, %p83
    %s85 = ssub.s32 %s9, %s16
    %p86 = scmp.eq.s32.totalorder %s85, 0
    %s88 = sadd.s32 %s87, 1
    %s89 = scalar_select %p86, %s87, %s88
    %p92 = pneg %p86
    %p93 = scmp.eq.s32.totalorder %s9, 1
    %p94 = por %p92, %p93
    %p95 = scmp.ne.s32.totalorder %s87, %s90
    %p96 = scmp.eq.s32.totalorder %s9, 0
    %p97 = por %p95, %p96
    %p98 = scmp.ne.s32.totalorder %s87, %s90
    %p99 = scmp.eq.s32.totalorder %s14, 1
    %p100 = por %p98, %p99
    %p101 = scmp.ne.s32.totalorder %s90, %s91
    %p102 = scmp.eq.s32.totalorder %s14, 0
    %p103 = por %p101, %p102
    %p104 = scmp.ne.s32.totalorder %s90, %s91
    %p105 = scmp.eq.s32.totalorder %s15, 1
    %p106 = por %p104, %p105
    %p108 = scmp.ne.s32.totalorder %s91, %s107
    %p109 = scmp.eq.s32.totalorder %s15, 0
    %p110 = por %p108, %p109
    %p111 = scmp.le.s32.totalorder 1, %s9
    %p112 = scmp.lt.s32.totalorder %s9, 3
    %p113 = pnand %p111, %p112
    %p114 = pneg %p113
    // Predicated region
    $region9: #{gat_forward.1} parent=5 // pred_check
      _
    $region10: #{gat_forward.1} parent=5 // pred_check_branch
      %116 = sbr.rel (%p113) target = $region12
    $region11: #{gat_forward.1} parent=5 // pred_region
      %s117 = ssub.s32 %s9, 1
      // Predicated region
      $region13: #{gat_forward.1} parent=11 // pred_check
        %p118 = pneg %p30
      $region14: #{gat_forward.1} parent=11 // pred_check_branch
        %120 = sbr.rel (%p118) target = $region16
      $region15: #{gat_forward.1} parent=11 // pred_region
        _
      $region16: #{gat_forward.1} parent=11 // pred_fallthru
        _
      // Predicated region
      $region17: #{gat_forward.1} parent=11 // pred_check
        %p121 = pneg %p51
      $region18: #{gat_forward.1} parent=11 // pred_check_branch
        %123 = sbr.rel (%p121) target = $region20
      $region19: #{gat_forward.1} parent=11 // pred_region
        _
      $region20: #{gat_forward.1} parent=11 // pred_fallthru
        _
    $region12: #{gat_forward.1} parent=5 // pred_fallthru
      _
    %p124 = scmp.lt.s32.totalorder %s9, 2
    // Predicated region
    $region21: #{gat_forward.1} parent=5 // pred_check
      %p125 = pneg %p124
    $region22: #{gat_forward.1} parent=5 // pred_check_branch
      %127 = sbr.rel (%p125) target = $region24
    $region23: #{gat_forward.1} parent=5 // pred_region
      // Predicated region
      $region25: #{gat_forward.1} parent=23 // pred_check
        %p128 = pneg %p71
      $region26: #{gat_forward.1} parent=23 // pred_check_branch
        %130 = sbr.rel (%p128) target = $region28
      $region27: #{gat_forward.1} parent=23 // pred_region
        %p131 = scmp.lt.s32.totalorder %s9, 1
        %s132 = scalar_select %p131, %s9, 1
        %s133 = smul.addr %s132, 28
        %s134 = smul.addr %s133, 8
        %s135 = scalar_lea.vmem %s2, %s134
      $region28: #{gat_forward.1} parent=23 // pred_fallthru
        _
    $region24: #{gat_forward.1} parent=5 // pred_fallthru
      _
    %p136 = scmp.le.s32.totalorder 1, %s9
    %p137 = scmp.lt.s32.totalorder %s9, 3
    %p138 = pnand %p136, %p137
    %p139 = pneg %p138
    // Predicated region
    $region29: #{gat_forward.1} parent=5 // pred_check
      _
    $region30: #{gat_forward.1} parent=5 // pred_check_branch
      %141 = sbr.rel (%p138) target = $region32
    $region31: #{gat_forward.1} parent=5 // pred_region
      %s142 = ssub.s32 %s9, 1
      %p143 = pneg %p30
      %p144 = pneg %p27
      %p145 = pneg %p51
      %p146 = pneg %p48
      %p147 = scmp.lt.s32.totalorder %s14, 1
      %s148 = scalar_select %p147, %s14, 1
      %s149 = smul.addr %s148, 28
      %s150 = smul.addr %s149, 8
      %s151 = scalar_lea.vmem %s2, %s150
      %p152 = pneg %p77
      %p153 = pneg %p74
      %p154 = pneg %p103
      %p155 = pneg %p100
      %p156 = scmp.lt.s32.totalorder %s14, 1
      %s157 = scalar_select %p156, %s14, 1
      %s158 = smul.addr %s157, 5
      %s159 = smul.addr %s158, 8
      %s160 = scalar_lea.vmem %s3, %s159
      %p161 = scmp.lt.s32.totalorder %s14, 1
      %s162 = scalar_select %p161, %s14, 1
      %s163 = smul.addr %s162, 28
      %s164 = smul.addr %s163, 8
      %s165 = scalar_lea.vmem %s2, %s164
      %p166 = scmp.lt.s32.totalorder %s14, 1
      %s167 = scalar_select %p166, %s14, 1
      %s168 = smul.addr %s167, 5
      %s169 = smul.addr %s168, 8
      %s170 = scalar_lea.vmem %s3, %s169
      %v171 = vld [vmem:[%s0] sm:$0xff]
      %v172 = vld [vmem:[%s0 + $0x8] sm:$0xff]
      %v173 = vld [vmem:[%s0 + $0x10] sm:$0xff]
      %v174 = vld [vmem:[%s0 + $0x18] sm:$0xff]
      %v175 = vld [vmem:[%s0 + $0x20] sm:$0xff]
      %v176 = vld [vmem:[%s0 + $0x28] sm:$0xff]
      %v177 = vld [vmem:[%s0 + $0x30] sm:$0xff]
      %v178 = vld [vmem:[%s0 + $0x38] sm:$0xff]
      %v179 = vld [vmem:[%s0 + $0x40] sm:$0xff]
      %v180 = vld [vmem:[%s0 + $0x48] sm:$0xff]
      %v181 = vld [vmem:[%s0 + $0x50] sm:$0xff]
      %v182 = vld [vmem:[%s0 + $0x58] sm:$0xff]
      %v183 = vld [vmem:[%s0 + $0x60] sm:$0xff]
      %v184 = vld [vmem:[%s0 + $0x68] sm:$0xff]
      %v185 = vld [vmem:[%s0 + $0x70] sm:$0xff]
      %v186 = vld [vmem:[%s0 + $0x78] sm:$0xff]
      %v187 = vld [vmem:[%s0 + $0x80] sm:$0xff]
      %v188 = vld [vmem:[%s0 + $0x88] sm:$0xff]
      %v189 = vld [vmem:[%s0 + $0x90] sm:$0xff]
      %v190 = vld [vmem:[%s0 + $0x98] sm:$0xff]
      %v191 = vld [vmem:[%s0 + $0xa0] sm:$0xff]
      %v192 = vld [vmem:[%s0 + $0xa8] sm:$0xff]
      %v193 = vld [vmem:[%s0 + $0xb0] sm:$0xff]
      %v194 = vld [vmem:[%s0 + $0xb8] sm:$0xff]
      %v195 = vld [vmem:[%s0 + $0xc0] sm:$0xff]
      %v196 = vld [vmem:[%s0 + $0xc8] sm:$0xff]
      %v197 = vld [vmem:[%s0 + $0xd0] sm:$0xff]
      %v198 = vld [vmem:[%s0 + $0xd8] sm:$0xff]
      %v199 = vld [vmem:[%s0 + $0xe0] sm:$0xff]
      %v200 = vld [vmem:[%s0 + $0xe8] sm:$0xff]
      %v201 = vld [vmem:[%s0 + $0xf0] sm:$0xff]
      %v202 = vld [vmem:[%s0 + $0xf8] sm:$0xff]
      %s203 = scalar_lea.vmem %s0, 256
      %v204 = vld [vmem:[%s203] ss:$8 sm:$0x3]
      %v205 = vld [vmem:[%s1] sm:$0xff]
      %v206 = vld [vmem:[%s1 + $0x8] sm:$0xff]
      %v207 = vld [vmem:[%s1 + $0x10] sm:$0xff]
      %v208 = vld [vmem:[%s1 + $0x18] sm:$0xff]
      %v209 = vld [vmem:[%s1 + $0x20] sm:$0xff]
      %v210 = vld [vmem:[%s1 + $0x28] sm:$0xff]
      %v211 = vld [vmem:[%s1 + $0x30] sm:$0xff]
      %v212 = vld [vmem:[%s1 + $0x38] sm:$0xff]
      %v213 = vld [vmem:[%s1 + $0x40] sm:$0x1]
      %v214 = vld [vmem:[%s1 + $0x48] sm:$0xff]
      %v215 = vld [vmem:[%s1 + $0x50] sm:$0xff]
      %v216 = vld [vmem:[%s1 + $0x58] sm:$0xff]
      %v217 = vld [vmem:[%s1 + $0x60] sm:$0xff]
      %v218 = vld [vmem:[%s1 + $0x68] sm:$0xff]
      %v219 = vld [vmem:[%s1 + $0x70] sm:$0xff]
      %v220 = vld [vmem:[%s1 + $0x78] sm:$0xff]
      %v221 = vld [vmem:[%s1 + $0x80] sm:$0xff]
      %v222 = vld [vmem:[%s1 + $0x88] sm:$0xff]
      %v223 = vld [vmem:[%s1 + $0x90] sm:$0xff]
      %v224 = vld [vmem:[%s1 + $0x98] sm:$0xff]
      %v225 = vld [vmem:[%s1 + $0xa0] sm:$0xff]
      %v226 = vld [vmem:[%s1 + $0xa8] sm:$0xff]
      %v227 = vld [vmem:[%s1 + $0xb0] sm:$0xff]
      %v228 = vld [vmem:[%s1 + $0xb8] sm:$0xff]
      %v229 = vld [vmem:[%s1 + $0xc0] sm:$0xff]
      %v230 = vld [vmem:[%s1 + $0xc8] sm:$0xff]
      %v231 = vld [vmem:[%s1 + $0xd0] sm:$0xff]
      %v232 = vld [vmem:[%s1 + $0xd8] sm:$0xff]
      %v233 = vld [vmem:[%s1 + $0xe0] sm:$0xff]
      %v234 = vld [vmem:[%s1 + $0xe8] sm:$0xff]
      %v235 = vld [vmem:[%s1 + $0xf0] sm:$0xff]
      %v236 = vld [vmem:[%s1 + $0xf8] sm:$0xff]
      %v237 = vld [vmem:[%s1 + $0x100] sm:$0xff]
      %v238 = vld [vmem:[%s1 + $0x108] sm:$0xff]
      %v239 = vld [vmem:[%s1 + $0x110] sm:$0xff]
      %v240 = vld [vmem:[%s1 + $0x118] sm:$0xff]
      %v241 = vld [vmem:[%s1 + $0x120] sm:$0xff]
      %v242 = vld [vmem:[%s1 + $0x128] sm:$0xff]
      %v243 = vld [vmem:[%s1 + $0x130] sm:$0xff]
      %v244 = vld [vmem:[%s1 + $0x138] sm:$0xff]
      %v245 = vld [vmem:[%s1 + $0x140] sm:$0xff]
      %v246 = vld [vmem:[%s1 + $0x148] sm:$0xff]
      %v247 = vld [vmem:[%s1 + $0x150] sm:$0xff]
      %v248 = vld [vmem:[%s1 + $0x158] sm:$0xff]
      %v249 = vld [vmem:[%s1 + $0x160] sm:$0xff]
      %v250 = vld [vmem:[%s1 + $0x168] sm:$0xff]
      %v251 = vld [vmem:[%s1 + $0x170] sm:$0xff]
      %v252 = vld [vmem:[%s1 + $0x178] sm:$0xff]
      %v253 = vld [vmem:[%s1 + $0x180] sm:$0xff]
      %v254 = vld [vmem:[%s1 + $0x188] sm:$0xff]
      %v255 = vld [vmem:[%s1 + $0x190] sm:$0xff]
      %v256 = vld [vmem:[%s1 + $0x198] sm:$0xff]
      %v257 = vld [vmem:[%s1 + $0x1a0] sm:$0xff]
      %v258 = vld [vmem:[%s1 + $0x1a8] sm:$0xff]
      %v259 = vld [vmem:[%s1 + $0x1b0] sm:$0xff]
      %v260 = vld [vmem:[%s1 + $0x1b8] sm:$0xff]
      %v261 = vld [vmem:[%s1 + $0x1c0] sm:$0xff]
      %v262 = vld [vmem:[%s1 + $0x1c8] sm:$0xff]
      %v263 = vld [vmem:[%s1 + $0x1d0] sm:$0xff]
      %v264 = vld [vmem:[%s1 + $0x1d8] sm:$0xff]
      %v265 = vld [vmem:[%s1 + $0x1e0] sm:$0xff]
      %v266 = vld [vmem:[%s1 + $0x1e8] sm:$0xff]
      %v267 = vld [vmem:[%s1 + $0x1f0] sm:$0xff]
      %v268 = vld [vmem:[%s1 + $0x1f8] sm:$0xff]
      %v269 = vld [vmem:[%s1 + $0x200] sm:$0xff]
      %v270 = vld [vmem:[%s1 + $0x208] sm:$0x1]
      %v271 = vld [vmem:[%s1 + $0x210] sm:$0xff]
      %v272 = vld [vmem:[%s1 + $0x218] sm:$0xff]
      %v273 = vld [vmem:[%s1 + $0x220] sm:$0xff]
      %v274 = vld [vmem:[%s1 + $0x228] sm:$0xff]
      %v275 = vld [vmem:[%s1 + $0x230] sm:$0xff]
      %v276 = vld [vmem:[%s1 + $0x238] sm:$0xff]
      %v277 = vld [vmem:[%s1 + $0x240] sm:$0xff]
      %v278 = vld [vmem:[%s1 + $0x248] sm:$0xff]
      %v279 = vld [vmem:[%s1 + $0x250] sm:$0xff]
      %v280 = vld [vmem:[%s1 + $0x258] sm:$0xff]
      %v281 = vld [vmem:[%s1 + $0x260] sm:$0xff]
      %v282 = vld [vmem:[%s1 + $0x268] sm:$0xff]
      %v283 = vld [vmem:[%s1 + $0x270] sm:$0xff]
      %v284 = vld [vmem:[%s1 + $0x278] sm:$0xff]
      %v285 = vld [vmem:[%s1 + $0x280] sm:$0xff]
      %v286 = vld [vmem:[%s1 + $0x288] sm:$0xff]
      %v287 = vld [vmem:[%s1 + $0x290] sm:$0xff]
      %v288 = vld [vmem:[%s1 + $0x298] sm:$0xff]
      %v289 = vld [vmem:[%s1 + $0x2a0] sm:$0xff]
      %v290 = vld [vmem:[%s1 + $0x2a8] sm:$0xff]
      %v291 = vld [vmem:[%s1 + $0x2b0] sm:$0xff]
      %v292 = vld [vmem:[%s1 + $0x2b8] sm:$0xff]
      %v293 = vld [vmem:[%s1 + $0x2c0] sm:$0xff]
      %v294 = vld [vmem:[%s1 + $0x2c8] sm:$0xff]
      %v295 = vld [vmem:[%s1 + $0x2d0] sm:$0xff]
      %v296 = vld [vmem:[%s1 + $0x2d8] sm:$0xff]
      %v297 = vld [vmem:[%s1 + $0x2e0] sm:$0xff]
      %v298 = vld [vmem:[%s1 + $0x2e8] sm:$0xff]
      %v299 = vld [vmem:[%s1 + $0x2f0] sm:$0xff]
      %v300 = vld [vmem:[%s1 + $0x2f8] sm:$0xff]
      %v301 = vld [vmem:[%s1 + $0x300] sm:$0xff]
      %v302 = vld [vmem:[%s1 + $0x308] sm:$0xff]
      %v303 = vld [vmem:[%s1 + $0x310] sm:$0xff]
      %v304 = vld [vmem:[%s1 + $0x318] sm:$0xff]
      %v305 = vld [vmem:[%s1 + $0x320] sm:$0xff]
      %v306 = vld [vmem:[%s1 + $0x328] sm:$0xff]
      %v307 = vld [vmem:[%s1 + $0x330] sm:$0x1]
      %v308 = vld [vmem:[%s1 + $0x338] sm:$0xff]
      %v309 = vld [vmem:[%s1 + $0x340] sm:$0xff]
      %v310 = vld [vmem:[%s1 + $0x348] sm:$0xff]
      %v311 = vld [vmem:[%s1 + $0x350] sm:$0xff]
      %v312 = vld [vmem:[%s1 + $0x358] sm:$0x1]
      %v313 = vld [vmem:[%s1 + $0x360] sm:$0xf]
      %v314 = vld [vmem:[%s1 + $0x368] sm:$0xff]
      %v315 = vld [vmem:[%s1 + $0x370] sm:$0xff]
      %v316 = vld [vmem:[%s1 + $0x378] sm:$0xff]
      %v317 = vld [vmem:[%s1 + $0x380] sm:$0xff]
      %v318 = vld [vmem:[%s1 + $0x388] sm:$0xff]
      %v319 = vld [vmem:[%s1 + $0x390] sm:$0xff]
      %v320 = vld [vmem:[%s1 + $0x398] sm:$0xff]
      %v321 = vld [vmem:[%s1 + $0x3a0] sm:$0xff]
      %v322 = vld [vmem:[%s1 + $0x3a8] sm:$0xff]
      %v323 = vld [vmem:[%s1 + $0x3b0] sm:$0xff]
      %v324 = vld [vmem:[%s1 + $0x3b8] sm:$0xff]
      %v325 = vld [vmem:[%s1 + $0x3c0] sm:$0xff]
      %v326 = vld [vmem:[%s1 + $0x3c8] sm:$0xff]
      %v327 = vld [vmem:[%s1 + $0x3d0] sm:$0xff]
      %v328 = vld [vmem:[%s1 + $0x3d8] sm:$0xff]
      %v329 = vld [vmem:[%s1 + $0x3e0] sm:$0xff]
      %v330 = vld [vmem:[%s1 + $0x3e8] sm:$0xff]
      %v331 = vld [vmem:[%s1 + $0x3f0] sm:$0xff]
      %v332 = vld [vmem:[%s1 + $0x3f8] sm:$0xff]
      %v333 = vld [vmem:[%s1 + $0x400] sm:$0xff]
      %v334 = vld [vmem:[%s1 + $0x408] sm:$0xff]
      %v335 = vld [vmem:[%s1 + $0x410] sm:$0xff]
      %v336 = vld [vmem:[%s1 + $0x418] sm:$0xff]
      %v337 = vld [vmem:[%s1 + $0x420] sm:$0xff]
      %v338 = vld [vmem:[%s1 + $0x428] sm:$0xff]
      %v339 = vld [vmem:[%s1 + $0x430] sm:$0xff]
      %v340 = vld [vmem:[%s1 + $0x438] sm:$0xff]
      %v341 = vld [vmem:[%s1 + $0x440] sm:$0xff]
      %v342 = vld [vmem:[%s165] sm:$0xff]
      %v343 = vld [vmem:[%s165 + $0x8] sm:$0xff]
      %v344 = vld [vmem:[%s165 + $0x10] sm:$0xff]
      %v345 = vld [vmem:[%s165 + $0x18] sm:$0xff]
      %v346 = vld [vmem:[%s165 + $0x20] sm:$0xff]
      %v347 = vld [vmem:[%s165 + $0x28] sm:$0xff]
      %v348 = vld [vmem:[%s165 + $0x30] sm:$0xff]
      %v349 = vld [vmem:[%s165 + $0x38] sm:$0xff]
      %v350 = vld [vmem:[%s165 + $0x40] sm:$0xff]
      %v351 = vld [vmem:[%s165 + $0x48] sm:$0xff]
      %v352 = vld [vmem:[%s165 + $0x50] sm:$0xff]
      %v353 = vld [vmem:[%s165 + $0x58] sm:$0xff]
      %v354 = vld [vmem:[%s165 + $0x60] sm:$0xff]
      %v355 = vld [vmem:[%s165 + $0x68] sm:$0xff]
      %v356 = vld [vmem:[%s165 + $0x70] sm:$0xff]
      %v357 = vld [vmem:[%s165 + $0x78] sm:$0xff]
      %v358 = vld [vmem:[%s165 + $0x80] sm:$0xff]
      %v359 = vld [vmem:[%s165 + $0x88] sm:$0xff]
      %v360 = vld [vmem:[%s165 + $0x90] sm:$0xff]
      %v361 = vld [vmem:[%s165 + $0x98] sm:$0xff]
      %v362 = vld [vmem:[%s165 + $0xa0] sm:$0xff]
      %v363 = vld [vmem:[%s165 + $0xa8] sm:$0xff]
      %v364 = vld [vmem:[%s165 + $0xb0] sm:$0xff]
      %v365 = vld [vmem:[%s165 + $0xb8] sm:$0xff]
      %v366 = vld [vmem:[%s165 + $0xc0] sm:$0xff]
      %v367 = vld [vmem:[%s165 + $0xc8] sm:$0xff]
      %v368 = vld [vmem:[%s165 + $0xd0] sm:$0xff]
      %v369 = vld [vmem:[%s165 + $0xd8] sm:$0xff]
      %v371 = vperm.slane %v204, 0
      %v372 = vperm.slane %v204, 1
      %vm375 = vcmask 523264
      %v377 = vsel %vm375, %v342, 0
      %v380 = vsel %vm375, %v343, 0
      %v383 = vsel %vm375, %v344, 0
      %v386 = vsel %vm375, %v345, 0
      %v389 = vsel %vm375, %v346, 0
      %v392 = vsel %vm375, %v347, 0
      %v395 = vsel %vm375, %v348, 0
      %v398 = vsel %vm375, %v349, 0
      %v401 = vsel %vm375, %v350, 0
      %v404 = vsel %vm375, %v351, 0
      %v407 = vsel %vm375, %v352, 0
      %v410 = vsel %vm375, %v353, 0
      %v413 = vsel %vm375, %v354, 0
      %v416 = vsel %vm375, %v355, 0
      %v419 = vsel %vm375, %v356, 0
      %v422 = vsel %vm375, %v357, 0
      %424 = vmatpush.msra.mxu0 0.0
      %425 = vmatpush.msra.mxu0 0.0
      %426 = vmatpush.msra.mxu0 0.0
      %427 = vmatpush.msra.mxu0 0.0
      %428 = vmatpush.msra.mxu0 0.0
      %429 = vmatpush.msra.mxu0 0.0
      %430 = vmatpush.msra.mxu0 0.0
      %431 = vmatpush.msra.mxu0 0.0
      %432 = vmatpush.msra.mxu0 %v185
      %433 = vmatpush.msra.mxu0 %v183
      %434 = vmatpush.msra.mxu0 %v181
      %435 = vmatpush.msra.mxu0 %v179
      %436 = vmatpush.msra.mxu0 %v177
      %437 = vmatpush.msra.mxu0 %v175
      %438 = vmatpush.msra.mxu0 %v173
      %439 = vmatpush.msra.mxu0 %v171
      %440 = vmatmul.f32.gmra.mxu0 %v377
      %v441 = vpop.f32.mrf.mxu0
      %v442 = vadd.f32 %v371, %v441
      %443 = vmatmul.f32.gmra.mxu0 %v380
      %v444 = vpop.f32.mrf.mxu0
      %v445 = vadd.f32 %v371, %v444
      %446 = vmatmul.f32.gmra.mxu0 %v383
      %v447 = vpop.f32.mrf.mxu0
      %v448 = vadd.f32 %v371, %v447
      %449 = vmatmul.f32.gmra.mxu0 %v386
      %v450 = vpop.f32.mrf.mxu0
      %v451 = vadd.f32 %v371, %v450
      %452 = vmatmul.f32.gmra.mxu0 %v389
      %v453 = vpop.f32.mrf.mxu0
      %v454 = vadd.f32 %v371, %v453
      %455 = vmatmul.f32.gmra.mxu0 %v392
      %v456 = vpop.f32.mrf.mxu0
      %v457 = vadd.f32 %v371, %v456
      %458 = vmatmul.f32.gmra.mxu0 %v395
      %v459 = vpop.f32.mrf.mxu0
      %v460 = vadd.f32 %v371, %v459
      %461 = vmatmul.f32.gmra.mxu0 %v398
      %v462 = vpop.f32.mrf.mxu0
      %v463 = vadd.f32 %v371, %v462
      %464 = vmatmul.f32.gmra.mxu0 %v401
      %v465 = vpop.f32.mrf.mxu0
      %v466 = vadd.f32 %v371, %v465
      %467 = vmatmul.f32.gmra.mxu0 %v404
      %v468 = vpop.f32.mrf.mxu0
      %v469 = vadd.f32 %v371, %v468
      %470 = vmatmul.f32.gmra.mxu0 %v407
      %v471 = vpop.f32.mrf.mxu0
      %v472 = vadd.f32 %v371, %v471
      %473 = vmatmul.f32.gmra.mxu0 %v410
      %v474 = vpop.f32.mrf.mxu0
      %v475 = vadd.f32 %v371, %v474
      %476 = vmatmul.f32.gmra.mxu0 %v413
      %v477 = vpop.f32.mrf.mxu0
      %v478 = vadd.f32 %v371, %v477
      %479 = vmatmul.f32.gmra.mxu0 %v416
      %v480 = vpop.f32.mrf.mxu0
      %v481 = vadd.f32 %v371, %v480
      %482 = vmatmul.f32.gmra.mxu0 %v419
      %v483 = vpop.f32.mrf.mxu0
      %v484 = vadd.f32 %v371, %v483
      %485 = vmatmul.f32.gmra.mxu0 %v422
      %v486 = vpop.f32.mrf.mxu0
      %v487 = vadd.f32 %v371, %v486
      %488 = vdwg.mxu0
      %489 = vmatpush.msra.mxu0 0.0
      %490 = vmatpush.msra.mxu0 0.0
      %491 = vmatpush.msra.mxu0 0.0
      %492 = vmatpush.msra.mxu0 0.0
      %493 = vmatpush.msra.mxu0 0.0
      %494 = vmatpush.msra.mxu0 0.0
      %495 = vmatpush.msra.mxu0 0.0
      %496 = vmatpush.msra.mxu0 0.0
      %497 = vmatpush.msra.mxu0 %v186
      %498 = vmatpush.msra.mxu0 %v184
      %499 = vmatpush.msra.mxu0 %v182
      %500 = vmatpush.msra.mxu0 %v180
      %501 = vmatpush.msra.mxu0 %v178
      %502 = vmatpush.msra.mxu0 %v176
      %503 = vmatpush.msra.mxu0 %v174
      %504 = vmatpush.msra.mxu0 %v172
      %505 = vmatmul.f32.gmra.mxu0 %v377
      %v506 = vpop.f32.mrf.mxu0
      %v507 = vadd.f32 %v372, %v506
      %508 = vmatmul.f32.gmra.mxu0 %v380
      %v509 = vpop.f32.mrf.mxu0
      %v510 = vadd.f32 %v372, %v509
      %511 = vmatmul.f32.gmra.mxu0 %v383
      %v512 = vpop.f32.mrf.mxu0
      %v513 = vadd.f32 %v372, %v512
      %514 = vmatmul.f32.gmra.mxu0 %v386
      %v515 = vpop.f32.mrf.mxu0
      %v516 = vadd.f32 %v372, %v515
      %517 = vmatmul.f32.gmra.mxu0 %v389
      %v518 = vpop.f32.mrf.mxu0
      %v519 = vadd.f32 %v372, %v518
      %520 = vmatmul.f32.gmra.mxu0 %v392
      %v521 = vpop.f32.mrf.mxu0
      %v522 = vadd.f32 %v372, %v521
      %523 = vmatmul.f32.gmra.mxu0 %v395
      %v524 = vpop.f32.mrf.mxu0
      %v525 = vadd.f32 %v372, %v524
      %526 = vmatmul.f32.gmra.mxu0 %v398
      %v527 = vpop.f32.mrf.mxu0
      %v528 = vadd.f32 %v372, %v527
      %529 = vmatmul.f32.gmra.mxu0 %v401
      %v530 = vpop.f32.mrf.mxu0
      %v531 = vadd.f32 %v372, %v530
      %532 = vmatmul.f32.gmra.mxu0 %v404
      %v533 = vpop.f32.mrf.mxu0
      %v534 = vadd.f32 %v372, %v533
      %535 = vmatmul.f32.gmra.mxu0 %v407
      %v536 = vpop.f32.mrf.mxu0
      %v537 = vadd.f32 %v372, %v536
      %538 = vmatmul.f32.gmra.mxu0 %v410
      %v539 = vpop.f32.mrf.mxu0
      %v540 = vadd.f32 %v372, %v539
      %541 = vmatmul.f32.gmra.mxu0 %v413
      %v542 = vpop.f32.mrf.mxu0
      %v543 = vadd.f32 %v372, %v542
      %544 = vmatmul.f32.gmra.mxu0 %v416
      %v545 = vpop.f32.mrf.mxu0
      %v546 = vadd.f32 %v372, %v545
      %547 = vmatmul.f32.gmra.mxu0 %v419
      %v548 = vpop.f32.mrf.mxu0
      %v549 = vadd.f32 %v372, %v548
      %550 = vmatmul.f32.gmra.mxu0 %v422
      %v551 = vpop.f32.mrf.mxu0
      %v552 = vadd.f32 %v372, %v551
      %553 = vdwg.mxu0
      %554 = vset.pattern.permute.xlu0 64
      %555 = vperm.xlu0 %554, %v342
      %v556 = vpop.permute.xlu0 %555
      %558 = vset.pattern.permute.xlu0 64
      %559 = vperm.xlu0 %558, %v343
      %v560 = vpop.permute.xlu0 %559
      %562 = vset.pattern.permute.xlu0 64
      %563 = vperm.xlu0 %562, %v344
      %v564 = vpop.permute.xlu0 %563
      %566 = vset.pattern.permute.xlu0 64
      %567 = vperm.xlu0 %566, %v345
      %v568 = vpop.permute.xlu0 %567
      %570 = vset.pattern.permute.xlu0 64
      %571 = vperm.xlu0 %570, %v346
      %v572 = vpop.permute.xlu0 %571
      %574 = vset.pattern.permute.xlu0 64
      %575 = vperm.xlu0 %574, %v347
      %v576 = vpop.permute.xlu0 %575
      %578 = vset.pattern.permute.xlu0 64
      %579 = vperm.xlu0 %578, %v348
      %v580 = vpop.permute.xlu0 %579
      %582 = vset.pattern.permute.xlu0 64
      %583 = vperm.xlu0 %582, %v349
      %v584 = vpop.permute.xlu0 %583
      %586 = vset.pattern.permute.xlu0 64
      %587 = vperm.xlu0 %586, %v350
      %v588 = vpop.permute.xlu0 %587
      %590 = vset.pattern.permute.xlu0 64
      %591 = vperm.xlu0 %590, %v351
      %v592 = vpop.permute.xlu0 %591
      %594 = vset.pattern.permute.xlu0 64
      %595 = vperm.xlu0 %594, %v352
      %v596 = vpop.permute.xlu0 %595
      %598 = vset.pattern.permute.xlu0 64
      %599 = vperm.xlu0 %598, %v353
      %v600 = vpop.permute.xlu0 %599
      %602 = vset.pattern.permute.xlu0 64
      %603 = vperm.xlu0 %602, %v354
      %v604 = vpop.permute.xlu0 %603
      %606 = vset.pattern.permute.xlu0 64
      %607 = vperm.xlu0 %606, %v355
      %v608 = vpop.permute.xlu0 %607
      %610 = vset.pattern.permute.xlu0 64
      %611 = vperm.xlu0 %610, %v356
      %v612 = vpop.permute.xlu0 %611
      %614 = vset.pattern.permute.xlu0 64
      %615 = vperm.xlu0 %614, %v357
      %v616 = vpop.permute.xlu0 %615
      %618 = vset.pattern.permute.xlu0 65
      %619 = vperm.xlu0 %618, %v342
      %v620 = vpop.permute.xlu0 %619
      %622 = vset.pattern.permute.xlu0 65
      %623 = vperm.xlu0 %622, %v343
      %v624 = vpop.permute.xlu0 %623
      %626 = vset.pattern.permute.xlu0 65
      %627 = vperm.xlu0 %626, %v344
      %v628 = vpop.permute.xlu0 %627
      %630 = vset.pattern.permute.xlu0 65
      %631 = vperm.xlu0 %630, %v345
      %v632 = vpop.permute.xlu0 %631
      %634 = vset.pattern.permute.xlu0 65
      %635 = vperm.xlu0 %634, %v346
      %v636 = vpop.permute.xlu0 %635
      %638 = vset.pattern.permute.xlu0 65
      %639 = vperm.xlu0 %638, %v347
      %v640 = vpop.permute.xlu0 %639
      %642 = vset.pattern.permute.xlu0 65
      %643 = vperm.xlu0 %642, %v348
      %v644 = vpop.permute.xlu0 %643
      %646 = vset.pattern.permute.xlu0 65
      %647 = vperm.xlu0 %646, %v349
      %v648 = vpop.permute.xlu0 %647
      %650 = vset.pattern.permute.xlu0 65
      %651 = vperm.xlu0 %650, %v350
      %v652 = vpop.permute.xlu0 %651
      %654 = vset.pattern.permute.xlu0 65
      %655 = vperm.xlu0 %654, %v351
      %v656 = vpop.permute.xlu0 %655
      %658 = vset.pattern.permute.xlu0 65
      %659 = vperm.xlu0 %658, %v352
      %v660 = vpop.permute.xlu0 %659
      %662 = vset.pattern.permute.xlu0 65
      %663 = vperm.xlu0 %662, %v353
      %v664 = vpop.permute.xlu0 %663
      %666 = vset.pattern.permute.xlu0 65
      %667 = vperm.xlu0 %666, %v354
      %v668 = vpop.permute.xlu0 %667
      %670 = vset.pattern.permute.xlu0 65
      %671 = vperm.xlu0 %670, %v355
      %v672 = vpop.permute.xlu0 %671
      %674 = vset.pattern.permute.xlu0 65
      %675 = vperm.xlu0 %674, %v356
      %v676 = vpop.permute.xlu0 %675
      %678 = vset.pattern.permute.xlu0 65
      %679 = vperm.xlu0 %678, %v357
      %v680 = vpop.permute.xlu0 %679
      %vm682 = vcmask 261120
      %v683 = vsel %vm682, %v556, %v620
      %v684 = vsel %vm682, %v560, %v624
      %v685 = vsel %vm682, %v564, %v628
      %v686 = vsel %vm682, %v568, %v632
      %v687 = vsel %vm682, %v572, %v636
      %v688 = vsel %vm682, %v576, %v640
      %v689 = vsel %vm682, %v580, %v644
      %v690 = vsel %vm682, %v584, %v648
      %v691 = vsel %vm682, %v588, %v652
      %v692 = vsel %vm682, %v592, %v656
      %v693 = vsel %vm682, %v596, %v660
      %v694 = vsel %vm682, %v600, %v664
      %v695 = vsel %vm682, %v604, %v668
      %v696 = vsel %vm682, %v608, %v672
      %v697 = vsel %vm682, %v612, %v676
      %v698 = vsel %vm682, %v616, %v680
      %v700 = vsel %vm375, 0.0, 0
      %702 = vmatpush.msra.mxu0 0.0
      %703 = vmatpush.msra.mxu0 0.0
      %704 = vmatpush.msra.mxu0 0.0
      %705 = vmatpush.msra.mxu0 0.0
      %706 = vmatpush.msra.mxu0 0.0
      %707 = vmatpush.msra.mxu0 0.0
      %708 = vmatpush.msra.mxu0 0.0
      %709 = vmatpush.msra.mxu0 0.0
      %710 = vmatpush.msra.mxu0 %v201
      %711 = vmatpush.msra.mxu0 %v199
      %712 = vmatpush.msra.mxu0 %v197
      %713 = vmatpush.msra.mxu0 %v195
      %714 = vmatpush.msra.mxu0 %v193
      %715 = vmatpush.msra.mxu0 %v191
      %716 = vmatpush.msra.mxu0 %v189
      %717 = vmatpush.msra.mxu0 %v187
      %718 = vmatmul.f32.gmra.mxu0 %v700
      %v719 = vpop.f32.mrf.mxu0
      %v720 = vadd.f32 0.0, %v719
      %721 = vmatmul.f32.gmra.mxu0 %v700
      %v722 = vpop.f32.mrf.mxu0
      %v723 = vadd.f32 0.0, %v722
      %724 = vdwg.mxu0
      %725 = vmatpush.msra.mxu0 0.0
      %726 = vmatpush.msra.mxu0 0.0
      %727 = vmatpush.msra.mxu0 0.0
      %728 = vmatpush.msra.mxu0 0.0
      %729 = vmatpush.msra.mxu0 0.0
      %730 = vmatpush.msra.mxu0 0.0
      %731 = vmatpush.msra.mxu0 0.0
      %732 = vmatpush.msra.mxu0 0.0
      %733 = vmatpush.msra.mxu0 %v202
      %734 = vmatpush.msra.mxu0 %v200
      %735 = vmatpush.msra.mxu0 %v198
      %736 = vmatpush.msra.mxu0 %v196
      %737 = vmatpush.msra.mxu0 %v194
      %738 = vmatpush.msra.mxu0 %v192
      %739 = vmatpush.msra.mxu0 %v190
      %740 = vmatpush.msra.mxu0 %v188
      %741 = vmatmul.f32.gmra.mxu0 %v700
      %v742 = vpop.f32.mrf.mxu0
      %v743 = vadd.f32 0.0, %v742
      %744 = vmatmul.f32.gmra.mxu0 %v700
      %v745 = vpop.f32.mrf.mxu0
      %v746 = vadd.f32 0.0, %v745
      %747 = vdwg.mxu0
      %v748 = vadd.f32 %v442, %v720
      %v749 = vadd.f32 %v507, %v743
      %v750 = vadd.f32 %v445, %v723
      %v751 = vadd.f32 %v510, %v746
      %v752 = vxor.u32 %v748, 2147483648
      %v753 = vxor.u32 %v749, 2147483648
      %v754 = vxor.u32 %v750, 2147483648
      %v755 = vxor.u32 %v751, 2147483648
      %v756 = vmul.f32 %v752, 1.442695
      %v757 = vpow.pop %v756
      %v758 = vmul.f32 %v753, 1.442695
      %v759 = vpow.pop %v758
      %v760 = vmul.f32 %v754, 1.442695
      %v761 = vpow.pop %v760
      %v762 = vmul.f32 %v755, 1.442695
      %v763 = vpow.pop %v762
      %v764 = vadd.f32 %v757, 1.0
      %v765 = vadd.f32 %v759, 1.0
      %v766 = vadd.f32 %v761, 1.0
      %v767 = vadd.f32 %v763, 1.0
      %v768 = vrcp.pop %v764
      %v769 = vmul.f32 %v764, %v768
      %v770 = vsub.f32 1.0, %v769
      %v771 = vmul.f32 %v768, %v770
      %v772 = vadd.f32 %v768, %v771
      %vm773 = vweird.f32 %v764
      %vm774 = vweird.f32 %v768
      %vm775 = vmor %vm773, %vm774
      %v776 = vsel %vm775, %v768, %v772
      %v777 = vand.u32 2147483647, %v764
      %vm778 = vcmp.eq.f32.partialorder %v777, 8.507059e+37
      %v779 = vand.u32 %v764, 2147483648
      %v780 = vor.u32 1.1754944e-38, %v779
      %v781 = vsel %vm778, %v780, %v776
      %v782 = vmul.f32 1.0, %v781
      %v783 = vrcp.pop %v765
      %v784 = vmul.f32 %v765, %v783
      %v785 = vsub.f32 1.0, %v784
      %v786 = vmul.f32 %v783, %v785
      %v787 = vadd.f32 %v783, %v786
      %vm788 = vweird.f32 %v765
      %vm789 = vweird.f32 %v783
      %vm790 = vmor %vm788, %vm789
      %v791 = vsel %vm790, %v783, %v787
      %v792 = vand.u32 2147483647, %v765
      %vm793 = vcmp.eq.f32.partialorder %v792, 8.507059e+37
      %v794 = vand.u32 %v765, 2147483648
      %v795 = vor.u32 1.1754944e-38, %v794
      %v796 = vsel %vm793, %v795, %v791
      %v797 = vmul.f32 1.0, %v796
      %v798 = vrcp.pop %v766
      %v799 = vmul.f32 %v766, %v798
      %v800 = vsub.f32 1.0, %v799
      %v801 = vmul.f32 %v798, %v800
      %v802 = vadd.f32 %v798, %v801
      %vm803 = vweird.f32 %v766
      %vm804 = vweird.f32 %v798
      %vm805 = vmor %vm803, %vm804
      %v806 = vsel %vm805, %v798, %v802
      %v807 = vand.u32 2147483647, %v766
      %vm808 = vcmp.eq.f32.partialorder %v807, 8.507059e+37
      %v809 = vand.u32 %v766, 2147483648
      %v810 = vor.u32 1.1754944e-38, %v809
      %v811 = vsel %vm808, %v810, %v806
      %v812 = vmul.f32 1.0, %v811
      %v813 = vrcp.pop %v767
      %v814 = vmul.f32 %v767, %v813
      %v815 = vsub.f32 1.0, %v814
      %v816 = vmul.f32 %v813, %v815
      %v817 = vadd.f32 %v813, %v816
      %vm818 = vweird.f32 %v767
      %vm819 = vweird.f32 %v813
      %vm820 = vmor %vm818, %vm819
      %v821 = vsel %vm820, %v813, %v817
      %v822 = vand.u32 2147483647, %v767
      %vm823 = vcmp.eq.f32.partialorder %v822, 8.507059e+37
      %v824 = vand.u32 %v767, 2147483648
      %v825 = vor.u32 1.1754944e-38, %v824
      %v826 = vsel %vm823, %v825, %v821
      %v827 = vmul.f32 1.0, %v826
      %v828 = vtanh.pop %v749
      %v829 = vtanh.pop %v751
      %v830 = vmul.f32 %v782, 0.0
      %v831 = vmul.f32 %v812, 0.0
      %834 = vrot.lane.b32.xlu0 %v828, 64
      %v835 = vpop.permute.xlu0 %834
      %836 = vrot.lane.b32.xlu0 %v829, 64
      %v837 = vpop.permute.xlu0 %836
      %v840 = vmul.f32 %v782, %v835
      %v841 = vmul.f32 %v812, %v837
      %844 = vrot.lane.b32.xlu0 %v840, 64
      %v845 = vpop.permute.xlu0 %844
      %846 = vrot.lane.b32.xlu0 %v841, 64
      %v847 = vpop.permute.xlu0 %846
      %v850 = vadd.f32 %v830, %v845
      %v851 = vadd.f32 %v831, %v847
      %v852 = vtanh.pop %v850
      %v853 = vtanh.pop %v851
      %856 = vrot.lane.b32.xlu0 %v852, 64
      %v857 = vpop.permute.xlu0 %856
      %858 = vrot.lane.b32.xlu0 %v853, 64
      %v859 = vpop.permute.xlu0 %858
      %v862 = vmul.f32 %v797, %v857
      %v863 = vmul.f32 %v827, %v859
      %vm864 = vcmp.gt.f32.partialorder %v683, 0.0
      %vm865 = vcmp.gt.f32.partialorder %v684, 0.0
      %868 = vrot.lane.b32.xlu0 %v850, 64
      %v869 = vpop.permute.xlu0 %868
      %870 = vrot.lane.b32.xlu0 %v851, 64
      %v871 = vpop.permute.xlu0 %870
      %v874 = vsel %vm864, %v869, 0.0
      %v875 = vsel %vm865, %v871, 0.0
      %v876 = vsel %vm864, %v862, 0.0
      %v877 = vsel %vm865, %v863, 0.0
      %v879 = vsel %vm375, %v876, 0
      %v882 = vsel %vm375, %v877, 0
      %884 = vmatpush.msra.mxu0 0.0
      %885 = vmatpush.msra.mxu0 0.0
      %886 = vmatpush.msra.mxu0 0.0
      %887 = vmatpush.msra.mxu0 0.0
      %888 = vmatpush.msra.mxu0 0.0
      %889 = vmatpush.msra.mxu0 0.0
      %890 = vmatpush.msra.mxu0 0.0
      %891 = vmatpush.msra.mxu0 0.0
      %892 = vmatpush.msra.mxu0 %v201
      %893 = vmatpush.msra.mxu0 %v199
      %894 = vmatpush.msra.mxu0 %v197
      %895 = vmatpush.msra.mxu0 %v195
      %896 = vmatpush.msra.mxu0 %v193
      %897 = vmatpush.msra.mxu0 %v191
      %898 = vmatpush.msra.mxu0 %v189
      %899 = vmatpush.msra.mxu0 %v187
      %900 = vmatmul.f32.gmra.mxu0 %v879
      %v901 = vpop.f32.mrf.mxu0
      %v902 = vadd.f32 0.0, %v901
      %903 = vmatmul.f32.gmra.mxu0 %v882
      %v904 = vpop.f32.mrf.mxu0
      %v905 = vadd.f32 0.0, %v904
      %906 = vdwg.mxu0
      %907 = vmatpush.msra.mxu0 0.0
      %908 = vmatpush.msra.mxu0 0.0
      %909 = vmatpush.msra.mxu0 0.0
      %910 = vmatpush.msra.mxu0 0.0
      %911 = vmatpush.msra.mxu0 0.0
      %912 = vmatpush.msra.mxu0 0.0
      %913 = vmatpush.msra.mxu0 0.0
      %914 = vmatpush.msra.mxu0 0.0
      %915 = vmatpush.msra.mxu0 %v202
      %916 = vmatpush.msra.mxu0 %v200
      %917 = vmatpush.msra.mxu0 %v198
      %918 = vmatpush.msra.mxu0 %v196
      %919 = vmatpush.msra.mxu0 %v194
      %920 = vmatpush.msra.mxu0 %v192
      %921 = vmatpush.msra.mxu0 %v190
      %922 = vmatpush.msra.mxu0 %v188
      %923 = vmatmul.f32.gmra.mxu0 %v879
      %v924 = vpop.f32.mrf.mxu0
      %v925 = vadd.f32 0.0, %v924
      %926 = vmatmul.f32.gmra.mxu0 %v882
      %v927 = vpop.f32.mrf.mxu0
      %v928 = vadd.f32 0.0, %v927
      %929 = vdwg.mxu0
      %v930 = vadd.f32 %v448, %v902
      %v931 = vadd.f32 %v513, %v925
      %v932 = vadd.f32 %v451, %v905
      %v933 = vadd.f32 %v516, %v928
      %v934 = vxor.u32 %v930, 2147483648
      %v935 = vxor.u32 %v931, 2147483648
      %v936 = vxor.u32 %v932, 2147483648
      %v937 = vxor.u32 %v933, 2147483648
      %v938 = vmul.f32 %v934, 1.442695
      %v939 = vpow.pop %v938
      %v940 = vmul.f32 %v935, 1.442695
      %v941 = vpow.pop %v940
      %v942 = vmul.f32 %v936, 1.442695
      %v943 = vpow.pop %v942
      %v944 = vmul.f32 %v937, 1.442695
      %v945 = vpow.pop %v944
      %v946 = vadd.f32 %v939, 1.0
      %v947 = vadd.f32 %v941, 1.0
      %v948 = vadd.f32 %v943, 1.0
      %v949 = vadd.f32 %v945, 1.0
      %v950 = vrcp.pop %v946
      %v951 = vmul.f32 %v946, %v950
      %v952 = vsub.f32 1.0, %v951
      %v953 = vmul.f32 %v950, %v952
      %v954 = vadd.f32 %v950, %v953
      %vm955 = vweird.f32 %v946
      %vm956 = vweird.f32 %v950
      %vm957 = vmor %vm955, %vm956
      %v958 = vsel %vm957, %v950, %v954
      %v959 = vand.u32 2147483647, %v946
      %vm960 = vcmp.eq.f32.partialorder %v959, 8.507059e+37
      %v961 = vand.u32 %v946, 2147483648
      %v962 = vor.u32 1.1754944e-38, %v961
      %v963 = vsel %vm960, %v962, %v958
      %v964 = vmul.f32 1.0, %v963
      %v965 = vrcp.pop %v947
      %v966 = vmul.f32 %v947, %v965
      %v967 = vsub.f32 1.0, %v966
      %v968 = vmul.f32 %v965, %v967
      %v969 = vadd.f32 %v965, %v968
      %vm970 = vweird.f32 %v947
      %vm971 = vweird.f32 %v965
      %vm972 = vmor %vm970, %vm971
      %v973 = vsel %vm972, %v965, %v969
      %v974 = vand.u32 2147483647, %v947
      %vm975 = vcmp.eq.f32.partialorder %v974, 8.507059e+37
      %v976 = vand.u32 %v947, 2147483648
      %v977 = vor.u32 1.1754944e-38, %v976
      %v978 = vsel %vm975, %v977, %v973
      %v979 = vmul.f32 1.0, %v978
      %v980 = vrcp.pop %v948
      %v981 = vmul.f32 %v948, %v980
      %v982 = vsub.f32 1.0, %v981
      %v983 = vmul.f32 %v980, %v982
      %v984 = vadd.f32 %v980, %v983
      %vm985 = vweird.f32 %v948
      %vm986 = vweird.f32 %v980
      %vm987 = vmor %vm985, %vm986
      %v988 = vsel %vm987, %v980, %v984
      %v989 = vand.u32 2147483647, %v948
      %vm990 = vcmp.eq.f32.partialorder %v989, 8.507059e+37
      %v991 = vand.u32 %v948, 2147483648
      %v992 = vor.u32 1.1754944e-38, %v991
      %v993 = vsel %vm990, %v992, %v988
      %v994 = vmul.f32 1.0, %v993
      %v995 = vrcp.pop %v949
      %v996 = vmul.f32 %v949, %v995
      %v997 = vsub.f32 1.0, %v996
      %v998 = vmul.f32 %v995, %v997
      %v999 = vadd.f32 %v995, %v998
      %vm1000 = vweird.f32 %v949
      %vm1001 = vweird.f32 %v995
      %vm1002 = vmor %vm1000, %vm1001
      %v1003 = vsel %vm1002, %v995, %v999
      %v1004 = vand.u32 2147483647, %v949
      %vm1005 = vcmp.eq.f32.partialorder %v1004, 8.507059e+37
      %v1006 = vand.u32 %v949, 2147483648
      %v1007 = vor.u32 1.1754944e-38, %v1006
      %v1008 = vsel %vm1005, %v1007, %v1003
      %v1009 = vmul.f32 1.0, %v1008
      %v1010 = vtanh.pop %v931
      %v1011 = vtanh.pop %v933
      %1014 = vrot.lane.b32.xlu0 %v874, 64
      %v1015 = vpop.permute.xlu0 %1014
      %1016 = vrot.lane.b32.xlu0 %v875, 64
      %v1017 = vpop.permute.xlu0 %1016
      %v1020 = vmul.f32 %v964, %v1015
      %v1021 = vmul.f32 %v994, %v1017
      %1024 = vrot.lane.b32.xlu0 %v1010, 64
      %v1025 = vpop.permute.xlu0 %1024
      %1026 = vrot.lane.b32.xlu0 %v1011, 64
      %v1027 = vpop.permute.xlu0 %1026
      %v1030 = vmul.f32 %v964, %v1025
      %v1031 = vmul.f32 %v994, %v1027
      %1034 = vrot.lane.b32.xlu0 %v1030, 64
      %v1035 = vpop.permute.xlu0 %1034
      %1036 = vrot.lane.b32.xlu0 %v1031, 64
      %v1037 = vpop.permute.xlu0 %1036
      %v1040 = vadd.f32 %v1020, %v1035
      %v1041 = vadd.f32 %v1021, %v1037
      %v1042 = vtanh.pop %v1040
      %v1043 = vtanh.pop %v1041
      %1046 = vrot.lane.b32.xlu0 %v1042, 64
      %v1047 = vpop.permute.xlu0 %1046
      %1048 = vrot.lane.b32.xlu0 %v1043, 64
      %v1049 = vpop.permute.xlu0 %1048
      %v1052 = vmul.f32 %v979, %v1047
      %v1053 = vmul.f32 %v1009, %v1049
      %vm1054 = vcmp.gt.f32.partialorder %v685, 0.0
      %vm1055 = vcmp.gt.f32.partialorder %v686, 0.0
      %1058 = vrot.lane.b32.xlu0 %v1040, 64
      %v1059 = vpop.permute.xlu0 %1058
      %1060 = vrot.lane.b32.xlu0 %v1041, 64
      %v1061 = vpop.permute.xlu0 %1060
      %v1064 = vsel %vm1054, %v1059, %v874
      %v1065 = vsel %vm1055, %v1061, %v875
      %v1066 = vsel %vm1054, %v1052, %v876
      %v1067 = vsel %vm1055, %v1053, %v877
      %v1069 = vsel %vm375, %v1066, 0
      %v1072 = vsel %vm375, %v1067, 0
      %1074 = vmatpush.msra.mxu0 0.0
      %1075 = vmatpush.msra.mxu0 0.0
      %1076 = vmatpush.msra.mxu0 0.0
      %1077 = vmatpush.msra.mxu0 0.0
      %1078 = vmatpush.msra.mxu0 0.0
      %1079 = vmatpush.msra.mxu0 0.0
      %1080 = vmatpush.msra.mxu0 0.0
      %1081 = vmatpush.msra.mxu0 0.0
      %1082 = vmatpush.msra.mxu0 %v201
      %1083 = vmatpush.msra.mxu0 %v199
      %1084 = vmatpush.msra.mxu0 %v197
      %1085 = vmatpush.msra.mxu0 %v195
      %1086 = vmatpush.msra.mxu0 %v193
      %1087 = vmatpush.msra.mxu0 %v191
      %1088 = vmatpush.msra.mxu0 %v189
      %1089 = vmatpush.msra.mxu0 %v187
      %1090 = vmatmul.f32.gmra.mxu0 %v1069
      %v1091 = vpop.f32.mrf.mxu0
      %v1092 = vadd.f32 0.0, %v1091
      %1093 = vmatmul.f32.gmra.mxu0 %v1072
      %v1094 = vpop.f32.mrf.mxu0
      %v1095 = vadd.f32 0.0, %v1094
      %1096 = vdwg.mxu0
      %1097 = vmatpush.msra.mxu0 0.0
      %1098 = vmatpush.msra.mxu0 0.0
      %1099 = vmatpush.msra.mxu0 0.0
      %1100 = vmatpush.msra.mxu0 0.0
      %1101 = vmatpush.msra.mxu0 0.0
      %1102 = vmatpush.msra.mxu0 0.0
      %1103 = vmatpush.msra.mxu0 0.0
      %1104 = vmatpush.msra.mxu0 0.0
      %1105 = vmatpush.msra.mxu0 %v202
      %1106 = vmatpush.msra.mxu0 %v200
      %1107 = vmatpush.msra.mxu0 %v198
      %1108 = vmatpush.msra.mxu0 %v196
      %1109 = vmatpush.msra.mxu0 %v194
      %1110 = vmatpush.msra.mxu0 %v192
      %1111 = vmatpush.msra.mxu0 %v190
      %1112 = vmatpush.msra.mxu0 %v188
      %1113 = vmatmul.f32.gmra.mxu0 %v1069
      %v1114 = vpop.f32.mrf.mxu0
      %v1115 = vadd.f32 0.0, %v1114
      %1116 = vmatmul.f32.gmra.mxu0 %v1072
      %v1117 = vpop.f32.mrf.mxu0
      %v1118 = vadd.f32 0.0, %v1117
      %1119 = vdwg.mxu0
      %v1120 = vadd.f32 %v454, %v1092
      %v1121 = vadd.f32 %v519, %v1115
      %v1122 = vadd.f32 %v457, %v1095
      %v1123 = vadd.f32 %v522, %v1118
      %v1124 = vxor.u32 %v1120, 2147483648
      %v1125 = vxor.u32 %v1121, 2147483648
      %v1126 = vxor.u32 %v1122, 2147483648
      %v1127 = vxor.u32 %v1123, 2147483648
      %v1128 = vmul.f32 %v1124, 1.442695
      %v1129 = vpow.pop %v1128
      %v1130 = vmul.f32 %v1125, 1.442695
      %v1131 = vpow.pop %v1130
      %v1132 = vmul.f32 %v1126, 1.442695
      %v1133 = vpow.pop %v1132
      %v1134 = vmul.f32 %v1127, 1.442695
      %v1135 = vpow.pop %v1134
      %v1136 = vadd.f32 %v1129, 1.0
      %v1137 = vadd.f32 %v1131, 1.0
      %v1138 = vadd.f32 %v1133, 1.0
      %v1139 = vadd.f32 %v1135, 1.0
      %v1140 = vrcp.pop %v1136
      %v1141 = vmul.f32 %v1136, %v1140
      %v1142 = vsub.f32 1.0, %v1141
      %v1143 = vmul.f32 %v1140, %v1142
      %v1144 = vadd.f32 %v1140, %v1143
      %vm1145 = vweird.f32 %v1136
      %vm1146 = vweird.f32 %v1140
      %vm1147 = vmor %vm1145, %vm1146
      %v1148 = vsel %vm1147, %v1140, %v1144
      %v1149 = vand.u32 2147483647, %v1136
      %vm1150 = vcmp.eq.f32.partialorder %v1149, 8.507059e+37
      %v1151 = vand.u32 %v1136, 2147483648
      %v1152 = vor.u32 1.1754944e-38, %v1151
      %v1153 = vsel %vm1150, %v1152, %v1148
      %v1154 = vmul.f32 1.0, %v1153
      %v1155 = vrcp.pop %v1137
      %v1156 = vmul.f32 %v1137, %v1155
      %v1157 = vsub.f32 1.0, %v1156
      %v1158 = vmul.f32 %v1155, %v1157
      %v1159 = vadd.f32 %v1155, %v1158
      %vm1160 = vweird.f32 %v1137
      %vm1161 = vweird.f32 %v1155
      %vm1162 = vmor %vm1160, %vm1161
      %v1163 = vsel %vm1162, %v1155, %v1159
      %v1164 = vand.u32 2147483647, %v1137
      %vm1165 = vcmp.eq.f32.partialorder %v1164, 8.507059e+37
      %v1166 = vand.u32 %v1137, 2147483648
      %v1167 = vor.u32 1.1754944e-38, %v1166
      %v1168 = vsel %vm1165, %v1167, %v1163
      %v1169 = vmul.f32 1.0, %v1168
      %v1170 = vrcp.pop %v1138
      %v1171 = vmul.f32 %v1138, %v1170
      %v1172 = vsub.f32 1.0, %v1171
      %v1173 = vmul.f32 %v1170, %v1172
      %v1174 = vadd.f32 %v1170, %v1173
      %vm1175 = vweird.f32 %v1138
      %vm1176 = vweird.f32 %v1170
      %vm1177 = vmor %vm1175, %vm1176
      %v1178 = vsel %vm1177, %v1170, %v1174
      %v1179 = vand.u32 2147483647, %v1138
      %vm1180 = vcmp.eq.f32.partialorder %v1179, 8.507059e+37
      %v1181 = vand.u32 %v1138, 2147483648
      %v1182 = vor.u32 1.1754944e-38, %v1181
      %v1183 = vsel %vm1180, %v1182, %v1178
      %v1184 = vmul.f32 1.0, %v1183
      %v1185 = vrcp.pop %v1139
      %v1186 = vmul.f32 %v1139, %v1185
      %v1187 = vsub.f32 1.0, %v1186
      %v1188 = vmul.f32 %v1185, %v1187
      %v1189 = vadd.f32 %v1185, %v1188
      %vm1190 = vweird.f32 %v1139
      %vm1191 = vweird.f32 %v1185
      %vm1192 = vmor %vm1190, %vm1191
      %v1193 = vsel %vm1192, %v1185, %v1189
      %v1194 = vand.u32 2147483647, %v1139
      %vm1195 = vcmp.eq.f32.partialorder %v1194, 8.507059e+37
      %v1196 = vand.u32 %v1139, 2147483648
      %v1197 = vor.u32 1.1754944e-38, %v1196
      %v1198 = vsel %vm1195, %v1197, %v1193
      %v1199 = vmul.f32 1.0, %v1198
      %v1200 = vtanh.pop %v1121
      %v1201 = vtanh.pop %v1123
      %1204 = vrot.lane.b32.xlu0 %v1064, 64
      %v1205 = vpop.permute.xlu0 %1204
      %1206 = vrot.lane.b32.xlu0 %v1065, 64
      %v1207 = vpop.permute.xlu0 %1206
      %v1210 = vmul.f32 %v1154, %v1205
      %v1211 = vmul.f32 %v1184, %v1207
      %1214 = vrot.lane.b32.xlu0 %v1200, 64
      %v1215 = vpop.permute.xlu0 %1214
      %1216 = vrot.lane.b32.xlu0 %v1201, 64
      %v1217 = vpop.permute.xlu0 %1216
      %v1220 = vmul.f32 %v1154, %v1215
      %v1221 = vmul.f32 %v1184, %v1217
      %1224 = vrot.lane.b32.xlu0 %v1220, 64
      %v1225 = vpop.permute.xlu0 %1224
      %1226 = vrot.lane.b32.xlu0 %v1221, 64
      %v1227 = vpop.permute.xlu0 %1226
      %v1230 = vadd.f32 %v1210, %v1225
      %v1231 = vadd.f32 %v1211, %v1227
      %v1232 = vtanh.pop %v1230
      %v1233 = vtanh.pop %v1231
      %1236 = vrot.lane.b32.xlu0 %v1232, 64
      %v1237 = vpop.permute.xlu0 %1236
      %1238 = vrot.lane.b32.xlu0 %v1233, 64
      %v1239 = vpop.permute.xlu0 %1238
      %v1242 = vmul.f32 %v1169, %v1237
      %v1243 = vmul.f32 %v1199, %v1239
      %vm1244 = vcmp.gt.f32.partialorder %v687, 0.0
      %vm1245 = vcmp.gt.f32.partialorder %v688, 0.0
      %1248 = vrot.lane.b32.xlu0 %v1230, 64
      %v1249 = vpop.permute.xlu0 %1248
      %1250 = vrot.lane.b32.xlu0 %v1231, 64
      %v1251 = vpop.permute.xlu0 %1250
      %v1254 = vsel %vm1244, %v1249, %v1064
      %v1255 = vsel %vm1245, %v1251, %v1065
      %v1256 = vsel %vm1244, %v1242, %v1066
      %v1257 = vsel %vm1245, %v1243, %v1067
      %v1259 = vsel %vm375, %v1256, 0
      %v1262 = vsel %vm375, %v1257, 0
      %1264 = vmatpush.msra.mxu0 0.0
      %1265 = vmatpush.msra.mxu0 0.0
      %1266 = vmatpush.msra.mxu0 0.0
      %1267 = vmatpush.msra.mxu0 0.0
      %1268 = vmatpush.msra.mxu0 0.0
      %1269 = vmatpush.msra.mxu0 0.0
      %1270 = vmatpush.msra.mxu0 0.0
      %1271 = vmatpush.msra.mxu0 0.0
      %1272 = vmatpush.msra.mxu0 %v201
      %1273 = vmatpush.msra.mxu0 %v199
      %1274 = vmatpush.msra.mxu0 %v197
      %1275 = vmatpush.msra.mxu0 %v195
      %1276 = vmatpush.msra.mxu0 %v193
      %1277 = vmatpush.msra.mxu0 %v191
      %1278 = vmatpush.msra.mxu0 %v189
      %1279 = vmatpush.msra.mxu0 %v187
      %1280 = vmatmul.f32.gmra.mxu0 %v1259
      %v1281 = vpop.f32.mrf.mxu0
      %v1282 = vadd.f32 0.0, %v1281
      %1283 = vmatmul.f32.gmra.mxu0 %v1262
      %v1284 = vpop.f32.mrf.mxu0
      %v1285 = vadd.f32 0.0, %v1284
      %1286 = vdwg.mxu0
      %1287 = vmatpush.msra.mxu0 0.0
      %1288 = vmatpush.msra.mxu0 0.0
      %1289 = vmatpush.msra.mxu0 0.0
      %1290 = vmatpush.msra.mxu0 0.0
      %1291 = vmatpush.msra.mxu0 0.0
      %1292 = vmatpush.msra.mxu0 0.0
      %1293 = vmatpush.msra.mxu0 0.0
      %1294 = vmatpush.msra.mxu0 0.0
      %1295 = vmatpush.msra.mxu0 %v202
      %1296 = vmatpush.msra.mxu0 %v200
      %1297 = vmatpush.msra.mxu0 %v198
      %1298 = vmatpush.msra.mxu0 %v196
      %1299 = vmatpush.msra.mxu0 %v194
      %1300 = vmatpush.msra.mxu0 %v192
      %1301 = vmatpush.msra.mxu0 %v190
      %1302 = vmatpush.msra.mxu0 %v188
      %1303 = vmatmul.f32.gmra.mxu0 %v1259
      %v1304 = vpop.f32.mrf.mxu0
      %v1305 = vadd.f32 0.0, %v1304
      %1306 = vmatmul.f32.gmra.mxu0 %v1262
      %v1307 = vpop.f32.mrf.mxu0
      %v1308 = vadd.f32 0.0, %v1307
      %1309 = vdwg.mxu0
      %v1310 = vadd.f32 %v460, %v1282
      %v1311 = vadd.f32 %v525, %v1305
      %v1312 = vadd.f32 %v463, %v1285
      %v1313 = vadd.f32 %v528, %v1308
      %v1314 = vxor.u32 %v1310, 2147483648
      %v1315 = vxor.u32 %v1311, 2147483648
      %v1316 = vxor.u32 %v1312, 2147483648
      %v1317 = vxor.u32 %v1313, 2147483648
      %v1318 = vmul.f32 %v1314, 1.442695
      %v1319 = vpow.pop %v1318
      %v1320 = vmul.f32 %v1315, 1.442695
      %v1321 = vpow.pop %v1320
      %v1322 = vmul.f32 %v1316, 1.442695
      %v1323 = vpow.pop %v1322
      %v1324 = vmul.f32 %v1317, 1.442695
      %v1325 = vpow.pop %v1324
      %v1326 = vadd.f32 %v1319, 1.0
      %v1327 = vadd.f32 %v1321, 1.0
      %v1328 = vadd.f32 %v1323, 1.0
      %v1329 = vadd.f32 %v1325, 1.0
      %v1330 = vrcp.pop %v1326
      %v1331 = vmul.f32 %v1326, %v1330
      %v1332 = vsub.f32 1.0, %v1331
      %v1333 = vmul.f32 %v1330, %v1332
      %v1334 = vadd.f32 %v1330, %v1333
      %vm1335 = vweird.f32 %v1326
      %vm1336 = vweird.f32 %v1330
      %vm1337 = vmor %vm1335, %vm1336
      %v1338 = vsel %vm1337, %v1330, %v1334
      %v1339 = vand.u32 2147483647, %v1326
      %vm1340 = vcmp.eq.f32.partialorder %v1339, 8.507059e+37
      %v1341 = vand.u32 %v1326, 2147483648
      %v1342 = vor.u32 1.1754944e-38, %v1341
      %v1343 = vsel %vm1340, %v1342, %v1338
      %v1344 = vmul.f32 1.0, %v1343
      %v1345 = vrcp.pop %v1327
      %v1346 = vmul.f32 %v1327, %v1345
      %v1347 = vsub.f32 1.0, %v1346
      %v1348 = vmul.f32 %v1345, %v1347
      %v1349 = vadd.f32 %v1345, %v1348
      %vm1350 = vweird.f32 %v1327
      %vm1351 = vweird.f32 %v1345
      %vm1352 = vmor %vm1350, %vm1351
      %v1353 = vsel %vm1352, %v1345, %v1349
      %v1354 = vand.u32 2147483647, %v1327
      %vm1355 = vcmp.eq.f32.partialorder %v1354, 8.507059e+37
      %v1356 = vand.u32 %v1327, 2147483648
      %v1357 = vor.u32 1.1754944e-38, %v1356
      %v1358 = vsel %vm1355, %v1357, %v1353
      %v1359 = vmul.f32 1.0, %v1358
      %v1360 = vrcp.pop %v1328
      %v1361 = vmul.f32 %v1328, %v1360
      %v1362 = vsub.f32 1.0, %v1361
      %v1363 = vmul.f32 %v1360, %v1362
      %v1364 = vadd.f32 %v1360, %v1363
      %vm1365 = vweird.f32 %v1328
      %vm1366 = vweird.f32 %v1360
      %vm1367 = vmor %vm1365, %vm1366
      %v1368 = vsel %vm1367, %v1360, %v1364
      %v1369 = vand.u32 2147483647, %v1328
      %vm1370 = vcmp.eq.f32.partialorder %v1369, 8.507059e+37
      %v1371 = vand.u32 %v1328, 2147483648
      %v1372 = vor.u32 1.1754944e-38, %v1371
      %v1373 = vsel %vm1370, %v1372, %v1368
      %v1374 = vmul.f32 1.0, %v1373
      %v1375 = vrcp.pop %v1329
      %v1376 = vmul.f32 %v1329, %v1375
      %v1377 = vsub.f32 1.0, %v1376
      %v1378 = vmul.f32 %v1375, %v1377
      %v1379 = vadd.f32 %v1375, %v1378
      %vm1380 = vweird.f32 %v1329
      %vm1381 = vweird.f32 %v1375
      %vm1382 = vmor %vm1380, %vm1381
      %v1383 = vsel %vm1382, %v1375, %v1379
      %v1384 = vand.u32 2147483647, %v1329
      %vm1385 = vcmp.eq.f32.partialorder %v1384, 8.507059e+37
      %v1386 = vand.u32 %v1329, 2147483648
      %v1387 = vor.u32 1.1754944e-38, %v1386
      %v1388 = vsel %vm1385, %v1387, %v1383
      %v1389 = vmul.f32 1.0, %v1388
      %v1390 = vtanh.pop %v1311
      %v1391 = vtanh.pop %v1313
      %1394 = vrot.lane.b32.xlu0 %v1254, 64
      %v1395 = vpop.permute.xlu0 %1394
      %1396 = vrot.lane.b32.xlu0 %v1255, 64
      %v1397 = vpop.permute.xlu0 %1396
      %v1400 = vmul.f32 %v1344, %v1395
      %v1401 = vmul.f32 %v1374, %v1397
      %1404 = vrot.lane.b32.xlu0 %v1390, 64
      %v1405 = vpop.permute.xlu0 %1404
      %1406 = vrot.lane.b32.xlu0 %v1391, 64
      %v1407 = vpop.permute.xlu0 %1406
      %v1410 = vmul.f32 %v1344, %v1405
      %v1411 = vmul.f32 %v1374, %v1407
      %1414 = vrot.lane.b32.xlu0 %v1410, 64
      %v1415 = vpop.permute.xlu0 %1414
      %1416 = vrot.lane.b32.xlu0 %v1411, 64
      %v1417 = vpop.permute.xlu0 %1416
      %v1420 = vadd.f32 %v1400, %v1415
      %v1421 = vadd.f32 %v1401, %v1417
      %v1422 = vtanh.pop %v1420
      %v1423 = vtanh.pop %v1421
      %1426 = vrot.lane.b32.xlu0 %v1422, 64
      %v1427 = vpop.permute.xlu0 %1426
      %1428 = vrot.lane.b32.xlu0 %v1423, 64
      %v1429 = vpop.permute.xlu0 %1428
      %v1432 = vmul.f32 %v1359, %v1427
      %v1433 = vmul.f32 %v1389, %v1429
      %vm1434 = vcmp.gt.f32.partialorder %v689, 0.0
      %vm1435 = vcmp.gt.f32.partialorder %v690, 0.0
      %1438 = vrot.lane.b32.xlu0 %v1420, 64
      %v1439 = vpop.permute.xlu0 %1438
      %1440 = vrot.lane.b32.xlu0 %v1421, 64
      %v1441 = vpop.permute.xlu0 %1440
      %v1444 = vsel %vm1434, %v1439, %v1254
      %v1445 = vsel %vm1435, %v1441, %v1255
      %v1446 = vsel %vm1434, %v1432, %v1256
      %v1447 = vsel %vm1435, %v1433, %v1257
      %v1449 = vsel %vm375, %v1446, 0
      %v1452 = vsel %vm375, %v1447, 0
      %1454 = vmatpush.msra.mxu0 0.0
      %1455 = vmatpush.msra.mxu0 0.0
      %1456 = vmatpush.msra.mxu0 0.0
      %1457 = vmatpush.msra.mxu0 0.0
      %1458 = vmatpush.msra.mxu0 0.0
      %1459 = vmatpush.msra.mxu0 0.0
      %1460 = vmatpush.msra.mxu0 0.0
      %1461 = vmatpush.msra.mxu0 0.0
      %1462 = vmatpush.msra.mxu0 %v201
      %1463 = vmatpush.msra.mxu0 %v199
      %1464 = vmatpush.msra.mxu0 %v197
      %1465 = vmatpush.msra.mxu0 %v195
      %1466 = vmatpush.msra.mxu0 %v193
      %1467 = vmatpush.msra.mxu0 %v191
      %1468 = vmatpush.msra.mxu0 %v189
      %1469 = vmatpush.msra.mxu0 %v187
      %1470 = vmatmul.f32.gmra.mxu0 %v1449
      %v1471 = vpop.f32.mrf.mxu0
      %v1472 = vadd.f32 0.0, %v1471
      %1473 = vmatmul.f32.gmra.mxu0 %v1452
      %v1474 = vpop.f32.mrf.mxu0
      %v1475 = vadd.f32 0.0, %v1474
      %1476 = vdwg.mxu0
      %1477 = vmatpush.msra.mxu0 0.0
      %1478 = vmatpush.msra.mxu0 0.0
      %1479 = vmatpush.msra.mxu0 0.0
      %1480 = vmatpush.msra.mxu0 0.0
      %1481 = vmatpush.msra.mxu0 0.0
      %1482 = vmatpush.msra.mxu0 0.0
      %1483 = vmatpush.msra.mxu0 0.0
      %1484 = vmatpush.msra.mxu0 0.0
      %1485 = vmatpush.msra.mxu0 %v202
      %1486 = vmatpush.msra.mxu0 %v200
      %1487 = vmatpush.msra.mxu0 %v198
      %1488 = vmatpush.msra.mxu0 %v196
      %1489 = vmatpush.msra.mxu0 %v194
      %1490 = vmatpush.msra.mxu0 %v192
      %1491 = vmatpush.msra.mxu0 %v190
      %1492 = vmatpush.msra.mxu0 %v188
      %1493 = vmatmul.f32.gmra.mxu0 %v1449
      %v1494 = vpop.f32.mrf.mxu0
      %v1495 = vadd.f32 0.0, %v1494
      %1496 = vmatmul.f32.gmra.mxu0 %v1452
      %v1497 = vpop.f32.mrf.mxu0
      %v1498 = vadd.f32 0.0, %v1497
      %1499 = vdwg.mxu0
      %v1500 = vadd.f32 %v466, %v1472
      %v1501 = vadd.f32 %v531, %v1495
      %v1502 = vadd.f32 %v469, %v1475
      %v1503 = vadd.f32 %v534, %v1498
      %v1504 = vxor.u32 %v1500, 2147483648
      %v1505 = vxor.u32 %v1501, 2147483648
      %v1506 = vxor.u32 %v1502, 2147483648
      %v1507 = vxor.u32 %v1503, 2147483648
      %v1508 = vmul.f32 %v1504, 1.442695
      %v1509 = vpow.pop %v1508
      %v1510 = vmul.f32 %v1505, 1.442695
      %v1511 = vpow.pop %v1510
      %v1512 = vmul.f32 %v1506, 1.442695
      %v1513 = vpow.pop %v1512
      %v1514 = vmul.f32 %v1507, 1.442695
      %v1515 = vpow.pop %v1514
      %v1516 = vadd.f32 %v1509, 1.0
      %v1517 = vadd.f32 %v1511, 1.0
      %v1518 = vadd.f32 %v1513, 1.0
      %v1519 = vadd.f32 %v1515, 1.0
      %v1520 = vrcp.pop %v1516
      %v1521 = vmul.f32 %v1516, %v1520
      %v1522 = vsub.f32 1.0, %v1521
      %v1523 = vmul.f32 %v1520, %v1522
      %v1524 = vadd.f32 %v1520, %v1523
      %vm1525 = vweird.f32 %v1516
      %vm1526 = vweird.f32 %v1520
      %vm1527 = vmor %vm1525, %vm1526
      %v1528 = vsel %vm1527, %v1520, %v1524
      %v1529 = vand.u32 2147483647, %v1516
      %vm1530 = vcmp.eq.f32.partialorder %v1529, 8.507059e+37
      %v1531 = vand.u32 %v1516, 2147483648
      %v1532 = vor.u32 1.1754944e-38, %v1531
      %v1533 = vsel %vm1530, %v1532, %v1528
      %v1534 = vmul.f32 1.0, %v1533
      %v1535 = vrcp.pop %v1517
      %v1536 = vmul.f32 %v1517, %v1535
      %v1537 = vsub.f32 1.0, %v1536
      %v1538 = vmul.f32 %v1535, %v1537
      %v1539 = vadd.f32 %v1535, %v1538
      %vm1540 = vweird.f32 %v1517
      %vm1541 = vweird.f32 %v1535
      %vm1542 = vmor %vm1540, %vm1541
      %v1543 = vsel %vm1542, %v1535, %v1539
      %v1544 = vand.u32 2147483647, %v1517
      %vm1545 = vcmp.eq.f32.partialorder %v1544, 8.507059e+37
      %v1546 = vand.u32 %v1517, 2147483648
      %v1547 = vor.u32 1.1754944e-38, %v1546
      %v1548 = vsel %vm1545, %v1547, %v1543
      %v1549 = vmul.f32 1.0, %v1548
      %v1550 = vrcp.pop %v1518
      %v1551 = vmul.f32 %v1518, %v1550
      %v1552 = vsub.f32 1.0, %v1551
      %v1553 = vmul.f32 %v1550, %v1552
      %v1554 = vadd.f32 %v1550, %v1553
      %vm1555 = vweird.f32 %v1518
      %vm1556 = vweird.f32 %v1550
      %vm1557 = vmor %vm1555, %vm1556
      %v1558 = vsel %vm1557, %v1550, %v1554
      %v1559 = vand.u32 2147483647, %v1518
      %vm1560 = vcmp.eq.f32.partialorder %v1559, 8.507059e+37
      %v1561 = vand.u32 %v1518, 2147483648
      %v1562 = vor.u32 1.1754944e-38, %v1561
      %v1563 = vsel %vm1560, %v1562, %v1558
      %v1564 = vmul.f32 1.0, %v1563
      %v1565 = vrcp.pop %v1519
      %v1566 = vmul.f32 %v1519, %v1565
      %v1567 = vsub.f32 1.0, %v1566
      %v1568 = vmul.f32 %v1565, %v1567
      %v1569 = vadd.f32 %v1565, %v1568
      %vm1570 = vweird.f32 %v1519
      %vm1571 = vweird.f32 %v1565
      %vm1572 = vmor %vm1570, %vm1571
      %v1573 = vsel %vm1572, %v1565, %v1569
      %v1574 = vand.u32 2147483647, %v1519
      %vm1575 = vcmp.eq.f32.partialorder %v1574, 8.507059e+37
      %v1576 = vand.u32 %v1519, 2147483648
      %v1577 = vor.u32 1.1754944e-38, %v1576
      %v1578 = vsel %vm1575, %v1577, %v1573
      %v1579 = vmul.f32 1.0, %v1578
      %v1580 = vtanh.pop %v1501
      %v1581 = vtanh.pop %v1503
      %1584 = vrot.lane.b32.xlu0 %v1444, 64
      %v1585 = vpop.permute.xlu0 %1584
      %1586 = vrot.lane.b32.xlu0 %v1445, 64
      %v1587 = vpop.permute.xlu0 %1586
      %v1590 = vmul.f32 %v1534, %v1585
      %v1591 = vmul.f32 %v1564, %v1587
      %1594 = vrot.lane.b32.xlu0 %v1580, 64
      %v1595 = vpop.permute.xlu0 %1594
      %1596 = vrot.lane.b32.xlu0 %v1581, 64
      %v1597 = vpop.permute.xlu0 %1596
      %v1600 = vmul.f32 %v1534, %v1595
      %v1601 = vmul.f32 %v1564, %v1597
      %1604 = vrot.lane.b32.xlu0 %v1600, 64
      %v1605 = vpop.permute.xlu0 %1604
      %1606 = vrot.lane.b32.xlu0 %v1601, 64
      %v1607 = vpop.permute.xlu0 %1606
      %v1610 = vadd.f32 %v1590, %v1605
      %v1611 = vadd.f32 %v1591, %v1607
      %v1612 = vtanh.pop %v1610
      %v1613 = vtanh.pop %v1611
      %1616 = vrot.lane.b32.xlu0 %v1612, 64
      %v1617 = vpop.permute.xlu0 %1616
      %1618 = vrot.lane.b32.xlu0 %v1613, 64
      %v1619 = vpop.permute.xlu0 %1618
      %v1622 = vmul.f32 %v1549, %v1617
      %v1623 = vmul.f32 %v1579, %v1619
      %vm1624 = vcmp.gt.f32.partialorder %v691, 0.0
      %vm1625 = vcmp.gt.f32.partialorder %v692, 0.0
      %1628 = vrot.lane.b32.xlu0 %v1610, 64
      %v1629 = vpop.permute.xlu0 %1628
      %1630 = vrot.lane.b32.xlu0 %v1611, 64
      %v1631 = vpop.permute.xlu0 %1630
      %v1634 = vsel %vm1624, %v1629, %v1444
      %v1635 = vsel %vm1625, %v1631, %v1445
      %v1636 = vsel %vm1624, %v1622, %v1446
      %v1637 = vsel %vm1625, %v1623, %v1447
      %v1639 = vsel %vm375, %v1636, 0
      %v1642 = vsel %vm375, %v1637, 0
      %1644 = vmatpush.msra.mxu0 0.0
      %1645 = vmatpush.msra.mxu0 0.0
      %1646 = vmatpush.msra.mxu0 0.0
      %1647 = vmatpush.msra.mxu0 0.0
      %1648 = vmatpush.msra.mxu0 0.0
      %1649 = vmatpush.msra.mxu0 0.0
      %1650 = vmatpush.msra.mxu0 0.0
      %1651 = vmatpush.msra.mxu0 0.0
      %1652 = vmatpush.msra.mxu0 %v201
      %1653 = vmatpush.msra.mxu0 %v199
      %1654 = vmatpush.msra.mxu0 %v197
      %1655 = vmatpush.msra.mxu0 %v195
      %1656 = vmatpush.msra.mxu0 %v193
      %1657 = vmatpush.msra.mxu0 %v191
      %1658 = vmatpush.msra.mxu0 %v189
      %1659 = vmatpush.msra.mxu0 %v187
      %1660 = vmatmul.f32.gmra.mxu0 %v1639
      %v1661 = vpop.f32.mrf.mxu0
      %v1662 = vadd.f32 0.0, %v1661
      %1663 = vmatmul.f32.gmra.mxu0 %v1642
      %v1664 = vpop.f32.mrf.mxu0
      %v1665 = vadd.f32 0.0, %v1664
      %1666 = vdwg.mxu0
      %1667 = vmatpush.msra.mxu0 0.0
      %1668 = vmatpush.msra.mxu0 0.0
      %1669 = vmatpush.msra.mxu0 0.0
      %1670 = vmatpush.msra.mxu0 0.0
      %1671 = vmatpush.msra.mxu0 0.0
      %1672 = vmatpush.msra.mxu0 0.0
      %1673 = vmatpush.msra.mxu0 0.0
      %1674 = vmatpush.msra.mxu0 0.0
      %1675 = vmatpush.msra.mxu0 %v202
      %1676 = vmatpush.msra.mxu0 %v200
      %1677 = vmatpush.msra.mxu0 %v198
      %1678 = vmatpush.msra.mxu0 %v196
      %1679 = vmatpush.msra.mxu0 %v194
      %1680 = vmatpush.msra.mxu0 %v192
      %1681 = vmatpush.msra.mxu0 %v190
      %1682 = vmatpush.msra.mxu0 %v188
      %1683 = vmatmul.f32.gmra.mxu0 %v1639
      %v1684 = vpop.f32.mrf.mxu0
      %v1685 = vadd.f32 0.0, %v1684
      %1686 = vmatmul.f32.gmra.mxu0 %v1642
      %v1687 = vpop.f32.mrf.mxu0
      %v1688 = vadd.f32 0.0, %v1687
      %1689 = vdwg.mxu0
      %v1690 = vadd.f32 %v472, %v1662
      %v1691 = vadd.f32 %v537, %v1685
      %v1692 = vadd.f32 %v475, %v1665
      %v1693 = vadd.f32 %v540, %v1688
      %v1694 = vxor.u32 %v1690, 2147483648
      %v1695 = vxor.u32 %v1691, 2147483648
      %v1696 = vxor.u32 %v1692, 2147483648
      %v1697 = vxor.u32 %v1693, 2147483648
      %v1698 = vmul.f32 %v1694, 1.442695
      %v1699 = vpow.pop %v1698
      %v1700 = vmul.f32 %v1695, 1.442695
      %v1701 = vpow.pop %v1700
      %v1702 = vmul.f32 %v1696, 1.442695
      %v1703 = vpow.pop %v1702
      %v1704 = vmul.f32 %v1697, 1.442695
      %v1705 = vpow.pop %v1704
      %v1706 = vadd.f32 %v1699, 1.0
      %v1707 = vadd.f32 %v1701, 1.0
      %v1708 = vadd.f32 %v1703, 1.0
      %v1709 = vadd.f32 %v1705, 1.0
      %v1710 = vrcp.pop %v1706
      %v1711 = vmul.f32 %v1706, %v1710
      %v1712 = vsub.f32 1.0, %v1711
      %v1713 = vmul.f32 %v1710, %v1712
      %v1714 = vadd.f32 %v1710, %v1713
      %vm1715 = vweird.f32 %v1706
      %vm1716 = vweird.f32 %v1710
      %vm1717 = vmor %vm1715, %vm1716
      %v1718 = vsel %vm1717, %v1710, %v1714
      %v1719 = vand.u32 2147483647, %v1706
      %vm1720 = vcmp.eq.f32.partialorder %v1719, 8.507059e+37
      %v1721 = vand.u32 %v1706, 2147483648
      %v1722 = vor.u32 1.1754944e-38, %v1721
      %v1723 = vsel %vm1720, %v1722, %v1718
      %v1724 = vmul.f32 1.0, %v1723
      %v1725 = vrcp.pop %v1707
      %v1726 = vmul.f32 %v1707, %v1725
      %v1727 = vsub.f32 1.0, %v1726
      %v1728 = vmul.f32 %v1725, %v1727
      %v1729 = vadd.f32 %v1725, %v1728
      %vm1730 = vweird.f32 %v1707
      %vm1731 = vweird.f32 %v1725
      %vm1732 = vmor %vm1730, %vm1731
      %v1733 = vsel %vm1732, %v1725, %v1729
      %v1734 = vand.u32 2147483647, %v1707
      %vm1735 = vcmp.eq.f32.partialorder %v1734, 8.507059e+37
      %v1736 = vand.u32 %v1707, 2147483648
      %v1737 = vor.u32 1.1754944e-38, %v1736
      %v1738 = vsel %vm1735, %v1737, %v1733
      %v1739 = vmul.f32 1.0, %v1738
      %v1740 = vrcp.pop %v1708
      %v1741 = vmul.f32 %v1708, %v1740
      %v1742 = vsub.f32 1.0, %v1741
      %v1743 = vmul.f32 %v1740, %v1742
      %v1744 = vadd.f32 %v1740, %v1743
      %vm1745 = vweird.f32 %v1708
      %vm1746 = vweird.f32 %v1740
      %vm1747 = vmor %vm1745, %vm1746
      %v1748 = vsel %vm1747, %v1740, %v1744
      %v1749 = vand.u32 2147483647, %v1708
      %vm1750 = vcmp.eq.f32.partialorder %v1749, 8.507059e+37
      %v1751 = vand.u32 %v1708, 2147483648
      %v1752 = vor.u32 1.1754944e-38, %v1751
      %v1753 = vsel %vm1750, %v1752, %v1748
      %v1754 = vmul.f32 1.0, %v1753
      %v1755 = vrcp.pop %v1709
      %v1756 = vmul.f32 %v1709, %v1755
      %v1757 = vsub.f32 1.0, %v1756
      %v1758 = vmul.f32 %v1755, %v1757
      %v1759 = vadd.f32 %v1755, %v1758
      %vm1760 = vweird.f32 %v1709
      %vm1761 = vweird.f32 %v1755
      %vm1762 = vmor %vm1760, %vm1761
      %v1763 = vsel %vm1762, %v1755, %v1759
      %v1764 = vand.u32 2147483647, %v1709
      %vm1765 = vcmp.eq.f32.partialorder %v1764, 8.507059e+37
      %v1766 = vand.u32 %v1709, 2147483648
      %v1767 = vor.u32 1.1754944e-38, %v1766
      %v1768 = vsel %vm1765, %v1767, %v1763
      %v1769 = vmul.f32 1.0, %v1768
      %v1770 = vtanh.pop %v1691
      %v1771 = vtanh.pop %v1693
      %1774 = vrot.lane.b32.xlu0 %v1634, 64
      %v1775 = vpop.permute.xlu0 %1774
      %1776 = vrot.lane.b32.xlu0 %v1635, 64
      %v1777 = vpop.permute.xlu0 %1776
      %v1780 = vmul.f32 %v1724, %v1775
      %v1781 = vmul.f32 %v1754, %v1777
      %1784 = vrot.lane.b32.xlu0 %v1770, 64
      %v1785 = vpop.permute.xlu0 %1784
      %1786 = vrot.lane.b32.xlu0 %v1771, 64
      %v1787 = vpop.permute.xlu0 %1786
      %v1790 = vmul.f32 %v1724, %v1785
      %v1791 = vmul.f32 %v1754, %v1787
      %1794 = vrot.lane.b32.xlu0 %v1790, 64
      %v1795 = vpop.permute.xlu0 %1794
      %1796 = vrot.lane.b32.xlu0 %v1791, 64
      %v1797 = vpop.permute.xlu0 %1796
      %v1800 = vadd.f32 %v1780, %v1795
      %v1801 = vadd.f32 %v1781, %v1797
      %v1802 = vtanh.pop %v1800
      %v1803 = vtanh.pop %v1801
      %1806 = vrot.lane.b32.xlu0 %v1802, 64
      %v1807 = vpop.permute.xlu0 %1806
      %1808 = vrot.lane.b32.xlu0 %v1803, 64
      %v1809 = vpop.permute.xlu0 %1808
      %v1812 = vmul.f32 %v1739, %v1807
      %v1813 = vmul.f32 %v1769, %v1809
      %vm1814 = vcmp.gt.f32.partialorder %v693, 0.0
      %vm1815 = vcmp.gt.f32.partialorder %v694, 0.0
      %1818 = vrot.lane.b32.xlu0 %v1800, 64
      %v1819 = vpop.permute.xlu0 %1818
      %1820 = vrot.lane.b32.xlu0 %v1801, 64
      %v1821 = vpop.permute.xlu0 %1820
      %v1824 = vsel %vm1814, %v1819, %v1634
      %v1825 = vsel %vm1815, %v1821, %v1635
      %v1826 = vsel %vm1814, %v1812, %v1636
      %v1827 = vsel %vm1815, %v1813, %v1637
      %v1829 = vsel %vm375, %v1826, 0
      %v1832 = vsel %vm375, %v1827, 0
      %1834 = vmatpush.msra.mxu0 0.0
      %1835 = vmatpush.msra.mxu0 0.0
      %1836 = vmatpush.msra.mxu0 0.0
      %1837 = vmatpush.msra.mxu0 0.0
      %1838 = vmatpush.msra.mxu0 0.0
      %1839 = vmatpush.msra.mxu0 0.0
      %1840 = vmatpush.msra.mxu0 0.0
      %1841 = vmatpush.msra.mxu0 0.0
      %1842 = vmatpush.msra.mxu0 %v201
      %1843 = vmatpush.msra.mxu0 %v199
      %1844 = vmatpush.msra.mxu0 %v197
      %1845 = vmatpush.msra.mxu0 %v195
      %1846 = vmatpush.msra.mxu0 %v193
      %1847 = vmatpush.msra.mxu0 %v191
      %1848 = vmatpush.msra.mxu0 %v189
      %1849 = vmatpush.msra.mxu0 %v187
      %1850 = vmatmul.f32.gmra.mxu0 %v1829
      %v1851 = vpop.f32.mrf.mxu0
      %v1852 = vadd.f32 0.0, %v1851
      %1853 = vmatmul.f32.gmra.mxu0 %v1832
      %v1854 = vpop.f32.mrf.mxu0
      %v1855 = vadd.f32 0.0, %v1854
      %1856 = vdwg.mxu0
      %1857 = vmatpush.msra.mxu0 0.0
      %1858 = vmatpush.msra.mxu0 0.0
      %1859 = vmatpush.msra.mxu0 0.0
      %1860 = vmatpush.msra.mxu0 0.0
      %1861 = vmatpush.msra.mxu0 0.0
      %1862 = vmatpush.msra.mxu0 0.0
      %1863 = vmatpush.msra.mxu0 0.0
      %1864 = vmatpush.msra.mxu0 0.0
      %1865 = vmatpush.msra.mxu0 %v202
      %1866 = vmatpush.msra.mxu0 %v200
      %1867 = vmatpush.msra.mxu0 %v198
      %1868 = vmatpush.msra.mxu0 %v196
      %1869 = vmatpush.msra.mxu0 %v194
      %1870 = vmatpush.msra.mxu0 %v192
      %1871 = vmatpush.msra.mxu0 %v190
      %1872 = vmatpush.msra.mxu0 %v188
      %1873 = vmatmul.f32.gmra.mxu0 %v1829
      %v1874 = vpop.f32.mrf.mxu0
      %v1875 = vadd.f32 0.0, %v1874
      %1876 = vmatmul.f32.gmra.mxu0 %v1832
      %v1877 = vpop.f32.mrf.mxu0
      %v1878 = vadd.f32 0.0, %v1877
      %1879 = vdwg.mxu0
      %v1880 = vadd.f32 %v478, %v1852
      %v1881 = vadd.f32 %v543, %v1875
      %v1882 = vadd.f32 %v481, %v1855
      %v1883 = vadd.f32 %v546, %v1878
      %v1884 = vxor.u32 %v1880, 2147483648
      %v1885 = vxor.u32 %v1881, 2147483648
      %v1886 = vxor.u32 %v1882, 2147483648
      %v1887 = vxor.u32 %v1883, 2147483648
      %v1888 = vmul.f32 %v1884, 1.442695
      %v1889 = vpow.pop %v1888
      %v1890 = vmul.f32 %v1885, 1.442695
      %v1891 = vpow.pop %v1890
      %v1892 = vmul.f32 %v1886, 1.442695
      %v1893 = vpow.pop %v1892
      %v1894 = vmul.f32 %v1887, 1.442695
      %v1895 = vpow.pop %v1894
      %v1896 = vadd.f32 %v1889, 1.0
      %v1897 = vadd.f32 %v1891, 1.0
      %v1898 = vadd.f32 %v1893, 1.0
      %v1899 = vadd.f32 %v1895, 1.0
      %v1900 = vrcp.pop %v1896
      %v1901 = vmul.f32 %v1896, %v1900
      %v1902 = vsub.f32 1.0, %v1901
      %v1903 = vmul.f32 %v1900, %v1902
      %v1904 = vadd.f32 %v1900, %v1903
      %vm1905 = vweird.f32 %v1896
      %vm1906 = vweird.f32 %v1900
      %vm1907 = vmor %vm1905, %vm1906
      %v1908 = vsel %vm1907, %v1900, %v1904
      %v1909 = vand.u32 2147483647, %v1896
      %vm1910 = vcmp.eq.f32.partialorder %v1909, 8.507059e+37
      %v1911 = vand.u32 %v1896, 2147483648
      %v1912 = vor.u32 1.1754944e-38, %v1911
      %v1913 = vsel %vm1910, %v1912, %v1908
      %v1914 = vmul.f32 1.0, %v1913
      %v1915 = vrcp.pop %v1897
      %v1916 = vmul.f32 %v1897, %v1915
      %v1917 = vsub.f32 1.0, %v1916
      %v1918 = vmul.f32 %v1915, %v1917
      %v1919 = vadd.f32 %v1915, %v1918
      %vm1920 = vweird.f32 %v1897
      %vm1921 = vweird.f32 %v1915
      %vm1922 = vmor %vm1920, %vm1921
      %v1923 = vsel %vm1922, %v1915, %v1919
      %v1924 = vand.u32 2147483647, %v1897
      %vm1925 = vcmp.eq.f32.partialorder %v1924, 8.507059e+37
      %v1926 = vand.u32 %v1897, 2147483648
      %v1927 = vor.u32 1.1754944e-38, %v1926
      %v1928 = vsel %vm1925, %v1927, %v1923
      %v1929 = vmul.f32 1.0, %v1928
      %v1930 = vrcp.pop %v1898
      %v1931 = vmul.f32 %v1898, %v1930
      %v1932 = vsub.f32 1.0, %v1931
      %v1933 = vmul.f32 %v1930, %v1932
      %v1934 = vadd.f32 %v1930, %v1933
      %vm1935 = vweird.f32 %v1898
      %vm1936 = vweird.f32 %v1930
      %vm1937 = vmor %vm1935, %vm1936
      %v1938 = vsel %vm1937, %v1930, %v1934
      %v1939 = vand.u32 2147483647, %v1898
      %vm1940 = vcmp.eq.f32.partialorder %v1939, 8.507059e+37
      %v1941 = vand.u32 %v1898, 2147483648
      %v1942 = vor.u32 1.1754944e-38, %v1941
      %v1943 = vsel %vm1940, %v1942, %v1938
      %v1944 = vmul.f32 1.0, %v1943
      %v1945 = vrcp.pop %v1899
      %v1946 = vmul.f32 %v1899, %v1945
      %v1947 = vsub.f32 1.0, %v1946
      %v1948 = vmul.f32 %v1945, %v1947
      %v1949 = vadd.f32 %v1945, %v1948
      %vm1950 = vweird.f32 %v1899
      %vm1951 = vweird.f32 %v1945
      %vm1952 = vmor %vm1950, %vm1951
      %v1953 = vsel %vm1952, %v1945, %v1949
      %v1954 = vand.u32 2147483647, %v1899
      %vm1955 = vcmp.eq.f32.partialorder %v1954, 8.507059e+37
      %v1956 = vand.u32 %v1899, 2147483648
      %v1957 = vor.u32 1.1754944e-38, %v1956
      %v1958 = vsel %vm1955, %v1957, %v1953
      %v1959 = vmul.f32 1.0, %v1958
      %v1960 = vtanh.pop %v1881
      %v1961 = vtanh.pop %v1883
      %1964 = vrot.lane.b32.xlu0 %v1824, 64
      %v1965 = vpop.permute.xlu0 %1964
      %1966 = vrot.lane.b32.xlu0 %v1825, 64
      %v1967 = vpop.permute.xlu0 %1966
      %v1970 = vmul.f32 %v1914, %v1965
      %v1971 = vmul.f32 %v1944, %v1967
      %1974 = vrot.lane.b32.xlu0 %v1960, 64
      %v1975 = vpop.permute.xlu0 %1974
      %1976 = vrot.lane.b32.xlu0 %v1961, 64
      %v1977 = vpop.permute.xlu0 %1976
      %v1980 = vmul.f32 %v1914, %v1975
      %v1981 = vmul.f32 %v1944, %v1977
      %1984 = vrot.lane.b32.xlu0 %v1980, 64
      %v1985 = vpop.permute.xlu0 %1984
      %1986 = vrot.lane.b32.xlu0 %v1981, 64
      %v1987 = vpop.permute.xlu0 %1986
      %v1990 = vadd.f32 %v1970, %v1985
      %v1991 = vadd.f32 %v1971, %v1987
      %v1992 = vtanh.pop %v1990
      %v1993 = vtanh.pop %v1991
      %1996 = vrot.lane.b32.xlu0 %v1992, 64
      %v1997 = vpop.permute.xlu0 %1996
      %1998 = vrot.lane.b32.xlu0 %v1993, 64
      %v1999 = vpop.permute.xlu0 %1998
      %v2002 = vmul.f32 %v1929, %v1997
      %v2003 = vmul.f32 %v1959, %v1999
      %vm2004 = vcmp.gt.f32.partialorder %v695, 0.0
      %vm2005 = vcmp.gt.f32.partialorder %v696, 0.0
      %2008 = vrot.lane.b32.xlu0 %v1990, 64
      %v2009 = vpop.permute.xlu0 %2008
      %2010 = vrot.lane.b32.xlu0 %v1991, 64
      %v2011 = vpop.permute.xlu0 %2010
      %v2014 = vsel %vm2004, %v2009, %v1824
      %v2015 = vsel %vm2005, %v2011, %v1825
      %v2016 = vsel %vm2004, %v2002, %v1826
      %v2017 = vsel %vm2005, %v2003, %v1827
      %v2019 = vsel %vm375, %v2016, 0
      %v2022 = vsel %vm375, %v2017, 0
      %2024 = vmatpush.msra.mxu0 0.0
      %2025 = vmatpush.msra.mxu0 0.0
      %2026 = vmatpush.msra.mxu0 0.0
      %2027 = vmatpush.msra.mxu0 0.0
      %2028 = vmatpush.msra.mxu0 0.0
      %2029 = vmatpush.msra.mxu0 0.0
      %2030 = vmatpush.msra.mxu0 0.0
      %2031 = vmatpush.msra.mxu0 0.0
      %2032 = vmatpush.msra.mxu0 %v201
      %2033 = vmatpush.msra.mxu0 %v199
      %2034 = vmatpush.msra.mxu0 %v197
      %2035 = vmatpush.msra.mxu0 %v195
      %2036 = vmatpush.msra.mxu0 %v193
      %2037 = vmatpush.msra.mxu0 %v191
      %2038 = vmatpush.msra.mxu0 %v189
      %2039 = vmatpush.msra.mxu0 %v187
      %2040 = vmatmul.f32.gmra.mxu0 %v2019
      %v2041 = vpop.f32.mrf.mxu0
      %v2042 = vadd.f32 0.0, %v2041
      %2043 = vmatmul.f32.gmra.mxu0 %v2022
      %v2044 = vpop.f32.mrf.mxu0
      %v2045 = vadd.f32 0.0, %v2044
      %2046 = vdwg.mxu0
      %2047 = vmatpush.msra.mxu0 0.0
      %2048 = vmatpush.msra.mxu0 0.0
      %2049 = vmatpush.msra.mxu0 0.0
      %2050 = vmatpush.msra.mxu0 0.0
      %2051 = vmatpush.msra.mxu0 0.0
      %2052 = vmatpush.msra.mxu0 0.0
      %2053 = vmatpush.msra.mxu0 0.0
      %2054 = vmatpush.msra.mxu0 0.0
      %2055 = vmatpush.msra.mxu0 %v202
      %2056 = vmatpush.msra.mxu0 %v200
      %2057 = vmatpush.msra.mxu0 %v198
      %2058 = vmatpush.msra.mxu0 %v196
      %2059 = vmatpush.msra.mxu0 %v194
      %2060 = vmatpush.msra.mxu0 %v192
      %2061 = vmatpush.msra.mxu0 %v190
      %2062 = vmatpush.msra.mxu0 %v188
      %2063 = vmatmul.f32.gmra.mxu0 %v2019
      %v2064 = vpop.f32.mrf.mxu0
      %v2065 = vadd.f32 0.0, %v2064
      %2066 = vmatmul.f32.gmra.mxu0 %v2022
      %v2067 = vpop.f32.mrf.mxu0
      %v2068 = vadd.f32 0.0, %v2067
      %2069 = vdwg.mxu0
      %v2070 = vadd.f32 %v484, %v2042
      %v2071 = vadd.f32 %v549, %v2065
      %v2072 = vadd.f32 %v487, %v2045
      %v2073 = vadd.f32 %v552, %v2068
      %v2074 = vxor.u32 %v2070, 2147483648
      %v2075 = vxor.u32 %v2071, 2147483648
      %v2076 = vxor.u32 %v2072, 2147483648
      %v2077 = vxor.u32 %v2073, 2147483648
      %v2078 = vmul.f32 %v2074, 1.442695
      %v2079 = vpow.pop %v2078
      %v2080 = vmul.f32 %v2075, 1.442695
      %v2081 = vpow.pop %v2080
      %v2082 = vmul.f32 %v2076, 1.442695
      %v2083 = vpow.pop %v2082
      %v2084 = vmul.f32 %v2077, 1.442695
      %v2085 = vpow.pop %v2084
      %v2086 = vadd.f32 %v2079, 1.0
      %v2087 = vadd.f32 %v2081, 1.0
      %v2088 = vadd.f32 %v2083, 1.0
      %v2089 = vadd.f32 %v2085, 1.0
      %v2090 = vrcp.pop %v2086
      %v2091 = vmul.f32 %v2086, %v2090
      %v2092 = vsub.f32 1.0, %v2091
      %v2093 = vmul.f32 %v2090, %v2092
      %v2094 = vadd.f32 %v2090, %v2093
      %vm2095 = vweird.f32 %v2086
      %vm2096 = vweird.f32 %v2090
      %vm2097 = vmor %vm2095, %vm2096
      %v2098 = vsel %vm2097, %v2090, %v2094
      %v2099 = vand.u32 2147483647, %v2086
      %vm2100 = vcmp.eq.f32.partialorder %v2099, 8.507059e+37
      %v2101 = vand.u32 %v2086, 2147483648
      %v2102 = vor.u32 1.1754944e-38, %v2101
      %v2103 = vsel %vm2100, %v2102, %v2098
      %v2104 = vmul.f32 1.0, %v2103
      %v2105 = vrcp.pop %v2087
      %v2106 = vmul.f32 %v2087, %v2105
      %v2107 = vsub.f32 1.0, %v2106
      %v2108 = vmul.f32 %v2105, %v2107
      %v2109 = vadd.f32 %v2105, %v2108
      %vm2110 = vweird.f32 %v2087
      %vm2111 = vweird.f32 %v2105
      %vm2112 = vmor %vm2110, %vm2111
      %v2113 = vsel %vm2112, %v2105, %v2109
      %v2114 = vand.u32 2147483647, %v2087
      %vm2115 = vcmp.eq.f32.partialorder %v2114, 8.507059e+37
      %v2116 = vand.u32 %v2087, 2147483648
      %v2117 = vor.u32 1.1754944e-38, %v2116
      %v2118 = vsel %vm2115, %v2117, %v2113
      %v2119 = vmul.f32 1.0, %v2118
      %v2120 = vrcp.pop %v2088
      %v2121 = vmul.f32 %v2088, %v2120
      %v2122 = vsub.f32 1.0, %v2121
      %v2123 = vmul.f32 %v2120, %v2122
      %v2124 = vadd.f32 %v2120, %v2123
      %vm2125 = vweird.f32 %v2088
      %vm2126 = vweird.f32 %v2120
      %vm2127 = vmor %vm2125, %vm2126
      %v2128 = vsel %vm2127, %v2120, %v2124
      %v2129 = vand.u32 2147483647, %v2088
      %vm2130 = vcmp.eq.f32.partialorder %v2129, 8.507059e+37
      %v2131 = vand.u32 %v2088, 2147483648
      %v2132 = vor.u32 1.1754944e-38, %v2131
      %v2133 = vsel %vm2130, %v2132, %v2128
      %v2134 = vmul.f32 1.0, %v2133
      %v2135 = vrcp.pop %v2089
      %v2136 = vmul.f32 %v2089, %v2135
      %v2137 = vsub.f32 1.0, %v2136
      %v2138 = vmul.f32 %v2135, %v2137
      %v2139 = vadd.f32 %v2135, %v2138
      %vm2140 = vweird.f32 %v2089
      %vm2141 = vweird.f32 %v2135
      %vm2142 = vmor %vm2140, %vm2141
      %v2143 = vsel %vm2142, %v2135, %v2139
      %v2144 = vand.u32 2147483647, %v2089
      %vm2145 = vcmp.eq.f32.partialorder %v2144, 8.507059e+37
      %v2146 = vand.u32 %v2089, 2147483648
      %v2147 = vor.u32 1.1754944e-38, %v2146
      %v2148 = vsel %vm2145, %v2147, %v2143
      %v2149 = vmul.f32 1.0, %v2148
      %v2150 = vtanh.pop %v2071
      %v2151 = vtanh.pop %v2073
      %2154 = vrot.lane.b32.xlu0 %v2014, 64
      %v2155 = vpop.permute.xlu0 %2154
      %2156 = vrot.lane.b32.xlu0 %v2015, 64
      %v2157 = vpop.permute.xlu0 %2156
      %v2160 = vmul.f32 %v2104, %v2155
      %v2161 = vmul.f32 %v2134, %v2157
      %2164 = vrot.lane.b32.xlu0 %v2150, 64
      %v2165 = vpop.permute.xlu0 %2164
      %2166 = vrot.lane.b32.xlu0 %v2151, 64
      %v2167 = vpop.permute.xlu0 %2166
      %v2170 = vmul.f32 %v2104, %v2165
      %v2171 = vmul.f32 %v2134, %v2167
      %2174 = vrot.lane.b32.xlu0 %v2170, 64
      %v2175 = vpop.permute.xlu0 %2174
      %2176 = vrot.lane.b32.xlu0 %v2171, 64
      %v2177 = vpop.permute.xlu0 %2176
      %v2180 = vadd.f32 %v2160, %v2175
      %v2181 = vadd.f32 %v2161, %v2177
      %v2182 = vtanh.pop %v2180
      %v2183 = vtanh.pop %v2181
      %2186 = vrot.lane.b32.xlu0 %v2182, 64
      %v2187 = vpop.permute.xlu0 %2186
      %2188 = vrot.lane.b32.xlu0 %v2183, 64
      %v2189 = vpop.permute.xlu0 %2188
      %v2192 = vmul.f32 %v2119, %v2187
      %v2193 = vmul.f32 %v2149, %v2189
      %vm2194 = vcmp.gt.f32.partialorder %v697, 0.0
      %vm2195 = vcmp.gt.f32.partialorder %v698, 0.0
      %v2196 = vsel %vm2194, %v2192, %v2016
      %v2197 = vsel %vm2195, %v2193, %v2017
      %v2198 = vperm.slane %v213, 0
      %v2200 = vsel %vm375, %v2196, 0
      %v2203 = vsel %vm375, %v2197, 0
      %2205 = vmatpush.msra.mxu0 0.0
      %2206 = vmatpush.msra.mxu0 0.0
      %2207 = vmatpush.msra.mxu0 0.0
      %2208 = vmatpush.msra.mxu0 0.0
      %2209 = vmatpush.msra.mxu0 0.0
      %2210 = vmatpush.msra.mxu0 0.0
      %2211 = vmatpush.msra.mxu0 0.0
      %2212 = vmatpush.msra.mxu0 0.0
      %2213 = vmatpush.msra.mxu0 %v212
      %2214 = vmatpush.msra.mxu0 %v211
      %2215 = vmatpush.msra.mxu0 %v210
      %2216 = vmatpush.msra.mxu0 %v209
      %2217 = vmatpush.msra.mxu0 %v208
      %2218 = vmatpush.msra.mxu0 %v207
      %2219 = vmatpush.msra.mxu0 %v206
      %2220 = vmatpush.msra.mxu0 %v205
      %2221 = vmatmul.f32.gmra.mxu0 %v2200
      %v2222 = vpop.f32.mrf.mxu0
      %v2223 = vadd.f32 %v2198, %v2222
      %2224 = vmatmul.f32.gmra.mxu0 %v2203
      %v2225 = vpop.f32.mrf.mxu0
      %v2226 = vadd.f32 %v2198, %v2225
      %2227 = vdwg.mxu0
      %vm2228 = vcmp.ge.f32.partialorder %v2223, 0.0
      %vm2229 = vcmp.ge.f32.partialorder %v2226, 0.0
      %v2230 = vmul.f32 %v2223, 0.2
      %v2231 = vmul.f32 %v2226, 0.2
      %v2232 = vsel %vm2228, %v2223, %v2230
      %v2233 = vsel %vm2229, %v2226, %v2231
      %2236 = vrot.lane.b32.xlu0 %v358, 32
      %v2237 = vpop.permute.xlu0 %2236
      %2238 = vrot.lane.b32.xlu0 %v359, 32
      %v2239 = vpop.permute.xlu0 %2238
      %v2242 = vsel %vm682, %v2232, %v2237
      %v2243 = vsel %vm682, %v2233, %v2239
      %v2244 = vsel %vm682, %v2237, 0
      %v2246 = vsel %vm682, %v2239, 0
      %2248 = vmatpush.msra.mxu0 %v229
      %2249 = vmatpush.msra.mxu0 %v228
      %2250 = vmatpush.msra.mxu0 %v227
      %2251 = vmatpush.msra.mxu0 %v226
      %2252 = vmatpush.msra.mxu0 %v225
      %2253 = vmatpush.msra.mxu0 %v224
      %2254 = vmatpush.msra.mxu0 %v223
      %2255 = vmatpush.msra.mxu0 %v222
      %2256 = vmatpush.msra.mxu0 %v221
      %2257 = vmatpush.msra.mxu0 %v220
      %2258 = vmatpush.msra.mxu0 %v219
      %2259 = vmatpush.msra.mxu0 %v218
      %2260 = vmatpush.msra.mxu0 %v217
      %2261 = vmatpush.msra.mxu0 %v216
      %2262 = vmatpush.msra.mxu0 %v215
      %2263 = vmatpush.msra.mxu0 %v214
      %2264 = vmatmul.f32.gmra.mxu0 %v2242
      %v2265 = vpop.f32.mrf.mxu0
      %v2266 = vadd.f32 0.0, %v2265
      %2267 = vmatmul.f32.gmra.mxu0 %v2243
      %v2268 = vpop.f32.mrf.mxu0
      %v2269 = vadd.f32 0.0, %v2268
      %2270 = vdwg.mxu0
      %2271 = vmatpush.msra.mxu0 0.0
      %2272 = vmatpush.msra.mxu0 0.0
      %2273 = vmatpush.msra.mxu0 0.0
      %2274 = vmatpush.msra.mxu0 0.0
      %2275 = vmatpush.msra.mxu0 0.0
      %2276 = vmatpush.msra.mxu0 0.0
      %2277 = vmatpush.msra.mxu0 0.0
      %2278 = vmatpush.msra.mxu0 0.0
      %2279 = vmatpush.msra.mxu0 0.0
      %2280 = vmatpush.msra.mxu0 0.0
      %2281 = vmatpush.msra.mxu0 0.0
      %2282 = vmatpush.msra.mxu0 0.0
      %2283 = vmatpush.msra.mxu0 %v233
      %2284 = vmatpush.msra.mxu0 %v232
      %2285 = vmatpush.msra.mxu0 %v231
      %2286 = vmatpush.msra.mxu0 %v230
      %2287 = vmatmul.f32.gmra.mxu0 %v2244
      %v2288 = vpop.f32.mrf.mxu0
      %v2289 = vadd.f32 %v2266, %v2288
      %2290 = vmatmul.f32.gmra.mxu0 %v2246
      %v2291 = vpop.f32.mrf.mxu0
      %v2292 = vadd.f32 %v2269, %v2291
      %2293 = vdwg.mxu0
      %2294 = vmatpush.msra.mxu0 %v249
      %2295 = vmatpush.msra.mxu0 %v248
      %2296 = vmatpush.msra.mxu0 %v247
      %2297 = vmatpush.msra.mxu0 %v246
      %2298 = vmatpush.msra.mxu0 %v245
      %2299 = vmatpush.msra.mxu0 %v244
      %2300 = vmatpush.msra.mxu0 %v243
      %2301 = vmatpush.msra.mxu0 %v242
      %2302 = vmatpush.msra.mxu0 %v241
      %2303 = vmatpush.msra.mxu0 %v240
      %2304 = vmatpush.msra.mxu0 %v239
      %2305 = vmatpush.msra.mxu0 %v238
      %2306 = vmatpush.msra.mxu0 %v237
      %2307 = vmatpush.msra.mxu0 %v236
      %2308 = vmatpush.msra.mxu0 %v235
      %2309 = vmatpush.msra.mxu0 %v234
      %2310 = vmatmul.f32.gmra.mxu0 %v2289
      %v2311 = vpop.f32.mrf.mxu0
      %v2312 = vadd.f32 0.0, %v2311
      %2313 = vmatmul.f32.gmra.mxu0 %v2292
      %v2314 = vpop.f32.mrf.mxu0
      %v2315 = vadd.f32 0.0, %v2314
      %2316 = vdwg.mxu0
      %vm2317 = vcmask 31744
      %v2319 = vsel %vm2317, %v2312, 0
      %v2322 = vsel %vm2317, %v2315, 0
      %vm2324 = vcmask 1043456
      %v2326 = vsel %vm2324, %v313, 0
      %2328 = vmatpush.msra.mxu0 0.0
      %2329 = vmatpush.msra.mxu0 0.0
      %2330 = vmatpush.msra.mxu0 0.0
      %2331 = vmatpush.msra.mxu0 0.0
      %2332 = vmatpush.msra.mxu0 0.0
      %2333 = vmatpush.msra.mxu0 0.0
      %2334 = vmatpush.msra.mxu0 0.0
      %2335 = vmatpush.msra.mxu0 0.0
      %2336 = vmatpush.msra.mxu0 0.0
      %2337 = vmatpush.msra.mxu0 0.0
      %2338 = vmatpush.msra.mxu0 0.0
      %2339 = vmatpush.msra.mxu0 0.0
      %2340 = vmatpush.msra.mxu0 0.0
      %2341 = vmatpush.msra.mxu0 0.0
      %2342 = vmatpush.msra.mxu0 0.0
      %2343 = vmatpush.msra.mxu0 %v2326
      %2344 = vmatmul.f32.gmra.mxu0 %v2319
      %v2345 = vpop.f32.mrf.mxu0
      %v2346 = vadd.f32 0.0, %v2345
      %2347 = vmatmul.f32.gmra.mxu0 %v2322
      %v2348 = vpop.f32.mrf.mxu0
      %v2349 = vadd.f32 0.0, %v2348
      %2350 = vdwg.mxu0
      %v2351 = vmul.f32 %v2346, %v322
      %v2352 = vmul.f32 %v2349, %v323
      %vm2353 = vcmask 130048
      %v2355 = vsel %vm2353, 1.0, 0
      %2357 = vmatpush.msra.mxu0 0.0
      %2358 = vmatpush.msra.mxu0 0.0
      %2359 = vmatpush.msra.mxu0 0.0
      %2360 = vmatpush.msra.mxu0 0.0
      %2361 = vmatpush.msra.mxu0 0.0
      %2362 = vmatpush.msra.mxu0 0.0
      %2363 = vmatpush.msra.mxu0 0.0
      %2364 = vmatpush.msra.mxu0 0.0
      %2365 = vmatpush.msra.mxu0 0.0
      %2366 = vmatpush.msra.mxu0 0.0
      %2367 = vmatpush.msra.mxu0 0.0
      %2368 = vmatpush.msra.mxu0 0.0
      %2369 = vmatpush.msra.mxu0 0.0
      %2370 = vmatpush.msra.mxu0 0.0
      %2371 = vmatpush.msra.mxu0 %v2352
      %2372 = vmatpush.msra.mxu0 %v2351
      %2373 = vmatmul.f32.gmra.mxu0 %v2355
      %v2374 = vpop.f32.mrf.mxu0
      %v2375 = vadd.f32 0.0, %v2374
      %2376 = vmatmul.f32.gmra.mxu0 %v2355
      %v2377 = vpop.f32.mrf.mxu0
      %v2378 = vadd.f32 0.0, %v2377
      %2379 = vdwg.mxu0
      %v2381 = vsel %vm2353, %v360, 0
      %v2384 = vsel %vm2353, %v361, 0
      %2386 = vmatpush.msra.mxu0 0.0
      %2387 = vmatpush.msra.mxu0 0.0
      %2388 = vmatpush.msra.mxu0 0.0
      %2389 = vmatpush.msra.mxu0 0.0
      %2390 = vmatpush.msra.mxu0 0.0
      %2391 = vmatpush.msra.mxu0 0.0
      %2392 = vmatpush.msra.mxu0 0.0
      %2393 = vmatpush.msra.mxu0 0.0
      %2394 = vmatpush.msra.mxu0 0.0
      %2395 = vmatpush.msra.mxu0 0.0
      %2396 = vmatpush.msra.mxu0 0.0
      %2397 = vmatpush.msra.mxu0 0.0
      %2398 = vmatpush.msra.mxu0 0.0
      %2399 = vmatpush.msra.mxu0 0.0
      %2400 = vmatpush.msra.mxu0 %v323
      %2401 = vmatpush.msra.mxu0 %v322
      %2402 = vmatmul.f32.gmra.mxu0 %v2381
      %v2403 = vpop.f32.mrf.mxu0
      %v2404 = vadd.f32 0.0, %v2403
      %2405 = vmatmul.f32.gmra.mxu0 %v2384
      %v2406 = vpop.f32.mrf.mxu0
      %v2407 = vadd.f32 0.0, %v2406
      %2408 = vdwg.mxu0
      %2409 = vrot.lane.b32.xlu0 %v2312, 124
      %v2410 = vpop.permute.xlu0 %2409
      %2411 = vrot.lane.b32.xlu0 %v2315, 124
      %v2412 = vpop.permute.xlu0 %2411
      %v2413 = vsel %vm2317, %v2410, 0
      %v2415 = vsel %vm2317, %v2412, 0
      %2417 = vmatpush.msra.mxu0 0.0
      %2418 = vmatpush.msra.mxu0 0.0
      %2419 = vmatpush.msra.mxu0 0.0
      %2420 = vmatpush.msra.mxu0 0.0
      %2421 = vmatpush.msra.mxu0 0.0
      %2422 = vmatpush.msra.mxu0 0.0
      %2423 = vmatpush.msra.mxu0 0.0
      %2424 = vmatpush.msra.mxu0 0.0
      %2425 = vmatpush.msra.mxu0 0.0
      %2426 = vmatpush.msra.mxu0 0.0
      %2427 = vmatpush.msra.mxu0 0.0
      %2428 = vmatpush.msra.mxu0 0.0
      %2429 = vmatpush.msra.mxu0 0.0
      %2430 = vmatpush.msra.mxu0 0.0
      %2431 = vmatpush.msra.mxu0 0.0
      %2432 = vmatpush.msra.mxu0 %v2326
      %2433 = vmatmul.f32.gmra.mxu0 %v2413
      %v2434 = vpop.f32.mrf.mxu0
      %v2435 = vadd.f32 %v2375, %v2434
      %2436 = vmatmul.f32.gmra.mxu0 %v2415
      %v2437 = vpop.f32.mrf.mxu0
      %v2438 = vadd.f32 %v2378, %v2437
      %2439 = vdwg.mxu0
      %vm2440 = vcmp.ge.f32.partialorder %v2435, 0.0
      %vm2441 = vcmp.ge.f32.partialorder %v2438, 0.0
      %v2442 = vmul.f32 %v2435, 0.2
      %v2443 = vmul.f32 %v2438, 0.2
      %v2444 = vsel %vm2440, %v2435, %v2442
      %v2445 = vsel %vm2441, %v2438, %v2443
      %vm2446 = vcmp.gt.f32.partialorder %v2404, 0.0
      %vm2447 = vcmp.gt.f32.partialorder %v2407, 0.0
      %v2448 = vsel %vm2446, %v2444, -1e+30
      %v2449 = vsel %vm2447, %v2445, -1e+30
      %v2450 = vsel %vm375, %v2448, -inf
      %2451 = vmax.xlane.f32.xlu0 %v2450
      %v2452 = vpop.xlane.xlu0 %2451
      %v2453 = vsel %vm375, %v2449, -inf
      %2454 = vmax.xlane.f32.xlu0 %v2453
      %v2455 = vpop.xlane.xlu0 %2454
      %v2456 = vsub.f32 %v2448, %v2452
      %v2457 = vsub.f32 %v2449, %v2455
      %v2458 = vmul.f32 %v2456, 1.442695
      %v2459 = vpow.pop %v2458
      %v2460 = vmul.f32 %v2457, 1.442695
      %v2461 = vpow.pop %v2460
      %v2462 = vmul.f32 %v2459, %v2404
      %v2463 = vmul.f32 %v2461, %v2407
      %v2465 = vsel %vm375, %v2462, 0
      %v2468 = vsel %vm375, %v2463, 0
      %2470 = vmatpush.msra.mxu0 0.0
      %2471 = vmatpush.msra.mxu0 0.0
      %2472 = vmatpush.msra.mxu0 0.0
      %2473 = vmatpush.msra.mxu0 0.0
      %2474 = vmatpush.msra.mxu0 0.0
      %2475 = vmatpush.msra.mxu0 0.0
      %2476 = vmatpush.msra.mxu0 0.0
      %2477 = vmatpush.msra.mxu0 0.0
      %2478 = vmatpush.msra.mxu0 %v321
      %2479 = vmatpush.msra.mxu0 %v320
      %2480 = vmatpush.msra.mxu0 %v319
      %2481 = vmatpush.msra.mxu0 %v318
      %2482 = vmatpush.msra.mxu0 %v317
      %2483 = vmatpush.msra.mxu0 %v316
      %2484 = vmatpush.msra.mxu0 %v315
      %2485 = vmatpush.msra.mxu0 %v314
      %2486 = vmatmul.f32.gmra.mxu0 %v2465
      %v2487 = vpop.f32.mrf.mxu0
      %v2488 = vadd.f32 0.0, %v2487
      %2489 = vmatmul.f32.gmra.mxu0 %v2468
      %v2490 = vpop.f32.mrf.mxu0
      %v2491 = vadd.f32 0.0, %v2490
      %2492 = vdwg.mxu0
      %v2494 = vsel %vm2317, %v2488, 0
      %v2497 = vsel %vm2317, %v2491, 0
      %2499 = vmatpush.msra.mxu0 0.0
      %2500 = vmatpush.msra.mxu0 0.0
      %2501 = vmatpush.msra.mxu0 0.0
      %2502 = vmatpush.msra.mxu0 0.0
      %2503 = vmatpush.msra.mxu0 0.0
      %2504 = vmatpush.msra.mxu0 0.0
      %2505 = vmatpush.msra.mxu0 0.0
      %2506 = vmatpush.msra.mxu0 0.0
      %2507 = vmatpush.msra.mxu0 0.0
      %2508 = vmatpush.msra.mxu0 0.0
      %2509 = vmatpush.msra.mxu0 0.0
      %2510 = vmatpush.msra.mxu0 0.0
      %2511 = vmatpush.msra.mxu0 0.0
      %2512 = vmatpush.msra.mxu0 0.0
      %2513 = vmatpush.msra.mxu0 0.0
      %2514 = vmatpush.msra.mxu0 %v2326
      %2515 = vmatmul.f32.gmra.mxu0 %v2494
      %v2516 = vpop.f32.mrf.mxu0
      %v2517 = vadd.f32 0.0, %v2516
      %2518 = vmatmul.f32.gmra.mxu0 %v2497
      %v2519 = vpop.f32.mrf.mxu0
      %v2520 = vadd.f32 0.0, %v2519
      %2521 = vdwg.mxu0
      %v2522 = vmax.f32 %v2517, 1e-20
      %v2523 = vmax.f32 %v2520, 1e-20
      %v2524 = vrcp.pop %v2522
      %v2525 = vmul.f32 %v2522, %v2524
      %v2526 = vsub.f32 1.0, %v2525
      %v2527 = vmul.f32 %v2524, %v2526
      %v2528 = vadd.f32 %v2524, %v2527
      %vm2529 = vweird.f32 %v2522
      %vm2530 = vweird.f32 %v2524
      %vm2531 = vmor %vm2529, %vm2530
      %v2532 = vsel %vm2531, %v2524, %v2528
      %v2533 = vand.u32 2147483647, %v2522
      %vm2534 = vcmp.eq.f32.partialorder %v2533, 8.507059e+37
      %v2535 = vand.u32 %v2522, 2147483648
      %v2536 = vor.u32 1.1754944e-38, %v2535
      %v2537 = vsel %vm2534, %v2536, %v2532
      %v2538 = vmul.f32 %v2462, %v2537
      %v2539 = vrcp.pop %v2523
      %v2540 = vmul.f32 %v2523, %v2539
      %v2541 = vsub.f32 1.0, %v2540
      %v2542 = vmul.f32 %v2539, %v2541
      %v2543 = vadd.f32 %v2539, %v2542
      %vm2544 = vweird.f32 %v2523
      %vm2545 = vweird.f32 %v2539
      %vm2546 = vmor %vm2544, %vm2545
      %v2547 = vsel %vm2546, %v2539, %v2543
      %v2548 = vand.u32 2147483647, %v2523
      %vm2549 = vcmp.eq.f32.partialorder %v2548, 8.507059e+37
      %v2550 = vand.u32 %v2523, 2147483648
      %v2551 = vor.u32 1.1754944e-38, %v2550
      %v2552 = vsel %vm2549, %v2551, %v2547
      %v2553 = vmul.f32 %v2463, %v2552
      %v2555 = vsel %vm2353, %v324, 0
      %v2558 = vsel %vm2353, %v325, 0
      %v2561 = vsel %vm2353, %v326, 0
      %v2564 = vsel %vm2353, %v327, 0
      %v2567 = vsel %vm2353, %v328, 0
      %v2570 = vsel %vm2353, %v329, 0
      %v2573 = vsel %vm2353, %v330, 0
      %v2576 = vsel %vm2353, %v331, 0
      %2578 = vmatpush.msra.mxu0 0.0
      %2579 = vmatpush.msra.mxu0 0.0
      %2580 = vmatpush.msra.mxu0 0.0
      %2581 = vmatpush.msra.mxu0 0.0
      %2582 = vmatpush.msra.mxu0 0.0
      %2583 = vmatpush.msra.mxu0 0.0
      %2584 = vmatpush.msra.mxu0 0.0
      %2585 = vmatpush.msra.mxu0 0.0
      %2586 = vmatpush.msra.mxu0 0.0
      %2587 = vmatpush.msra.mxu0 0.0
      %2588 = vmatpush.msra.mxu0 0.0
      %2589 = vmatpush.msra.mxu0 0.0
      %2590 = vmatpush.msra.mxu0 0.0
      %2591 = vmatpush.msra.mxu0 0.0
      %2592 = vmatpush.msra.mxu0 %v2292
      %2593 = vmatpush.msra.mxu0 %v2289
      %2594 = vmatmul.f32.gmra.mxu0 %v2555
      %v2595 = vpop.f32.mrf.mxu0
      %v2596 = vadd.f32 0.0, %v2595
      %2597 = vmatmul.f32.gmra.mxu0 %v2558
      %v2598 = vpop.f32.mrf.mxu0
      %v2599 = vadd.f32 0.0, %v2598
      %2600 = vmatmul.f32.gmra.mxu0 %v2561
      %v2601 = vpop.f32.mrf.mxu0
      %v2602 = vadd.f32 0.0, %v2601
      %2603 = vmatmul.f32.gmra.mxu0 %v2564
      %v2604 = vpop.f32.mrf.mxu0
      %v2605 = vadd.f32 0.0, %v2604
      %2606 = vmatmul.f32.gmra.mxu0 %v2567
      %v2607 = vpop.f32.mrf.mxu0
      %v2608 = vadd.f32 0.0, %v2607
      %2609 = vmatmul.f32.gmra.mxu0 %v2570
      %v2610 = vpop.f32.mrf.mxu0
      %v2611 = vadd.f32 0.0, %v2610
      %2612 = vmatmul.f32.gmra.mxu0 %v2573
      %v2613 = vpop.f32.mrf.mxu0
      %v2614 = vadd.f32 0.0, %v2613
      %2615 = vmatmul.f32.gmra.mxu0 %v2576
      %v2616 = vpop.f32.mrf.mxu0
      %v2617 = vadd.f32 0.0, %v2616
      %2618 = vdwg.mxu0
      %v2619 = vmul.f32 %v2596, %v332
      %v2620 = vmul.f32 %v2599, %v333
      %v2621 = vmul.f32 %v2602, %v334
      %v2622 = vmul.f32 %v2605, %v335
      %v2623 = vmul.f32 %v2608, %v336
      %v2624 = vmul.f32 %v2611, %v337
      %v2625 = vmul.f32 %v2614, %v338
      %v2626 = vmul.f32 %v2617, %v339
      %2627 = vmatpush.msra.mxu0 %v265
      %2628 = vmatpush.msra.mxu0 %v264
      %2629 = vmatpush.msra.mxu0 %v263
      %2630 = vmatpush.msra.mxu0 %v262
      %2631 = vmatpush.msra.mxu0 %v261
      %2632 = vmatpush.msra.mxu0 %v260
      %2633 = vmatpush.msra.mxu0 %v259
      %2634 = vmatpush.msra.mxu0 %v258
      %2635 = vmatpush.msra.mxu0 %v257
      %2636 = vmatpush.msra.mxu0 %v256
      %2637 = vmatpush.msra.mxu0 %v255
      %2638 = vmatpush.msra.mxu0 %v254
      %2639 = vmatpush.msra.mxu0 %v253
      %2640 = vmatpush.msra.mxu0 %v252
      %2641 = vmatpush.msra.mxu0 %v251
      %2642 = vmatpush.msra.mxu0 %v250
      %2643 = vmatmul.f32.gmra.mxu0 %v2242
      %v2644 = vpop.f32.mrf.mxu0
      %v2645 = vadd.f32 0.0, %v2644
      %2646 = vmatmul.f32.gmra.mxu0 %v2243
      %v2647 = vpop.f32.mrf.mxu0
      %v2648 = vadd.f32 0.0, %v2647
      %2649 = vdwg.mxu0
      %2650 = vmatpush.msra.mxu0 0.0
      %2651 = vmatpush.msra.mxu0 0.0
      %2652 = vmatpush.msra.mxu0 0.0
      %2653 = vmatpush.msra.mxu0 0.0
      %2654 = vmatpush.msra.mxu0 0.0
      %2655 = vmatpush.msra.mxu0 0.0
      %2656 = vmatpush.msra.mxu0 0.0
      %2657 = vmatpush.msra.mxu0 0.0
      %2658 = vmatpush.msra.mxu0 0.0
      %2659 = vmatpush.msra.mxu0 0.0
      %2660 = vmatpush.msra.mxu0 0.0
      %2661 = vmatpush.msra.mxu0 0.0
      %2662 = vmatpush.msra.mxu0 %v269
      %2663 = vmatpush.msra.mxu0 %v268
      %2664 = vmatpush.msra.mxu0 %v267
      %2665 = vmatpush.msra.mxu0 %v266
      %2666 = vmatmul.f32.gmra.mxu0 %v2244
      %v2667 = vpop.f32.mrf.mxu0
      %v2668 = vadd.f32 %v2645, %v2667
      %2669 = vmatmul.f32.gmra.mxu0 %v2246
      %v2670 = vpop.f32.mrf.mxu0
      %v2671 = vadd.f32 %v2648, %v2670
      %2672 = vdwg.mxu0
      %v2674 = vsel %vm375, %v2538, 0
      %v2677 = vsel %vm375, %v2553, 0
      %2679 = vmatpush.msra.mxu0 0.0
      %2680 = vmatpush.msra.mxu0 0.0
      %2681 = vmatpush.msra.mxu0 0.0
      %2682 = vmatpush.msra.mxu0 0.0
      %2683 = vmatpush.msra.mxu0 0.0
      %2684 = vmatpush.msra.mxu0 0.0
      %2685 = vmatpush.msra.mxu0 0.0
      %2686 = vmatpush.msra.mxu0 0.0
      %2687 = vmatpush.msra.mxu0 %v2626
      %2688 = vmatpush.msra.mxu0 %v2625
      %2689 = vmatpush.msra.mxu0 %v2624
      %2690 = vmatpush.msra.mxu0 %v2623
      %2691 = vmatpush.msra.mxu0 %v2622
      %2692 = vmatpush.msra.mxu0 %v2621
      %2693 = vmatpush.msra.mxu0 %v2620
      %2694 = vmatpush.msra.mxu0 %v2619
      %2695 = vmatmul.f32.gmra.mxu0 %v2674
      %v2696 = vpop.f32.mrf.mxu0
      %v2697 = vadd.f32 %v2668, %v2696
      %2698 = vmatmul.f32.gmra.mxu0 %v2677
      %v2699 = vpop.f32.mrf.mxu0
      %v2700 = vadd.f32 %v2671, %v2699
      %2701 = vdwg.mxu0
      %v2702 = vperm.slane %v270, 0
      %v2703 = vadd.f32 %v2697, %v2702
      %v2704 = vadd.f32 %v2700, %v2702
      %vm2705 = vcmp.ge.f32.partialorder %v2703, 0.0
      %vm2706 = vcmp.ge.f32.partialorder %v2704, 0.0
      %v2707 = vmul.f32 %v2703, 0.2
      %v2708 = vmul.f32 %v2704, 0.2
      %v2709 = vsel %vm2705, %v2703, %v2707
      %v2710 = vsel %vm2706, %v2704, %v2708
      %vm2711 = vcmp.ge.f32.partialorder %v2709, 0.0
      %vm2712 = vcmp.ge.f32.partialorder %v2710, 0.0
      %v2713 = vmul.f32 %v2709, 0.2
      %v2714 = vmul.f32 %v2710, 0.2
      %v2715 = vsel %vm2711, %v2709, %v2713
      %v2716 = vsel %vm2712, %v2710, %v2714
      %2717 = vmatpush.msra.mxu0 %v286
      %2718 = vmatpush.msra.mxu0 %v285
      %2719 = vmatpush.msra.mxu0 %v284
      %2720 = vmatpush.msra.mxu0 %v283
      %2721 = vmatpush.msra.mxu0 %v282
      %2722 = vmatpush.msra.mxu0 %v281
      %2723 = vmatpush.msra.mxu0 %v280
      %2724 = vmatpush.msra.mxu0 %v279
      %2725 = vmatpush.msra.mxu0 %v278
      %2726 = vmatpush.msra.mxu0 %v277
      %2727 = vmatpush.msra.mxu0 %v276
      %2728 = vmatpush.msra.mxu0 %v275
      %2729 = vmatpush.msra.mxu0 %v274
      %2730 = vmatpush.msra.mxu0 %v273
      %2731 = vmatpush.msra.mxu0 %v272
      %2732 = vmatpush.msra.mxu0 %v271
      %2733 = vmatmul.f32.gmra.mxu0 %v2715
      %v2734 = vpop.f32.mrf.mxu0
      %v2735 = vadd.f32 0.0, %v2734
      %2736 = vmatmul.f32.gmra.mxu0 %v2716
      %v2737 = vpop.f32.mrf.mxu0
      %v2738 = vadd.f32 0.0, %v2737
      %2739 = vdwg.mxu0
      %v2741 = vsel %vm682, %v2735, 0
      %v2744 = vsel %vm682, %v2738, 0
      %2746 = vmatpush.msra.mxu0 0.0
      %2747 = vmatpush.msra.mxu0 0.0
      %2748 = vmatpush.msra.mxu0 0.0
      %2749 = vmatpush.msra.mxu0 0.0
      %2750 = vmatpush.msra.mxu0 0.0
      %2751 = vmatpush.msra.mxu0 0.0
      %2752 = vmatpush.msra.mxu0 0.0
      %2753 = vmatpush.msra.mxu0 0.0
      %2754 = vmatpush.msra.mxu0 0.0
      %2755 = vmatpush.msra.mxu0 0.0
      %2756 = vmatpush.msra.mxu0 0.0
      %2757 = vmatpush.msra.mxu0 0.0
      %2758 = vmatpush.msra.mxu0 %v290
      %2759 = vmatpush.msra.mxu0 %v289
      %2760 = vmatpush.msra.mxu0 %v288
      %2761 = vmatpush.msra.mxu0 %v287
      %2762 = vmatmul.f32.gmra.mxu0 %v2741
      %v2763 = vpop.f32.mrf.mxu0
      %v2764 = vadd.f32 0.0, %v2763
      %2765 = vmatmul.f32.gmra.mxu0 %v2744
      %v2766 = vpop.f32.mrf.mxu0
      %v2767 = vadd.f32 0.0, %v2766
      %2768 = vdwg.mxu0
      %2770 = vset.pattern.permute.xlu0 1
      %2771 = vperm.xlu0 %2770, %v2764
      %v2772 = vpop.permute.xlu0 %2771
      %2775 = vset.pattern.permute.xlu0 1
      %2776 = vperm.xlu0 %2775, %v2767
      %v2777 = vpop.permute.xlu0 %2776
      %2779 = vset.pattern.permute.xlu0 0
      %2780 = vperm.xlu0 %2779, %v2764
      %v2781 = vpop.permute.xlu0 %2780
      %2783 = vset.pattern.permute.xlu0 0
      %2784 = vperm.xlu0 %2783, %v2767
      %v2785 = vpop.permute.xlu0 %2784
      %v2787 = vmul.f32 %v2781, %v340
      %v2788 = vmul.f32 %v2785, %v341
      %2789 = vmatpush.msra.mxu0 0.0
      %2790 = vmatpush.msra.mxu0 0.0
      %2791 = vmatpush.msra.mxu0 0.0
      %2792 = vmatpush.msra.mxu0 0.0
      %2793 = vmatpush.msra.mxu0 0.0
      %2794 = vmatpush.msra.mxu0 0.0
      %2795 = vmatpush.msra.mxu0 0.0
      %2796 = vmatpush.msra.mxu0 0.0
      %2797 = vmatpush.msra.mxu0 0.0
      %2798 = vmatpush.msra.mxu0 0.0
      %2799 = vmatpush.msra.mxu0 0.0
      %2800 = vmatpush.msra.mxu0 0.0
      %2801 = vmatpush.msra.mxu0 0.0
      %2802 = vmatpush.msra.mxu0 0.0
      %2803 = vmatpush.msra.mxu0 %v2788
      %2804 = vmatpush.msra.mxu0 %v2787
      %2805 = vmatmul.f32.gmra.mxu0 %v2355
      %v2806 = vpop.f32.mrf.mxu0
      %v2807 = vadd.f32 0.0, %v2806
      %2808 = vmatmul.f32.gmra.mxu0 %v2355
      %v2809 = vpop.f32.mrf.mxu0
      %v2810 = vadd.f32 0.0, %v2809
      %2811 = vdwg.mxu0
      %v2812 = vadd.f32 %v2772, %v2807
      %v2813 = vadd.f32 %v2777, %v2810
      %vm2814 = vcmp.ge.f32.partialorder %v2812, 0.0
      %vm2815 = vcmp.ge.f32.partialorder %v2813, 0.0
      %v2816 = vmul.f32 %v2812, 0.2
      %v2817 = vmul.f32 %v2813, 0.2
      %v2818 = vsel %vm2814, %v2812, %v2816
      %v2819 = vsel %vm2815, %v2813, %v2817
      %vm2820 = vcmp.gt.f32.partialorder %v362, 0.0
      %vm2821 = vcmp.gt.f32.partialorder %v363, 0.0
      %v2822 = vsel %vm2820, %v2818, -1e+30
      %v2823 = vsel %vm2821, %v2819, -1e+30
      %v2824 = vsel %vm2353, %v2822, -inf
      %2825 = vmax.xlane.f32.xlu0 %v2824
      %v2826 = vpop.xlane.xlu0 %2825
      %v2827 = vsel %vm2353, %v2823, -inf
      %2828 = vmax.xlane.f32.xlu0 %v2827
      %v2829 = vpop.xlane.xlu0 %2828
      %v2830 = vsub.f32 %v2822, %v2826
      %v2831 = vsub.f32 %v2823, %v2829
      %v2832 = vmul.f32 %v2830, 1.442695
      %v2833 = vpow.pop %v2832
      %v2834 = vmul.f32 %v2831, 1.442695
      %v2835 = vpow.pop %v2834
      %v2836 = vmul.f32 %v2833, %v362
      %v2837 = vmul.f32 %v2835, %v363
      %v2838 = vsel %vm2353, %v2836, 0.0
      %2839 = vadd.xlane.f32.xlu0 %v2838
      %v2840 = vpop.xlane.xlu0 %2839
      %v2841 = vsel %vm2353, %v2837, 0.0
      %2842 = vadd.xlane.f32.xlu0 %v2841
      %v2843 = vpop.xlane.xlu0 %2842
      %v2844 = vmax.f32 %v2840, 1e-20
      %v2845 = vmax.f32 %v2843, 1e-20
      %v2846 = vrcp.pop %v2844
      %v2847 = vmul.f32 %v2844, %v2846
      %v2848 = vsub.f32 1.0, %v2847
      %v2849 = vmul.f32 %v2846, %v2848
      %v2850 = vadd.f32 %v2846, %v2849
      %vm2851 = vweird.f32 %v2844
      %vm2852 = vweird.f32 %v2846
      %vm2853 = vmor %vm2851, %vm2852
      %v2854 = vsel %vm2853, %v2846, %v2850
      %v2855 = vand.u32 2147483647, %v2844
      %vm2856 = vcmp.eq.f32.partialorder %v2855, 8.507059e+37
      %v2857 = vand.u32 %v2844, 2147483648
      %v2858 = vor.u32 1.1754944e-38, %v2857
      %v2859 = vsel %vm2856, %v2858, %v2854
      %v2860 = vmul.f32 %v2836, %v2859
      %v2861 = vrcp.pop %v2845
      %v2862 = vmul.f32 %v2845, %v2861
      %v2863 = vsub.f32 1.0, %v2862
      %v2864 = vmul.f32 %v2861, %v2863
      %v2865 = vadd.f32 %v2861, %v2864
      %vm2866 = vweird.f32 %v2845
      %vm2867 = vweird.f32 %v2861
      %vm2868 = vmor %vm2866, %vm2867
      %v2869 = vsel %vm2868, %v2861, %v2865
      %v2870 = vand.u32 2147483647, %v2845
      %vm2871 = vcmp.eq.f32.partialorder %v2870, 8.507059e+37
      %v2872 = vand.u32 %v2845, 2147483648
      %v2873 = vor.u32 1.1754944e-38, %v2872
      %v2874 = vsel %vm2871, %v2873, %v2869
      %v2875 = vmul.f32 %v2837, %v2874
      %2876 = vmatpush.msra.mxu0 %v306
      %2877 = vmatpush.msra.mxu0 %v305
      %2878 = vmatpush.msra.mxu0 %v304
      %2879 = vmatpush.msra.mxu0 %v303
      %2880 = vmatpush.msra.mxu0 %v302
      %2881 = vmatpush.msra.mxu0 %v301
      %2882 = vmatpush.msra.mxu0 %v300
      %2883 = vmatpush.msra.mxu0 %v299
      %2884 = vmatpush.msra.mxu0 %v298
      %2885 = vmatpush.msra.mxu0 %v297
      %2886 = vmatpush.msra.mxu0 %v296
      %2887 = vmatpush.msra.mxu0 %v295
      %2888 = vmatpush.msra.mxu0 %v294
      %2889 = vmatpush.msra.mxu0 %v293
      %2890 = vmatpush.msra.mxu0 %v292
      %2891 = vmatpush.msra.mxu0 %v291
      %2892 = vmatmul.f32.gmra.mxu0 %v2715
      %v2893 = vpop.f32.mrf.mxu0
      %v2894 = vadd.f32 0.0, %v2893
      %2895 = vmatmul.f32.gmra.mxu0 %v2716
      %v2896 = vpop.f32.mrf.mxu0
      %v2897 = vadd.f32 0.0, %v2896
      %2898 = vdwg.mxu0
      %v2900 = vsel %vm2353, %v2860, 0
      %v2903 = vsel %vm2353, %v2875, 0
      %2905 = vmatpush.msra.mxu0 0.0
      %2906 = vmatpush.msra.mxu0 0.0
      %2907 = vmatpush.msra.mxu0 0.0
      %2908 = vmatpush.msra.mxu0 0.0
      %2909 = vmatpush.msra.mxu0 0.0
      %2910 = vmatpush.msra.mxu0 0.0
      %2911 = vmatpush.msra.mxu0 0.0
      %2912 = vmatpush.msra.mxu0 0.0
      %2913 = vmatpush.msra.mxu0 0.0
      %2914 = vmatpush.msra.mxu0 0.0
      %2915 = vmatpush.msra.mxu0 0.0
      %2916 = vmatpush.msra.mxu0 0.0
      %2917 = vmatpush.msra.mxu0 0.0
      %2918 = vmatpush.msra.mxu0 0.0
      %2919 = vmatpush.msra.mxu0 %v2738
      %2920 = vmatpush.msra.mxu0 %v2735
      %2921 = vmatmul.f32.gmra.mxu0 %v2900
      %v2922 = vpop.f32.mrf.mxu0
      %v2923 = vadd.f32 %v2894, %v2922
      %2924 = vmatmul.f32.gmra.mxu0 %v2903
      %v2925 = vpop.f32.mrf.mxu0
      %v2926 = vadd.f32 %v2897, %v2925
      %2927 = vdwg.mxu0
      %v2928 = vperm.slane %v307, 0
      %v2929 = vadd.f32 %v2923, %v2928
      %v2930 = vadd.f32 %v2926, %v2928
      %v2932 = vsel %vm2353, %v364, 0
      %v2935 = vsel %vm2353, %v365, 0
      %v2938 = vsel %vm2353, %v366, 0
      %2940 = vmatpush.msra.mxu0 0.0
      %2941 = vmatpush.msra.mxu0 0.0
      %2942 = vmatpush.msra.mxu0 0.0
      %2943 = vmatpush.msra.mxu0 0.0
      %2944 = vmatpush.msra.mxu0 0.0
      %2945 = vmatpush.msra.mxu0 0.0
      %2946 = vmatpush.msra.mxu0 0.0
      %2947 = vmatpush.msra.mxu0 0.0
      %2948 = vmatpush.msra.mxu0 0.0
      %2949 = vmatpush.msra.mxu0 0.0
      %2950 = vmatpush.msra.mxu0 0.0
      %2951 = vmatpush.msra.mxu0 0.0
      %2952 = vmatpush.msra.mxu0 0.0
      %2953 = vmatpush.msra.mxu0 0.0
      %2954 = vmatpush.msra.mxu0 %v2930
      %2955 = vmatpush.msra.mxu0 %v2929
      %2956 = vmatmul.f32.gmra.mxu0 %v2932
      %v2957 = vpop.f32.mrf.mxu0
      %v2958 = vadd.f32 0.0, %v2957
      %2959 = vmatmul.f32.gmra.mxu0 %v2935
      %v2960 = vpop.f32.mrf.mxu0
      %v2961 = vadd.f32 0.0, %v2960
      %2962 = vmatmul.f32.gmra.mxu0 %v2938
      %v2963 = vpop.f32.mrf.mxu0
      %v2964 = vadd.f32 0.0, %v2963
      %2965 = vdwg.mxu0
      %v2967 = vsel %vm2353, %v367, 0
      %v2970 = vsel %vm2353, %v368, 0
      %v2973 = vsel %vm2353, %v369, 0
      %2975 = vmatpush.msra.mxu0 0.0
      %2976 = vmatpush.msra.mxu0 0.0
      %2977 = vmatpush.msra.mxu0 0.0
      %2978 = vmatpush.msra.mxu0 0.0
      %2979 = vmatpush.msra.mxu0 0.0
      %2980 = vmatpush.msra.mxu0 0.0
      %2981 = vmatpush.msra.mxu0 0.0
      %2982 = vmatpush.msra.mxu0 0.0
      %2983 = vmatpush.msra.mxu0 0.0
      %2984 = vmatpush.msra.mxu0 0.0
      %2985 = vmatpush.msra.mxu0 0.0
      %2986 = vmatpush.msra.mxu0 0.0
      %2987 = vmatpush.msra.mxu0 0.0
      %2988 = vmatpush.msra.mxu0 0.0
      %2989 = vmatpush.msra.mxu0 %v2930
      %2990 = vmatpush.msra.mxu0 %v2929
      %2991 = vmatmul.f32.gmra.mxu0 %v2967
      %v2992 = vpop.f32.mrf.mxu0
      %v2993 = vadd.f32 0.0, %v2992
      %2994 = vmatmul.f32.gmra.mxu0 %v2970
      %v2995 = vpop.f32.mrf.mxu0
      %v2996 = vadd.f32 0.0, %v2995
      %2997 = vmatmul.f32.gmra.mxu0 %v2973
      %v2998 = vpop.f32.mrf.mxu0
      %v2999 = vadd.f32 0.0, %v2998
      %3000 = vdwg.mxu0
      %v3001 = vmul.f32 %v2958, %v2993
      %v3002 = vmul.f32 %v2961, %v2996
      %v3003 = vmul.f32 %v2964, %v2999
      %v3004 = vperm.slane %v312, 0
      %v3006 = vsel %vm682, %v3001, 0
      %v3009 = vsel %vm682, %v3002, 0
      %v3012 = vsel %vm682, %v3003, 0
      %3014 = vmatpush.msra.mxu0 0.0
      %3015 = vmatpush.msra.mxu0 0.0
      %3016 = vmatpush.msra.mxu0 0.0
      %3017 = vmatpush.msra.mxu0 0.0
      %3018 = vmatpush.msra.mxu0 0.0
      %3019 = vmatpush.msra.mxu0 0.0
      %3020 = vmatpush.msra.mxu0 0.0
      %3021 = vmatpush.msra.mxu0 0.0
      %3022 = vmatpush.msra.mxu0 0.0
      %3023 = vmatpush.msra.mxu0 0.0
      %3024 = vmatpush.msra.mxu0 0.0
      %3025 = vmatpush.msra.mxu0 0.0
      %3026 = vmatpush.msra.mxu0 %v311
      %3027 = vmatpush.msra.mxu0 %v310
      %3028 = vmatpush.msra.mxu0 %v309
      %3029 = vmatpush.msra.mxu0 %v308
      %3030 = vmatmul.f32.gmra.mxu0 %v3006
      %v3031 = vpop.f32.mrf.mxu0
      %v3032 = vadd.f32 %v3004, %v3031
      %3033 = vmatmul.f32.gmra.mxu0 %v3009
      %v3034 = vpop.f32.mrf.mxu0
      %v3035 = vadd.f32 %v3004, %v3034
      %3036 = vmatmul.f32.gmra.mxu0 %v3012
      %v3037 = vpop.f32.mrf.mxu0
      %v3038 = vadd.f32 %v3004, %v3037
      %3039 = vdwg.mxu0
      %v3040 = vsel %vm2353, %v2860, 0.0
      %v3041 = vsel %vm2353, %v2875, 0.0
      %3042 = vst [vmem:[%s170] sm:$0xff] %v3032
      %3043 = vst [vmem:[%s170 + $0x8] sm:$0xff] %v3035
      %3044 = vst [vmem:[%s170 + $0x10] sm:$0xff] %v3038
      %3045 = vst [vmem:[%s170 + $0x18] sm:$0xff] %v3040
      %3046 = vst [vmem:[%s170 + $0x20] sm:$0xff] %v3041
      %p3047 = scmp.lt.s32.totalorder %s14, 1
      %s3048 = scalar_select %p3047, %s14, 1
      %s3049 = smul.addr %s3048, 5
      %s3050 = smul.addr %s3049, 8
      %s3051 = scalar_lea.vmem %s3, %s3050
      // Predicated region
      $region33: #{gat_forward.1} parent=31 // pred_check
        %p3052 = pneg %p100
      $region34: #{gat_forward.1} parent=31 // pred_check_branch
        %3054 = sbr.rel (%p3052) target = $region36
      $region35: #{gat_forward.1} parent=31 // pred_region
        _
      $region36: #{gat_forward.1} parent=31 // pred_fallthru
        _
    $region32: #{gat_forward.1} parent=5 // pred_fallthru
      _
    %p3055 = scmp.le.s32.totalorder 2, %s9
    // Predicated region
    $region37: #{gat_forward.1} parent=5 // pred_check
      %p3056 = pneg %p3055
    $region38: #{gat_forward.1} parent=5 // pred_check_branch
      %3058 = sbr.rel (%p3056) target = $region40
    $region39: #{gat_forward.1} parent=5 // pred_region
      %s3059 = ssub.s32 %s9, 2
      // Predicated region
      $region41: #{gat_forward.1} parent=39 // pred_check
        %p3060 = pneg %p106
      $region42: #{gat_forward.1} parent=39 // pred_check_branch
        %3062 = sbr.rel (%p3060) target = $region44
      $region43: #{gat_forward.1} parent=39 // pred_region
        %p3063 = scmp.lt.s32.totalorder %s15, 1
        %s3064 = scalar_select %p3063, %s15, 1
        %s3065 = smul.addr %s3064, 5
        %s3066 = smul.addr %s3065, 8
        %s3067 = scalar_lea.vmem %s3, %s3066
      $region44: #{gat_forward.1} parent=39 // pred_fallthru
        _
    $region40: #{gat_forward.1} parent=5 // pred_fallthru
      _
  $region6: #{gat_forward.1} parent=0 // loop_footer
    %s13 = sadd.s32 1, %s9
  $region7: #{gat_forward.1} parent=0 // loop_footer_branch
    %8 = sbr.rel target = $region3
  $region8: #{gat_forward.1} parent=0 // loop_exit
    _

</llo_original>
